<compile_context>
chip_gen: v6e
topology: v6e:2x2x1
jax: 0.10.0
libtpu: 0.0.40
codegen_flags: <defaults>
</compile_context>

<pallas_src>
import functools

import numpy as np
import jax
import jax.numpy as jnp
from jax import lax
from jax.experimental import pallas as pl
from jax.experimental.pallas import tpu as pltpu

# ----------------------------- configuration -------------------------------
IN_REPR = (2, 2)               # 2 x l=0, 2 x l=1  -> 8 channels
OUT_REPRS = [(2, 2), (2, 2)]   # two NormBlocks, identity shortcut
SIZE = 3                       # 3x3x3 kernels, padding 1, stride 1

CAPSULE_DIMS = [2 * l + 1 for l, mul in enumerate(OUT_REPRS[-1]) for _ in range(mul)]  # [1,1,3,3]
C = sum(CAPSULE_DIMS)          # 8 channels
N_CAPS = len(CAPSULE_DIMS)     # 4 capsules
CAP_OF_CH = [k for k, d in enumerate(CAPSULE_DIMS) for _ in range(d)]
SCALAR_CH = np.array([1.0 if CAPSULE_DIMS[k] == 1 else 0.0 for k in CAP_OF_CH], np.float32)
MEMB = np.eye(N_CAPS, dtype=np.float32)[np.array(CAP_OF_CH)]   # [C, N_CAPS]
P8 = MEMB @ MEMB.T                                             # [C, C] same-capsule projector

EPS_BN = 1e-5
EPS_NORM = 1e-6                # numerical guard on the capsule norm

# Fixed spatial extents assumed by the 128-lane packing / banded weights.
H = 8
W = 8
HPAIRS = H // 2                # height-row pairs folded into lanes
HPP = HPAIRS + 2               # height-pair slabs incl. conv halo
LANE = 2 * W * C               # packed lane dim (row-in-pair, x, channel) = 128
KDIM = 9 * LANE                # concatenated-K over the 9 (dz, dy-pair) taps = 1152


# ------------------------------- Pallas kernel ------------------------------
def _capsule_act(y, bias_row, smask_row, pm):
    """NormSoftplus: relu on scalar (l=0) channels, softplus(|v|-b)/|v| gating otherwise.

    Per-channel capsule |v|^2 comes from one block-diagonal projector matmul
    (kron(I_16, M M^T) over the lane packing); reciprocal norm via rsqrt (EUP).
    """
    z = (y * y).astype(jnp.bfloat16)                       # bf16 MXU path, exact products
    nsq = jnp.dot(z, pm, preferred_element_type=jnp.float32) + EPS_NORM
    inv = lax.rsqrt(nsq)
    norm = nsq * inv                                       # sqrt(nsq) without a divide
    factor = jax.nn.softplus(norm - bias_row) * inv
    return jnp.where(smask_row > 0.5, jnp.maximum(y, 0.0), y * factor)


def _fused_resblock_kernel(x_ref, w1_ref, w2_ref, pm_ref, prm_ref, out_ref, h1_ref, *, d):
    """One grid step = one batch element x the full depth, both layers fused.

    x_ref:  [d+2, HPP, 128] bf16  padded, 128-lane-packed input block
    w*_ref: [1152, 128]     bf16  concatenated-K banded conv weights (BN scale folded)
    pm_ref: [128, 128]      bf16  same-capsule projector
    prm rows: 0 = BN1 shift, 1 = act1 capsule bias, 2 = BN2 shift,
              3 = final capsule bias, 4 = scalar-channel mask   (all packed to 128 lanes)
    h1_ref: [d+2, HPP, 128] bf16  resident layer-1 output (with zero halos)
    """
    rows = d * HPAIRS
    pm = pm_ref[...]

    def im2col(ref3d):
        # 9 (dz, dy-pair) taps concatenated along K -> single [rows, 1152] GEMM operand.
        return jnp.concatenate(
            [ref3d[dz:dz + d, dp:dp + HPAIRS, :].reshape(rows, LANE)
             for dz in range(3) for dp in range(3)],
            axis=-1)

    # ---- layer 1: SE3Convolution (+ folded BN1 scale) as one concatenated-K GEMM ----
    acc1 = jnp.dot(im2col(x_ref), w1_ref[...], preferred_element_type=jnp.float32)
    y1 = acc1 + prm_ref[0:1, :]                                   # BN1 shift (scalar caps only)
    y1 = _capsule_act(y1, prm_ref[1:2, :], prm_ref[4:5, :], pm)   # NormSoftplus / relu

    # h1 stays resident in VMEM (bf16).  Zero ONLY the halo planes / slabs each step
    # (interior is fully overwritten); done every step since the batch axis is
    # 'parallel' and may be megacore-sharded.
    zero_plane = jnp.zeros((1, HPP, LANE), jnp.bfloat16)
    zero_col = jnp.zeros((d + 2, 1, LANE), jnp.bfloat16)
    h1_ref[0:1, :, :] = zero_plane
    h1_ref[d + 1:d + 2, :, :] = zero_plane
    h1_ref[:, 0:1, :] = zero_col
    h1_ref[:, HPAIRS + 1:HPAIRS + 2, :] = zero_col
    h1_ref[1:d + 1, 1:HPAIRS + 1, :] = y1.astype(jnp.bfloat16).reshape(d, HPAIRS, LANE)

    # ---- layer 2: SE3Convolution (+ folded BN2 scale) ------------------------
    acc2 = jnp.dot(im2col(h1_ref), w2_ref[...], preferred_element_type=jnp.float32)

    # BN2 shift + identity shortcut (read from the resident input block) + final act.
    res = x_ref[1:d + 1, 1:HPAIRS + 1, :].astype(jnp.float32).reshape(rows, LANE)
    y2 = acc2 + prm_ref[2:3, :] + res
    y2 = _capsule_act(y2, prm_ref[3:4, :], prm_ref[4:5, :], pm)
    out_ref[...] = y2.reshape(d, HPAIRS, LANE)


# ------------------------------- JAX wrapper ---------------------------------
def se3_norm_resblock_forward(x_ncdhw, params):
    B, Cin, D, Hx, Wx = x_ncdhw.shape
    assert Cin == C and Hx == H and Wx == W, "128-lane packing assumes H=W=8, C=8"
    assert D % 2 == 0 and D >= 2, "even depth expected"
    # TODO(synk): for D >> 16, reintroduce a depth grid axis (marked "arbitrary") with a
    # persistent ring-carried window instead of growing the per-step block further.

    # One-time repack: NCDHW -> [B, D, HPAIRS, 128] (row-pair, x, channel packed into
    # lanes), zero-pad the depth / height-pair halos, cast bf16.  When this block is
    # stacked in a ResNet, keep this packed layout between blocks instead of converting
    # back to NCDHW f32 after every call.
    x = jnp.transpose(x_ncdhw, (0, 2, 3, 4, 1)).reshape(B, D, HPAIRS, LANE)
    xpad = jnp.pad(x, ((0, 0), (1, 1), (1, 1), (0, 0))).astype(jnp.bfloat16)

    kernel = functools.partial(_fused_resblock_kernel, d=D)
    out = pl.pallas_call(
        kernel,
        out_shape=jax.ShapeDtypeStruct((B, D, HPAIRS, LANE), jnp.float32),
        grid_spec=pltpu.PrefetchScalarGridSpec(
            num_scalar_prefetch=0,
            grid=(B,),
            in_specs=[
                pl.BlockSpec((None, D + 2, HPP, LANE), lambda b: (b, 0, 0, 0)),  # packed input
                pl.BlockSpec((KDIM, LANE), lambda b: (0, 0)),   # banded W1 (BN1 scale folded)
                pl.BlockSpec((KDIM, LANE), lambda b: (0, 0)),   # banded W2 (BN2 scale folded)
                pl.BlockSpec((LANE, LANE), lambda b: (0, 0)),   # capsule projector
                pl.BlockSpec((8, LANE), lambda b: (0, 0)),      # packed shifts/biases/mask
            ],
            out_specs=pl.BlockSpec((None, D, HPAIRS, LANE), lambda b: (b, 0, 0, 0)),
            scratch_shapes=[
                pltpu.VMEM((D + 2, HPP, LANE), jnp.bfloat16),   # resident h1 (with halos)
            ],
        ),
        compiler_params=pltpu.CompilerParams(dimension_semantics=("parallel",)),
    )(xpad, params['w1_band'], params['w2_band'], params['pm'], params['prm'])

    out = out.reshape(B, D, H, W, C)
    return jnp.transpose(out, (0, 4, 1, 2, 3))                   # back to NCDHW


# --------------------------- parameter preparation ---------------------------
def _band_weights(w_oidhw, ch_scale):
    """[Cout,Cin,3,3,3] conv weight (x eval-BN scale) -> concatenated-K banded matrix.

    Row block t = dz*3 + dp (depth tap, height-pair tap).  Inside a block, rows index
    the input lane (ri, xi, ci) and columns the output lane (ro, xo, co); the band
    structure implements the dx taps, the W zero padding, and the dy taps folded
    across the height-row pair:
        band[t][(ri,xi,ci),(ro,xo,co)] = scale[co] * w[co,ci,dz,dy,dx]
        with dy = 2*(dp-1) + ri - ro + 1, dx = xi - xo + 1 (zero if out of 0..2).
    """
    w = np.asarray(w_oidhw, np.float32) * np.asarray(ch_scale, np.float32)[:, None, None, None, None]
    band = np.zeros((3, 3, LANE, LANE), np.float32)
    for dz in range(3):
        for dp in range(3):
            for ri in range(2):
                for ro in range(2):
                    dy = 2 * (dp - 1) + ri - ro + 1
                    if not 0 <= dy < 3:
                        continue
                    for dx in range(3):
                        for xo in range(W):
                            xi = xo + dx - 1
                            if 0 <= xi < W:
                                r0 = ri * W * C + xi * C
                                c0 = ro * W * C + xo * C
                                band[dz, dp, r0:r0 + C, c0:c0 + C] = w[:, :, dz, dy, dx].T
    return jnp.asarray(band.reshape(KDIM, LANE), jnp.bfloat16)


def make_params(key):
    ks = jax.random.split(key, 12)
    std = 1.0 / np.sqrt(SIZE ** 3 * C)
    # TODO(synk): the SE3 steerable-kernel basis (radial window x spherical-harmonic /
    # Clebsch-Gordan combination) is an offline weight parameterization in se3cnn;
    # effective conv3d weights are initialized directly here.
    w1 = jax.random.normal(ks[0], (C, C, SIZE, SIZE, SIZE), jnp.float32) * std
    w2 = jax.random.normal(ks[1], (C, C, SIZE, SIZE, SIZE), jnp.float32) * std

    cap_idx = np.array(CAP_OF_CH)
    smask_j = jnp.asarray(SCALAR_CH)

    def bn_params(kv, kw, km, kb):
        run_var = jax.random.uniform(kv, (N_CAPS,), minval=0.5, maxval=1.5)
        weight = jax.random.uniform(kw, (N_CAPS,), minval=0.8, maxval=1.2)
        run_mean = jax.random.normal(km, (N_CAPS,)) * 0.1   # scalar capsules only
        bias = jax.random.normal(kb, (N_CAPS,)) * 0.1       # scalar capsules only
        cap_scale = weight / jnp.sqrt(run_var + EPS_BN)
        ch_scale = cap_scale[cap_idx]
        ch_shift = jnp.where(smask_j > 0.5,
                             bias[cap_idx] - run_mean[cap_idx] * ch_scale, 0.0)
        return ch_scale.astype(jnp.float32), ch_shift.astype(jnp.float32)

    bn1_scale, bn1_shift = bn_params(ks[2], ks[3], ks[4], ks[5])
    bn2_scale, bn2_shift = bn_params(ks[6], ks[7], ks[8], ks[9])

    # NormSoftplus biases ~ U(bias_min=0.5, bias_max=2.0); used for d>1 capsules only.
    act1_bias = jax.random.uniform(ks[10], (N_CAPS,), minval=0.5, maxval=2.0)
    actf_bias = jax.random.uniform(ks[11], (N_CAPS,), minval=0.5, maxval=2.0)

    def pack(v):  # per-channel vector [C] -> packed 128 lanes ((row-pair, x) major, channel minor)
        return jnp.tile(jnp.asarray(v, jnp.float32), 2 * W)

    prm = jnp.zeros((8, LANE), jnp.float32)
    prm = prm.at[0].set(pack(bn1_shift))
    prm = prm.at[1].set(pack(act1_bias[cap_idx]))
    prm = prm.at[2].set(pack(bn2_shift))
    prm = prm.at[3].set(pack(actf_bias[cap_idx]))
    prm = prm.at[4].set(pack(SCALAR_CH))

    pm = jnp.asarray(np.kron(np.eye(2 * W, dtype=np.float32), P8), jnp.bfloat16)

    return dict(
        w1=w1, w2=w2,
        bn1_scale=bn1_scale, bn1_shift=bn1_shift,
        bn2_scale=bn2_scale, bn2_shift=bn2_shift,
        act1_bias=act1_bias, actf_bias=actf_bias,
        w1_band=_band_weights(w1, bn1_scale),
        w2_band=_band_weights(w2, bn2_scale),
        prm=prm, pm=pm,
    )


# ------------------------- pure-JAX reference -------------------------------
def reference_forward(x_ncdhw, params):
    """XLA reference.  It mirrors the kernel's bf16 quantization points (input,
    folded conv weights, the VMEM-resident h1 and the squared-norm terms) so the
    comparison isolates implementation bugs from expected bf16 drift; every other
    operation (accumulation, BN shift, softplus, residual) is f32."""
    q = lambda t: t.astype(jnp.bfloat16).astype(jnp.float32)

    def conv(x, w):
        return lax.conv_general_dilated(
            x, w, window_strides=(1, 1, 1), padding=[(1, 1)] * 3,
            dimension_numbers=('NCDHW', 'OIDHW', 'NCDHW'),
            precision=lax.Precision.HIGHEST)

    def norm_softplus(y, cap_bias):
        outs, start = [], 0
        for k, dcap in enumerate(CAPSULE_DIMS):
            f = y[:, start:start + dcap]
            if dcap == 1:
                f = jnp.maximum(f, 0.0)
            else:
                nsq = jnp.sum(q(f * f), axis=1, keepdims=True) + EPS_NORM
                norm = jnp.sqrt(nsq)
                f = f * (jax.nn.softplus(norm - cap_bias[k]) / norm)
            outs.append(f)
            start += dcap
        return jnp.concatenate(outs, axis=1)

    xq = q(x_ncdhw)
    w1e = q(params['w1'] * params['bn1_scale'][:, None, None, None, None])
    w2e = q(params['w2'] * params['bn2_scale'][:, None, None, None, None])

    h = conv(xq, w1e) + params['bn1_shift'].reshape(1, -1, 1, 1, 1)
    h = norm_softplus(h, params['act1_bias'])
    h = q(h)                                    # h1 held in bf16 inside the kernel
    h = conv(h, w2e) + params['bn2_shift'].reshape(1, -1, 1, 1, 1)
    h = h + xq                                  # identity shortcut
    h = norm_softplus(h, params['actf_bias'])
    return h


# --------------------------------- main --------------------------------------
if __name__ == "__main__":
    key = jax.random.PRNGKey(0)
    kx, kp = jax.random.split(key)
    x = jax.random.normal(kx, (4, C, 8, H, W), jnp.float32)    # NCDHW, like PyTorch
    params = make_params(kp)

    out = jax.block_until_ready(se3_norm_resblock_forward(x, params))
    ref = jax.block_until_ready(reference_forward(x, params))
    assert out.shape == ref.shape == x.shape
    if not bool(jnp.allclose(out, ref, rtol=2e-3, atol=2e-3)):
        err = float(jnp.max(jnp.abs(out - ref)))
        raise AssertionError(
            f"Pallas SE3NormResBlock output does not match reference (max abs err {err:.3e})")
    print("KERNEL_OK")
</pallas_src>

<mosaic_0001>
module attributes {stable_mosaic.version = 11 : i64} {
  func.func @_fused_resblock_kernel(%arg0: i32, %arg1: memref<1x10x6x128xbf16, #tpu.memory_space<vmem>>, %arg2: memref<1152x128xbf16, #tpu.memory_space<vmem>>, %arg3: memref<1152x128xbf16, #tpu.memory_space<vmem>>, %arg4: memref<128x128xbf16, #tpu.memory_space<vmem>>, %arg5: memref<8x128xf32, #tpu.memory_space<vmem>>, %arg6: memref<1x8x4x128xf32, #tpu.memory_space<vmem>>, %arg7: memref<10x6x128xbf16, #tpu.memory_space<vmem>>) attributes {dimension_semantics = [#tpu.dimension_semantics<parallel>], iteration_bounds = array<i64: 4>, scalar_prefetch = 0 : i64, scratch_operands = 1 : i64, tpu.core_type = #tpu.core_type<tc>, window_params = [{transform_indices = @transform_0, window_bounds = array<i64: 1, 10, 6, 128>}, {pipeline_mode = #tpu.pipeline_mode<synchronous>, transform_indices = @transform_1, window_bounds = array<i64: 1152, 128>}, {pipeline_mode = #tpu.pipeline_mode<synchronous>, transform_indices = @transform_2, window_bounds = array<i64: 1152, 128>}, {pipeline_mode = #tpu.pipeline_mode<synchronous>, transform_indices = @transform_3, window_bounds = array<i64: 128, 128>}, {pipeline_mode = #tpu.pipeline_mode<synchronous>, transform_indices = @transform_4, window_bounds = array<i64: 8, 128>}, {transform_indices = @transform_5, window_bounds = array<i64: 1, 8, 4, 128>}]} {
    %c0 = arith.constant 0 : index
    %c0_0 = arith.constant 0 : index
    %0 = vector.load %arg4[%c0, %c0_0] : memref<128x128xbf16, #tpu.memory_space<vmem>>, vector<128x128xbf16>
    %c0_1 = arith.constant 0 : index
    %c0_2 = arith.constant 0 : index
    %c0_3 = arith.constant 0 : index
    %c0_4 = arith.constant 0 : index
    %1 = vector.load %arg1[%c0_1, %c0_2, %c0_3, %c0_4] : memref<1x10x6x128xbf16, #tpu.memory_space<vmem>>, vector<1x8x4x128xbf16>
    %2 = vector.shape_cast %1 : vector<1x8x4x128xbf16> to vector<8x4x128xbf16>
    %3 = vector.shape_cast %2 : vector<8x4x128xbf16> to vector<32x128xbf16>
    %c0_5 = arith.constant 0 : index
    %c0_6 = arith.constant 0 : index
    %c1 = arith.constant 1 : index
    %c0_7 = arith.constant 0 : index
    %4 = vector.load %arg1[%c0_5, %c0_6, %c1, %c0_7] : memref<1x10x6x128xbf16, #tpu.memory_space<vmem>>, vector<1x8x4x128xbf16>
    %5 = vector.shape_cast %4 : vector<1x8x4x128xbf16> to vector<8x4x128xbf16>
    %6 = vector.shape_cast %5 : vector<8x4x128xbf16> to vector<32x128xbf16>
    %c0_8 = arith.constant 0 : index
    %c0_9 = arith.constant 0 : index
    %c2 = arith.constant 2 : index
    %c0_10 = arith.constant 0 : index
    %7 = vector.load %arg1[%c0_8, %c0_9, %c2, %c0_10] : memref<1x10x6x128xbf16, #tpu.memory_space<vmem>>, vector<1x8x4x128xbf16>
    %8 = vector.shape_cast %7 : vector<1x8x4x128xbf16> to vector<8x4x128xbf16>
    %9 = vector.shape_cast %8 : vector<8x4x128xbf16> to vector<32x128xbf16>
    %c0_11 = arith.constant 0 : index
    %c1_12 = arith.constant 1 : index
    %c0_13 = arith.constant 0 : index
    %c0_14 = arith.constant 0 : index
    %10 = vector.load %arg1[%c0_11, %c1_12, %c0_13, %c0_14] : memref<1x10x6x128xbf16, #tpu.memory_space<vmem>>, vector<1x8x4x128xbf16>
    %11 = vector.shape_cast %10 : vector<1x8x4x128xbf16> to vector<8x4x128xbf16>
    %12 = vector.shape_cast %11 : vector<8x4x128xbf16> to vector<32x128xbf16>
    %c0_15 = arith.constant 0 : index
    %c1_16 = arith.constant 1 : index
    %c1_17 = arith.constant 1 : index
    %c0_18 = arith.constant 0 : index
    %13 = vector.load %arg1[%c0_15, %c1_16, %c1_17, %c0_18] : memref<1x10x6x128xbf16, #tpu.memory_space<vmem>>, vector<1x8x4x128xbf16>
    %14 = vector.shape_cast %13 : vector<1x8x4x128xbf16> to vector<8x4x128xbf16>
    %15 = vector.shape_cast %14 : vector<8x4x128xbf16> to vector<32x128xbf16>
    %c0_19 = arith.constant 0 : index
    %c1_20 = arith.constant 1 : index
    %c2_21 = arith.constant 2 : index
    %c0_22 = arith.constant 0 : index
    %16 = vector.load %arg1[%c0_19, %c1_20, %c2_21, %c0_22] : memref<1x10x6x128xbf16, #tpu.memory_space<vmem>>, vector<1x8x4x128xbf16>
    %17 = vector.shape_cast %16 : vector<1x8x4x128xbf16> to vector<8x4x128xbf16>
    %18 = vector.shape_cast %17 : vector<8x4x128xbf16> to vector<32x128xbf16>
    %c0_23 = arith.constant 0 : index
    %c2_24 = arith.constant 2 : index
    %c0_25 = arith.constant 0 : index
    %c0_26 = arith.constant 0 : index
    %19 = vector.load %arg1[%c0_23, %c2_24, %c0_25, %c0_26] : memref<1x10x6x128xbf16, #tpu.memory_space<vmem>>, vector<1x8x4x128xbf16>
    %20 = vector.shape_cast %19 : vector<1x8x4x128xbf16> to vector<8x4x128xbf16>
    %21 = vector.shape_cast %20 : vector<8x4x128xbf16> to vector<32x128xbf16>
    %c0_27 = arith.constant 0 : index
    %c2_28 = arith.constant 2 : index
    %c1_29 = arith.constant 1 : index
    %c0_30 = arith.constant 0 : index
    %22 = vector.load %arg1[%c0_27, %c2_28, %c1_29, %c0_30] : memref<1x10x6x128xbf16, #tpu.memory_space<vmem>>, vector<1x8x4x128xbf16>
    %23 = vector.shape_cast %22 : vector<1x8x4x128xbf16> to vector<8x4x128xbf16>
    %24 = vector.shape_cast %23 : vector<8x4x128xbf16> to vector<32x128xbf16>
    %c0_31 = arith.constant 0 : index
    %c2_32 = arith.constant 2 : index
    %c2_33 = arith.constant 2 : index
    %c0_34 = arith.constant 0 : index
    %25 = vector.load %arg1[%c0_31, %c2_32, %c2_33, %c0_34] : memref<1x10x6x128xbf16, #tpu.memory_space<vmem>>, vector<1x8x4x128xbf16>
    %26 = vector.shape_cast %25 : vector<1x8x4x128xbf16> to vector<8x4x128xbf16>
    %27 = vector.shape_cast %26 : vector<8x4x128xbf16> to vector<32x128xbf16>
    %28 = tpu.concatenate %3, %6, %9, %12, %15, %18, %21, %24, %27 in 1 : vector<32x128xbf16>, vector<32x128xbf16>, vector<32x128xbf16>, vector<32x128xbf16>, vector<32x128xbf16>, vector<32x128xbf16>, vector<32x128xbf16>, vector<32x128xbf16>, vector<32x128xbf16> -> vector<32x1152xbf16>
    %c0_35 = arith.constant 0 : index
    %c0_36 = arith.constant 0 : index
    %29 = vector.load %arg2[%c0_35, %c0_36] : memref<1152x128xbf16, #tpu.memory_space<vmem>>, vector<1152x128xbf16>
    %cst = arith.constant dense<0.000000e+00> : vector<32x128xf32>
    %30 = tpu.matmul %28, %29, %cst {dimension_numbers = #tpu.dot_dimension_numbers<[1], [0], [0], [1], [0, 0, 1, 1], [], []>} : vector<32x1152xbf16>, vector<1152x128xbf16>, vector<32x128xf32> -> vector<32x128xf32>
    %c0_37 = arith.constant 0 : index
    %c0_38 = arith.constant 0 : index
    %31 = vector.load %arg5[%c0_37, %c0_38] : memref<8x128xf32, #tpu.memory_space<vmem>>, vector<1x128xf32>
    %32 = vector.broadcast %31 : vector<1x128xf32> to vector<32x128xf32>
    %33 = arith.addf %30, %32 : vector<32x128xf32>
    %c1_39 = arith.constant 1 : index
    %c0_40 = arith.constant 0 : index
    %34 = vector.load %arg5[%c1_39, %c0_40] : memref<8x128xf32, #tpu.memory_space<vmem>>, vector<1x128xf32>
    %c4 = arith.constant 4 : index
    %c0_41 = arith.constant 0 : index
    %35 = vector.load %arg5[%c4, %c0_41] : memref<8x128xf32, #tpu.memory_space<vmem>>, vector<1x128xf32>
    %36 = arith.mulf %33, %33 : vector<32x128xf32>
    %37 = arith.truncf %36 : vector<32x128xf32> to vector<32x128xbf16>
    %cst_42 = arith.constant dense<0.000000e+00> : vector<32x128xf32>
    %38 = tpu.matmul %37, %0, %cst_42 {dimension_numbers = #tpu.dot_dimension_numbers<[1], [0], [0], [1], [0, 0, 1, 1], [], []>} : vector<32x128xbf16>, vector<128x128xbf16>, vector<32x128xf32> -> vector<32x128xf32>
    %cst_43 = arith.constant 9.99999997E-7 : f32
    %39 = vector.broadcast %cst_43 : f32 to vector<32x128xf32>
    %40 = arith.addf %38, %39 : vector<32x128xf32>
    %41 = math.rsqrt %40 : vector<32x128xf32>
    %42 = arith.mulf %40, %41 : vector<32x128xf32>
    %43 = vector.broadcast %34 : vector<1x128xf32> to vector<32x128xf32>
    %44 = arith.subf %42, %43 : vector<32x128xf32>
    %cst_44 = arith.constant 0.000000e+00 : f32
    %45 = vector.broadcast %cst_44 : f32 to vector<32x128xf32>
    %46 = arith.maximumf %44, %45 : vector<32x128xf32>
    %47 = vector.broadcast %cst_44 : f32 to vector<32x128xf32>
    %48 = arith.subf %44, %47 : vector<32x128xf32>
    %49 = arith.cmpf one, %48, %48 : vector<32x128xf32>
    %50 = vector.broadcast %cst_44 : f32 to vector<32x128xf32>
    %51 = arith.addf %44, %50 : vector<32x128xf32>
    %52 = math.absf %48 : vector<32x128xf32>
    %cst_45 = arith.constant 0.000000e+00 : f32
    %53 = vector.broadcast %cst_45 : f32 to vector<32x128xf32>
    %54 = arith.subf %53, %52 : vector<32x128xf32>
    %55 = math.exp %54 : vector<32x128xf32>
    %56 = math.log1p %55 : vector<32x128xf32>
    %57 = arith.addf %46, %56 : vector<32x128xf32>
    %58 = arith.select %49, %51, %57 : vector<32x128xi1>, vector<32x128xf32>
    %59 = arith.mulf %58, %41 : vector<32x128xf32>
    %cst_46 = arith.constant 5.000000e-01 : f32
    %60 = vector.broadcast %cst_46 : f32 to vector<1x128xf32>
    %61 = arith.cmpf ogt, %35, %60 : vector<1x128xf32>
    %cst_47 = arith.constant 0.000000e+00 : f32
    %62 = vector.broadcast %cst_47 : f32 to vector<32x128xf32>
    %63 = arith.maximumf %33, %62 : vector<32x128xf32>
    %64 = arith.mulf %33, %59 : vector<32x128xf32>
    %65 = vector.shape_cast %61 : vector<1x128xi1> to vector<1x128xi1>
    %66 = vector.broadcast %65 : vector<1x128xi1> to vector<32x128xi1>
    %67 = arith.select %66, %63, %64 : vector<32x128xi1>, vector<32x128xf32>
    %cst_48 = arith.constant 0.000000e+00 : bf16
    %68 = vector.broadcast %cst_48 : bf16 to vector<1x6x128xbf16>
    %cst_49 = arith.constant 0.000000e+00 : bf16
    %69 = vector.broadcast %cst_49 : bf16 to vector<10x1x128xbf16>
    %c0_50 = arith.constant 0 : index
    %c0_51 = arith.constant 0 : index
    %c0_52 = arith.constant 0 : index
    %70 = vector.load %arg7[%c0_50, %c0_51, %c0_52] : memref<10x6x128xbf16, #tpu.memory_space<vmem>>, vector<1x6x128xbf16>
    tpu.vector_store %arg7[%c0_50, %c0_51, %c0_52], %68 {strides = array<i32>} : memref<10x6x128xbf16, #tpu.memory_space<vmem>>, vector<1x6x128xbf16>,
    %c9 = arith.constant 9 : index
    %c0_53 = arith.constant 0 : index
    %c0_54 = arith.constant 0 : index
    %71 = vector.load %arg7[%c9, %c0_53, %c0_54] : memref<10x6x128xbf16, #tpu.memory_space<vmem>>, vector<1x6x128xbf16>
    tpu.vector_store %arg7[%c9, %c0_53, %c0_54], %68 {strides = array<i32>} : memref<10x6x128xbf16, #tpu.memory_space<vmem>>, vector<1x6x128xbf16>,
    %c0_55 = arith.constant 0 : index
    %c0_56 = arith.constant 0 : index
    %c0_57 = arith.constant 0 : index
    %72 = vector.load %arg7[%c0_55, %c0_56, %c0_57] : memref<10x6x128xbf16, #tpu.memory_space<vmem>>, vector<10x1x128xbf16>
    tpu.vector_store %arg7[%c0_55, %c0_56, %c0_57], %69 {strides = array<i32>} : memref<10x6x128xbf16, #tpu.memory_space<vmem>>, vector<10x1x128xbf16>,
    %c0_58 = arith.constant 0 : index
    %c5 = arith.constant 5 : index
    %c0_59 = arith.constant 0 : index
    %73 = vector.load %arg7[%c0_58, %c5, %c0_59] : memref<10x6x128xbf16, #tpu.memory_space<vmem>>, vector<10x1x128xbf16>
    tpu.vector_store %arg7[%c0_58, %c5, %c0_59], %69 {strides = array<i32>} : memref<10x6x128xbf16, #tpu.memory_space<vmem>>, vector<10x1x128xbf16>,
    %74 = arith.truncf %67 : vector<32x128xf32> to vector<32x128xbf16>
    %75 = vector.shape_cast %74 : vector<32x128xbf16> to vector<8x4x128xbf16>
    %c1_60 = arith.constant 1 : index
    %c1_61 = arith.constant 1 : index
    %c0_62 = arith.constant 0 : index
    %76 = vector.load %arg7[%c1_60, %c1_61, %c0_62] : memref<10x6x128xbf16, #tpu.memory_space<vmem>>, vector<8x4x128xbf16>
    tpu.vector_store %arg7[%c1_60, %c1_61, %c0_62], %75 {strides = array<i32>} : memref<10x6x128xbf16, #tpu.memory_space<vmem>>, vector<8x4x128xbf16>,
    %c0_63 = arith.constant 0 : index
    %c0_64 = arith.constant 0 : index
    %c0_65 = arith.constant 0 : index
    %77 = vector.load %arg7[%c0_63, %c0_64, %c0_65] : memref<10x6x128xbf16, #tpu.memory_space<vmem>>, vector<8x4x128xbf16>
    %78 = vector.shape_cast %77 : vector<8x4x128xbf16> to vector<32x128xbf16>
    %c0_66 = arith.constant 0 : index
    %c1_67 = arith.constant 1 : index
    %c0_68 = arith.constant 0 : index
    %79 = vector.load %arg7[%c0_66, %c1_67, %c0_68] : memref<10x6x128xbf16, #tpu.memory_space<vmem>>, vector<8x4x128xbf16>
    %80 = vector.shape_cast %79 : vector<8x4x128xbf16> to vector<32x128xbf16>
    %c0_69 = arith.constant 0 : index
    %c2_70 = arith.constant 2 : index
    %c0_71 = arith.constant 0 : index
    %81 = vector.load %arg7[%c0_69, %c2_70, %c0_71] : memref<10x6x128xbf16, #tpu.memory_space<vmem>>, vector<8x4x128xbf16>
    %82 = vector.shape_cast %81 : vector<8x4x128xbf16> to vector<32x128xbf16>
    %c1_72 = arith.constant 1 : index
    %c0_73 = arith.constant 0 : index
    %c0_74 = arith.constant 0 : index
    %83 = vector.load %arg7[%c1_72, %c0_73, %c0_74] : memref<10x6x128xbf16, #tpu.memory_space<vmem>>, vector<8x4x128xbf16>
    %84 = vector.shape_cast %83 : vector<8x4x128xbf16> to vector<32x128xbf16>
    %c1_75 = arith.constant 1 : index
    %c1_76 = arith.constant 1 : index
    %c0_77 = arith.constant 0 : index
    %85 = vector.load %arg7[%c1_75, %c1_76, %c0_77] : memref<10x6x128xbf16, #tpu.memory_space<vmem>>, vector<8x4x128xbf16>
    %86 = vector.shape_cast %85 : vector<8x4x128xbf16> to vector<32x128xbf16>
    %c1_78 = arith.constant 1 : index
    %c2_79 = arith.constant 2 : index
    %c0_80 = arith.constant 0 : index
    %87 = vector.load %arg7[%c1_78, %c2_79, %c0_80] : memref<10x6x128xbf16, #tpu.memory_space<vmem>>, vector<8x4x128xbf16>
    %88 = vector.shape_cast %87 : vector<8x4x128xbf16> to vector<32x128xbf16>
    %c2_81 = arith.constant 2 : index
    %c0_82 = arith.constant 0 : index
    %c0_83 = arith.constant 0 : index
    %89 = vector.load %arg7[%c2_81, %c0_82, %c0_83] : memref<10x6x128xbf16, #tpu.memory_space<vmem>>, vector<8x4x128xbf16>
    %90 = vector.shape_cast %89 : vector<8x4x128xbf16> to vector<32x128xbf16>
    %c2_84 = arith.constant 2 : index
    %c1_85 = arith.constant 1 : index
    %c0_86 = arith.constant 0 : index
    %91 = vector.load %arg7[%c2_84, %c1_85, %c0_86] : memref<10x6x128xbf16, #tpu.memory_space<vmem>>, vector<8x4x128xbf16>
    %92 = vector.shape_cast %91 : vector<8x4x128xbf16> to vector<32x128xbf16>
    %c2_87 = arith.constant 2 : index
    %c2_88 = arith.constant 2 : index
    %c0_89 = arith.constant 0 : index
    %93 = vector.load %arg7[%c2_87, %c2_88, %c0_89] : memref<10x6x128xbf16, #tpu.memory_space<vmem>>, vector<8x4x128xbf16>
    %94 = vector.shape_cast %93 : vector<8x4x128xbf16> to vector<32x128xbf16>
    %95 = tpu.concatenate %78, %80, %82, %84, %86, %88, %90, %92, %94 in 1 : vector<32x128xbf16>, vector<32x128xbf16>, vector<32x128xbf16>, vector<32x128xbf16>, vector<32x128xbf16>, vector<32x128xbf16>, vector<32x128xbf16>, vector<32x128xbf16>, vector<32x128xbf16> -> vector<32x1152xbf16>
    %c0_90 = arith.constant 0 : index
    %c0_91 = arith.constant 0 : index
    %96 = vector.load %arg3[%c0_90, %c0_91] : memref<1152x128xbf16, #tpu.memory_space<vmem>>, vector<1152x128xbf16>
    %cst_92 = arith.constant dense<0.000000e+00> : vector<32x128xf32>
    %97 = tpu.matmul %95, %96, %cst_92 {dimension_numbers = #tpu.dot_dimension_numbers<[1], [0], [0], [1], [0, 0, 1, 1], [], []>} : vector<32x1152xbf16>, vector<1152x128xbf16>, vector<32x128xf32> -> vector<32x128xf32>
    %c0_93 = arith.constant 0 : index
    %c1_94 = arith.constant 1 : index
    %c1_95 = arith.constant 1 : index
    %c0_96 = arith.constant 0 : index
    %98 = vector.load %arg1[%c0_93, %c1_94, %c1_95, %c0_96] : memref<1x10x6x128xbf16, #tpu.memory_space<vmem>>, vector<1x8x4x128xbf16>
    %99 = vector.shape_cast %98 : vector<1x8x4x128xbf16> to vector<8x4x128xbf16>
    %100 = arith.extf %99 : vector<8x4x128xbf16> to vector<8x4x128xf32>
    %101 = vector.shape_cast %100 : vector<8x4x128xf32> to vector<32x128xf32>
    %c2_97 = arith.constant 2 : index
    %c0_98 = arith.constant 0 : index
    %102 = vector.load %arg5[%c2_97, %c0_98] : memref<8x128xf32, #tpu.memory_space<vmem>>, vector<1x128xf32>
    %103 = vector.broadcast %102 : vector<1x128xf32> to vector<32x128xf32>
    %104 = arith.addf %97, %103 : vector<32x128xf32>
    %105 = arith.addf %104, %101 : vector<32x128xf32>
    %c3 = arith.constant 3 : index
    %c0_99 = arith.constant 0 : index
    %106 = vector.load %arg5[%c3, %c0_99] : memref<8x128xf32, #tpu.memory_space<vmem>>, vector<1x128xf32>
    %c4_100 = arith.constant 4 : index
    %c0_101 = arith.constant 0 : index
    %107 = vector.load %arg5[%c4_100, %c0_101] : memref<8x128xf32, #tpu.memory_space<vmem>>, vector<1x128xf32>
    %108 = arith.mulf %105, %105 : vector<32x128xf32>
    %109 = arith.truncf %108 : vector<32x128xf32> to vector<32x128xbf16>
    %cst_102 = arith.constant dense<0.000000e+00> : vector<32x128xf32>
    %110 = tpu.matmul %109, %0, %cst_102 {dimension_numbers = #tpu.dot_dimension_numbers<[1], [0], [0], [1], [0, 0, 1, 1], [], []>} : vector<32x128xbf16>, vector<128x128xbf16>, vector<32x128xf32> -> vector<32x128xf32>
    %cst_103 = arith.constant 9.99999997E-7 : f32
    %111 = vector.broadcast %cst_103 : f32 to vector<32x128xf32>
    %112 = arith.addf %110, %111 : vector<32x128xf32>
    %113 = math.rsqrt %112 : vector<32x128xf32>
    %114 = arith.mulf %112, %113 : vector<32x128xf32>
    %115 = vector.broadcast %106 : vector<1x128xf32> to vector<32x128xf32>
    %116 = arith.subf %114, %115 : vector<32x128xf32>
    %cst_104 = arith.constant 0.000000e+00 : f32
    %117 = vector.broadcast %cst_104 : f32 to vector<32x128xf32>
    %118 = arith.maximumf %116, %117 : vector<32x128xf32>
    %119 = vector.broadcast %cst_104 : f32 to vector<32x128xf32>
    %120 = arith.subf %116, %119 : vector<32x128xf32>
    %121 = arith.cmpf one, %120, %120 : vector<32x128xf32>
    %122 = vector.broadcast %cst_104 : f32 to vector<32x128xf32>
    %123 = arith.addf %116, %122 : vector<32x128xf32>
    %124 = math.absf %120 : vector<32x128xf32>
    %cst_105 = arith.constant 0.000000e+00 : f32
    %125 = vector.broadcast %cst_105 : f32 to vector<32x128xf32>
    %126 = arith.subf %125, %124 : vector<32x128xf32>
    %127 = math.exp %126 : vector<32x128xf32>
    %128 = math.log1p %127 : vector<32x128xf32>
    %129 = arith.addf %118, %128 : vector<32x128xf32>
    %130 = arith.select %121, %123, %129 : vector<32x128xi1>, vector<32x128xf32>
    %131 = arith.mulf %130, %113 : vector<32x128xf32>
    %cst_106 = arith.constant 5.000000e-01 : f32
    %132 = vector.broadcast %cst_106 : f32 to vector<1x128xf32>
    %133 = arith.cmpf ogt, %107, %132 : vector<1x128xf32>
    %cst_107 = arith.constant 0.000000e+00 : f32
    %134 = vector.broadcast %cst_107 : f32 to vector<32x128xf32>
    %135 = arith.maximumf %105, %134 : vector<32x128xf32>
    %136 = arith.mulf %105, %131 : vector<32x128xf32>
    %137 = vector.shape_cast %133 : vector<1x128xi1> to vector<1x128xi1>
    %138 = vector.broadcast %137 : vector<1x128xi1> to vector<32x128xi1>
    %139 = arith.select %138, %135, %136 : vector<32x128xi1>, vector<32x128xf32>
    %140 = vector.shape_cast %139 : vector<32x128xf32> to vector<8x4x128xf32>
    %c0_108 = arith.constant 0 : index
    %c0_109 = arith.constant 0 : index
    %c0_110 = arith.constant 0 : index
    %c0_111 = arith.constant 0 : index
    %141 = vector.load %arg6[%c0_108, %c0_109, %c0_110, %c0_111] : memref<1x8x4x128xf32, #tpu.memory_space<vmem>>, vector<1x8x4x128xf32>
    %142 = vector.shape_cast %141 : vector<1x8x4x128xf32> to vector<8x4x128xf32>
    %143 = vector.shape_cast %140 : vector<8x4x128xf32> to vector<1x8x4x128xf32>
    tpu.vector_store %arg6[%c0_108, %c0_109, %c0_110, %c0_111], %143 {strides = array<i32>} : memref<1x8x4x128xf32, #tpu.memory_space<vmem>>, vector<1x8x4x128xf32>,
    return
  }
  func.func @transform_0(%arg0: i32) -> (i32, i32, i32, i32) {
    %c0_i32 = arith.constant 0 : i32
    %c0_i32_0 = arith.constant 0 : i32
    %c0_i32_1 = arith.constant 0 : i32
    %c0_i32_2 = arith.constant 0 : i32
    return %arg0, %c0_i32, %c0_i32_0, %c0_i32_1 : i32, i32, i32, i32
  }
  func.func @transform_1(%arg0: i32) -> (i32, i32) {
    %c0_i32 = arith.constant 0 : i32
    %c0_i32_0 = arith.constant 0 : i32
    %c0_i32_1 = arith.constant 0 : i32
    return %c0_i32, %c0_i32_0 : i32, i32
  }
  func.func @transform_2(%arg0: i32) -> (i32, i32) {
    %c0_i32 = arith.constant 0 : i32
    %c0_i32_0 = arith.constant 0 : i32
    %c0_i32_1 = arith.constant 0 : i32
    return %c0_i32, %c0_i32_0 : i32, i32
  }
  func.func @transform_3(%arg0: i32) -> (i32, i32) {
    %c0_i32 = arith.constant 0 : i32
    %c0_i32_0 = arith.constant 0 : i32
    %c0_i32_1 = arith.constant 0 : i32
    return %c0_i32, %c0_i32_0 : i32, i32
  }
  func.func @transform_4(%arg0: i32) -> (i32, i32) {
    %c0_i32 = arith.constant 0 : i32
    %c0_i32_0 = arith.constant 0 : i32
    %c0_i32_1 = arith.constant 0 : i32
    return %c0_i32, %c0_i32_0 : i32, i32
  }
  func.func @transform_5(%arg0: i32) -> (i32, i32, i32, i32) {
    %c0_i32 = arith.constant 0 : i32
    %c0_i32_0 = arith.constant 0 : i32
    %c0_i32_1 = arith.constant 0 : i32
    %c0_i32_2 = arith.constant 0 : i32
    return %arg0, %c0_i32, %c0_i32_0, %c0_i32_1 : i32, i32, i32, i32
  }
}

</mosaic_0001>

<llo_original>
// kernel: tpu_custom_call.1
$region0: #{tpu_custom_call.1}
  #allocation0 [shape = 'u32[]', space=smem, size = 0x4, offset = 0x4, fixed_abs, tag = 'smem constant byte address 0x4 - core index']
  #allocation1 [shape = 'u32[144,128]{1,0:T(1,128)}', space=vmem, size = 0x12000, scoped, tag = 'internal scratch']
  #allocation2 [shape = 'bf16[10,6,128]{2,1,0:T(8,128)(2,1)}', space=vmem, size = 0x5000, scoped, tag = 'scratch operand']
  %s0 = inlined_call_operand.vmem [shape: bf16[4,10,6,128], index: 0, kind: input, shape index: {}]
  %s1 = inlined_call_operand.hbm [shape: bf16[1152,128], index: 1, kind: input, shape index: {}]
  %s2 = inlined_call_operand.hbm [shape: bf16[1152,128], index: 2, kind: input, shape index: {}]
  %s3 = inlined_call_operand.vmem [shape: bf16[128,128], index: 3, kind: input, shape index: {}]
  %s4 = inlined_call_operand.vmem [shape: f32[8,128], index: 4, kind: input, shape index: {}]
  %s5 = inlined_call_operand.hbm [shape: f32[4,8,4,128], index: 5, kind: output, shape index: {}]
  %s6 = sld [smem:[#allocation0]]
  $region61: #{tpu_custom_call.1} parent=0
    _
  %s8 = ssub.s32 1, %s6
  %s9 = scalar_select 0, %s8, %s6
  $region1: #{tpu_custom_call.1} parent=0
    #allocation3 [shape = 'u8[294912]{0}', space=vmem, size = 0x48000, scoped, tag = 'input window, operand 1, single buffered']
    #allocation4 [shape = 's32[2]{0}', space=sflag, size = 0x8, scoped, tag = 'scoped memory for tpu_custom_call.1']
    #allocation5 [shape = 's32[2]{0}', space=sflag, size = 0x8, scoped, tag = 'scoped memory for tpu_custom_call.1']
    #allocation6 [shape = 'u8[294912]{0}', space=vmem, size = 0x48000, scoped, tag = 'input window, operand 2, single buffered']
    #allocation7 [shape = 's32[1]{0}', space=sflag, size = 0x4, scoped, tag = 'scoped memory for tpu_custom_call.1']
    #allocation8 [shape = 'u8[32768]{0}', space=vmem, size = 0x8000, scoped, tag = 'output window, operand 0']
    %10 = vsyncpa [#allocation4], 0
    %11 = vsyncpa [#allocation7], 0
    %12 = vsyncpa [#allocation5], 0
    %s13 = scalar_lea.sflag [#allocation5], 1
    %14 = vsyncpa %s13, 0
    loop: start=0, step=1, limit=6
    $region2: #{tpu_custom_call.1} parent=1 // loop_pre_header
      _
    $region3: #{tpu_custom_call.1} parent=1 // loop_header
      %s16 = sphi 0, %s20
      %p17 = scmp.ge.s32.totalorder %s16, 6
      %s26 = sphi 0, %s28
      %s29 = sphi 0, %s26
      %s30 = sphi 0, %s29
      %s46 = sphi 0, %s30
      %s50 = sphi 0, %s50
      %s52 = sphi 0, %s50
      %s53 = sphi 0, %s52
      %s67 = sphi 0, %s53
      %s71 = sphi 0, %s71
      %s73 = sphi 0, %s71
      %s74 = sphi 0, %s73
      %s88 = sphi 0, %s74
      %s92 = sphi 0, %s92
      %s94 = sphi 0, %s92
      %s95 = sphi 0, %s94
      %s109 = sphi 0, %s95
      %s113 = sphi 0, %s113
      %s115 = sphi 0, %s113
      %s116 = sphi 0, %s115
      %s130 = sphi 0, %s116
      %s136 = sphi 0, %s138
      %s139 = sphi 0, %s136
      %s140 = sphi 0, %s139
      %s156 = sphi 0, %s140
    $region4: #{tpu_custom_call.1} parent=1 // loop_header_branch
      %19 = sbr.rel (%p17) target = $region8
    $region5: #{tpu_custom_call.1} parent=1 // loop_body
      %s21 = ssub.s32 %s16, 1
      %s22 = ssub.s32 %s16, 2
      %s23 = sadd.s32 %s16, 1
      %s24 = ssub.s32 %s16, %s23
      %p25 = scmp.eq.s32.totalorder %s24, 0
      %s27 = sadd.s32 %s26, 1
      %s28 = scalar_select %p25, %s26, %s27
      %p31 = pneg %p25
      %p32 = scmp.eq.s32.totalorder %s16, 3
      %p33 = por %p31, %p32
      %p34 = scmp.ne.s32.totalorder %s26, %s29
      %p35 = scmp.eq.s32.totalorder %s16, 0
      %p36 = por %p34, %p35
      %p37 = scmp.ne.s32.totalorder %s26, %s29
      %p38 = scmp.eq.s32.totalorder %s21, 3
      %p39 = por %p37, %p38
      %p40 = scmp.ne.s32.totalorder %s29, %s30
      %p41 = scmp.eq.s32.totalorder %s21, 0
      %p42 = por %p40, %p41
      %p43 = scmp.ne.s32.totalorder %s29, %s30
      %p44 = scmp.eq.s32.totalorder %s22, 3
      %p45 = por %p43, %p44
      %p47 = scmp.ne.s32.totalorder %s30, %s46
      %p48 = scmp.eq.s32.totalorder %s22, 0
      %p49 = por %p47, %p48
      %s51 = sadd.s32 %s50, 1
      %p54 = scmp.eq.s32.totalorder %s16, 3
      %p55 = scmp.ne.s32.totalorder %s50, %s52
      %p56 = scmp.eq.s32.totalorder %s16, 0
      %p57 = por %p55, %p56
      %p58 = scmp.ne.s32.totalorder %s50, %s52
      %p59 = scmp.eq.s32.totalorder %s21, 3
      %p60 = por %p58, %p59
      %p61 = scmp.ne.s32.totalorder %s52, %s53
      %p62 = scmp.eq.s32.totalorder %s21, 0
      %p63 = por %p61, %p62
      %p64 = scmp.ne.s32.totalorder %s52, %s53
      %p65 = scmp.eq.s32.totalorder %s22, 3
      %p66 = por %p64, %p65
      %p68 = scmp.ne.s32.totalorder %s53, %s67
      %p69 = scmp.eq.s32.totalorder %s22, 0
      %p70 = por %p68, %p69
      %s72 = sadd.s32 %s71, 1
      %p75 = scmp.eq.s32.totalorder %s16, 3
      %p76 = scmp.ne.s32.totalorder %s71, %s73
      %p77 = scmp.eq.s32.totalorder %s16, 0
      %p78 = por %p76, %p77
      %p79 = scmp.ne.s32.totalorder %s71, %s73
      %p80 = scmp.eq.s32.totalorder %s21, 3
      %p81 = por %p79, %p80
      %p82 = scmp.ne.s32.totalorder %s73, %s74
      %p83 = scmp.eq.s32.totalorder %s21, 0
      %p84 = por %p82, %p83
      %p85 = scmp.ne.s32.totalorder %s73, %s74
      %p86 = scmp.eq.s32.totalorder %s22, 3
      %p87 = por %p85, %p86
      %p89 = scmp.ne.s32.totalorder %s74, %s88
      %p90 = scmp.eq.s32.totalorder %s22, 0
      %p91 = por %p89, %p90
      %s93 = sadd.s32 %s92, 1
      %p96 = scmp.eq.s32.totalorder %s16, 3
      %p97 = scmp.ne.s32.totalorder %s92, %s94
      %p98 = scmp.eq.s32.totalorder %s16, 0
      %p99 = por %p97, %p98
      %p100 = scmp.ne.s32.totalorder %s92, %s94
      %p101 = scmp.eq.s32.totalorder %s21, 3
      %p102 = por %p100, %p101
      %p103 = scmp.ne.s32.totalorder %s94, %s95
      %p104 = scmp.eq.s32.totalorder %s21, 0
      %p105 = por %p103, %p104
      %p106 = scmp.ne.s32.totalorder %s94, %s95
      %p107 = scmp.eq.s32.totalorder %s22, 3
      %p108 = por %p106, %p107
      %p110 = scmp.ne.s32.totalorder %s95, %s109
      %p111 = scmp.eq.s32.totalorder %s22, 0
      %p112 = por %p110, %p111
      %s114 = sadd.s32 %s113, 1
      %p117 = scmp.eq.s32.totalorder %s16, 3
      %p118 = scmp.ne.s32.totalorder %s113, %s115
      %p119 = scmp.eq.s32.totalorder %s16, 0
      %p120 = por %p118, %p119
      %p121 = scmp.ne.s32.totalorder %s113, %s115
      %p122 = scmp.eq.s32.totalorder %s21, 3
      %p123 = por %p121, %p122
      %p124 = scmp.ne.s32.totalorder %s115, %s116
      %p125 = scmp.eq.s32.totalorder %s21, 0
      %p126 = por %p124, %p125
      %p127 = scmp.ne.s32.totalorder %s115, %s116
      %p128 = scmp.eq.s32.totalorder %s22, 3
      %p129 = por %p127, %p128
      %p131 = scmp.ne.s32.totalorder %s116, %s130
      %p132 = scmp.eq.s32.totalorder %s22, 0
      %p133 = por %p131, %p132
      %s134 = ssub.s32 %s16, %s23
      %p135 = scmp.eq.s32.totalorder %s134, 0
      %s137 = sadd.s32 %s136, 1
      %s138 = scalar_select %p135, %s136, %s137
      %p141 = pneg %p135
      %p142 = scmp.eq.s32.totalorder %s16, 3
      %p143 = por %p141, %p142
      %p144 = scmp.ne.s32.totalorder %s136, %s139
      %p145 = scmp.eq.s32.totalorder %s16, 0
      %p146 = por %p144, %p145
      %p147 = scmp.ne.s32.totalorder %s136, %s139
      %p148 = scmp.eq.s32.totalorder %s21, 3
      %p149 = por %p147, %p148
      %p150 = scmp.ne.s32.totalorder %s139, %s140
      %p151 = scmp.eq.s32.totalorder %s21, 0
      %p152 = por %p150, %p151
      %p153 = scmp.ne.s32.totalorder %s139, %s140
      %p154 = scmp.eq.s32.totalorder %s22, 3
      %p155 = por %p153, %p154
      %p157 = scmp.ne.s32.totalorder %s140, %s156
      %p158 = scmp.eq.s32.totalorder %s22, 0
      %p159 = por %p157, %p158
      %p160 = scmp.le.s32.totalorder 1, %s16
      %p161 = scmp.lt.s32.totalorder %s16, 5
      %p162 = pnand %p160, %p161
      %p163 = pneg %p162
      // Predicated region
      $region9: #{tpu_custom_call.1} parent=5 // pred_check
        _
      $region10: #{tpu_custom_call.1} parent=5 // pred_check_branch
        %165 = sbr.rel (%p162) target = $region12
      $region11: #{tpu_custom_call.1} parent=5 // pred_region
        %s166 = ssub.s32 %s16, 1
        // Predicated region
        $region13: #{tpu_custom_call.1} parent=11 // pred_check
          %p167 = pneg %p63
        $region14: #{tpu_custom_call.1} parent=11 // pred_check_branch
          %169 = sbr.rel (%p167) target = $region16
        $region15: #{tpu_custom_call.1} parent=11 // pred_region
          %s171 = ssub.s32 9216, 9216
          %172 = vsyncadd [#allocation4], %s171
          %s173 = sshll.u32 [#allocation3], 4
          %s174 = int_to_ptr.vmem [resolvable:$true] %s173
          %179 = dma.hbm_to_vmem [thread:$0]  %s1, 9216, %s174, [#allocation4], 64, 64, 4
        $region16: #{tpu_custom_call.1} parent=11 // pred_fallthru
          _
        // Predicated region
        $region17: #{tpu_custom_call.1} parent=11 // pred_check
          %p180 = pneg %p84
        $region18: #{tpu_custom_call.1} parent=11 // pred_check_branch
          %182 = sbr.rel (%p180) target = $region20
        $region19: #{tpu_custom_call.1} parent=11 // pred_region
          %s184 = ssub.s32 9216, 9216
          %185 = vsyncadd [#allocation7], %s184
          %s186 = sshll.u32 [#allocation6], 4
          %s187 = int_to_ptr.vmem [resolvable:$true] %s186
          %192 = dma.hbm_to_vmem [thread:$0]  %s2, 9216, %s187, [#allocation7], 64, 64, 4
        $region20: #{tpu_custom_call.1} parent=11 // pred_fallthru
          _
        // Predicated region
        $region21: #{tpu_custom_call.1} parent=11 // pred_check
          %p193 = pneg %p105
        $region22: #{tpu_custom_call.1} parent=11 // pred_check_branch
          %195 = sbr.rel (%p193) target = $region24
        $region23: #{tpu_custom_call.1} parent=11 // pred_region
          _
        $region24: #{tpu_custom_call.1} parent=11 // pred_fallthru
          _
        // Predicated region
        $region25: #{tpu_custom_call.1} parent=11 // pred_check
          %p196 = pneg %p126
        $region26: #{tpu_custom_call.1} parent=11 // pred_check_branch
          %198 = sbr.rel (%p196) target = $region28
        $region27: #{tpu_custom_call.1} parent=11 // pred_region
          _
        $region28: #{tpu_custom_call.1} parent=11 // pred_fallthru
          _
      $region12: #{tpu_custom_call.1} parent=5 // pred_fallthru
        _
      %p199 = scmp.lt.s32.totalorder %s16, 4
      // Predicated region
      $region29: #{tpu_custom_call.1} parent=5 // pred_check
        %p200 = pneg %p199
      $region30: #{tpu_custom_call.1} parent=5 // pred_check_branch
        %202 = sbr.rel (%p200) target = $region32
      $region31: #{tpu_custom_call.1} parent=5 // pred_region
        // Predicated region
        $region33: #{tpu_custom_call.1} parent=31 // pred_check
          %p203 = pneg %p36
        $region34: #{tpu_custom_call.1} parent=31 // pred_check_branch
          %205 = sbr.rel (%p203) target = $region36
        $region35: #{tpu_custom_call.1} parent=31 // pred_region
          %p206 = scmp.lt.s32.totalorder %s16, 3
          %s207 = scalar_select %p206, %s16, 3
          %s208 = smul.addr %s207, 10
          %s209 = smul.addr %s208, 4
          %s210 = scalar_lea.vmem %s0, %s209
        $region36: #{tpu_custom_call.1} parent=31 // pred_fallthru
          _
      $region32: #{tpu_custom_call.1} parent=5 // pred_fallthru
        _
      %p211 = scmp.le.s32.totalorder 1, %s16
      %p212 = scmp.lt.s32.totalorder %s16, 5
      %p213 = pnand %p211, %p212
      %p214 = pneg %p213
      // Predicated region
      $region37: #{tpu_custom_call.1} parent=5 // pred_check
        _
      $region38: #{tpu_custom_call.1} parent=5 // pred_check_branch
        %216 = sbr.rel (%p213) target = $region40
      $region39: #{tpu_custom_call.1} parent=5 // pred_region
        %s217 = ssub.s32 %s16, 1
        // Predicated region
        $region41: #{tpu_custom_call.1} parent=39 // pred_check
          %p218 = pneg %p63
        $region42: #{tpu_custom_call.1} parent=39 // pred_check_branch
          %220 = sbr.rel (%p218) target = $region44
        $region43: #{tpu_custom_call.1} parent=39 // pred_region
          %221 = dma.done [#allocation4], 9216
        $region44: #{tpu_custom_call.1} parent=39 // pred_fallthru
          _
        // Predicated region
        $region45: #{tpu_custom_call.1} parent=39 // pred_check
          %p222 = pneg %p84
        $region46: #{tpu_custom_call.1} parent=39 // pred_check_branch
          %224 = sbr.rel (%p222) target = $region48
        $region47: #{tpu_custom_call.1} parent=39 // pred_region
          %225 = dma.done [#allocation7], 9216
        $region48: #{tpu_custom_call.1} parent=39 // pred_fallthru
          _
        %p226 = scmp.lt.s32.totalorder %s21, 3
        %s227 = scalar_select %p226, %s21, 3
        %s228 = smul.addr %s227, 10
        %s229 = smul.addr %s228, 4
        %s230 = scalar_lea.vmem %s0, %s229
        %p231 = pneg %p42
        %p232 = pneg %p39
        %p233 = pneg %p63
        %p234 = pneg %p60
        %p235 = pneg %p84
        %p236 = pneg %p81
        %p237 = pneg %p105
        %p238 = pneg %p102
        %p239 = pneg %p126
        %p240 = pneg %p123
        %p241 = pneg %p152
        %p242 = pneg %p149
        %s243 = sand.u32 %s139, 1
        %s244 = scalar_lea.sflag [#allocation5], %s243
        %s245 = sand.u32 %s139, 1
        %s246 = smul.addr %s245, 32
        %s247 = scalar_lea.vmem [#allocation8], %s246
        %p248 = scmp.lt.s32.totalorder %s21, 3
        %s249 = scalar_select %p248, %s21, 3
        %s250 = smul.addr %s249, 10
        %s251 = smul.addr %s250, 4
        %s252 = scalar_lea.vmem %s0, %s251
        %v254 = vld [vmem:[%s3] sm:$0xf]
        %v255 = vld [vmem:[%s3 + $0x4] sm:$0xf]
        %v256 = vld [vmem:[%s3 + $0x8] sm:$0xf]
        %v257 = vld [vmem:[%s3 + $0xc] sm:$0xf]
        %v258 = vld [vmem:[%s3 + $0x10] sm:$0xf]
        %v259 = vld [vmem:[%s3 + $0x14] sm:$0xf]
        %v260 = vld [vmem:[%s3 + $0x18] sm:$0xf]
        %v261 = vld [vmem:[%s3 + $0x1c] sm:$0xf]
        %v262 = vld [vmem:[%s3 + $0x20] sm:$0xf]
        %v263 = vld [vmem:[%s3 + $0x24] sm:$0xf]
        %v264 = vld [vmem:[%s3 + $0x28] sm:$0xf]
        %v265 = vld [vmem:[%s3 + $0x2c] sm:$0xf]
        %v266 = vld [vmem:[%s3 + $0x30] sm:$0xf]
        %v267 = vld [vmem:[%s3 + $0x34] sm:$0xf]
        %v268 = vld [vmem:[%s3 + $0x38] sm:$0xf]
        %v269 = vld [vmem:[%s3 + $0x3c] sm:$0xf]
        %v270 = vld [vmem:[%s252] sm:$0x3]
        %v271 = vld [vmem:[%s252 + $0x4] sm:$0x3]
        %v272 = vld [vmem:[%s252 + $0x8] sm:$0x3]
        %v273 = vld [vmem:[%s252 + $0xc] sm:$0x3]
        %v274 = vld [vmem:[%s252 + $0x10] sm:$0x3]
        %v275 = vld [vmem:[%s252 + $0x14] sm:$0x3]
        %v276 = vld [vmem:[%s252 + $0x18] sm:$0x3]
        %v277 = vld [vmem:[%s252 + $0x1c] sm:$0x3]
        %v278 = vld [vmem:[%s252] sm:$0x7]
        %v279 = vld [vmem:[%s252 + $0x4] sm:$0x7]
        %v280 = vld [vmem:[%s252 + $0x8] sm:$0x7]
        %v281 = vld [vmem:[%s252 + $0xc] sm:$0x7]
        %v282 = vld [vmem:[%s252 + $0x10] sm:$0x7]
        %v283 = vld [vmem:[%s252 + $0x14] sm:$0x7]
        %v284 = vld [vmem:[%s252 + $0x18] sm:$0x7]
        %v285 = vld [vmem:[%s252 + $0x1c] sm:$0x7]
        %v295 = vunpack.c.l.s4 1983009808
        %v296 = vunpack.c.0.s8 %v295
        %v297 = vlaneseq
        %v298 = vshrl.u32 %v297, 7
        %v299 = vsub.s32 %v296, %v298
        %v300 = vrot.slane %v278, %v299
        %v301 = vcombine.high %v300, %v300
        %v303 = vunpack.c.l.s4 1983009808
        %v304 = vunpack.c.0.s8 %v303
        %v305 = vlaneseq
        %v306 = vshrl.u32 %v305, 7
        %v307 = vsub.s32 %v304, %v306
        %v308 = vrot.slane %v279, %v307
        %v309 = vcombine.high %v308, %v308
        %v311 = vunpack.c.l.s4 1983009808
        %v312 = vunpack.c.0.s8 %v311
        %v313 = vlaneseq
        %v314 = vshrl.u32 %v313, 7
        %v315 = vsub.s32 %v312, %v314
        %v316 = vrot.slane %v280, %v315
        %v317 = vcombine.high %v316, %v316
        %v319 = vunpack.c.l.s4 1983009808
        %v320 = vunpack.c.0.s8 %v319
        %v321 = vlaneseq
        %v322 = vshrl.u32 %v321, 7
        %v323 = vsub.s32 %v320, %v322
        %v324 = vrot.slane %v281, %v323
        %v325 = vcombine.high %v324, %v324
        %v327 = vunpack.c.l.s4 1983009808
        %v328 = vunpack.c.0.s8 %v327
        %v329 = vlaneseq
        %v330 = vshrl.u32 %v329, 7
        %v331 = vsub.s32 %v328, %v330
        %v332 = vrot.slane %v282, %v331
        %v333 = vcombine.high %v332, %v332
        %v335 = vunpack.c.l.s4 1983009808
        %v336 = vunpack.c.0.s8 %v335
        %v337 = vlaneseq
        %v338 = vshrl.u32 %v337, 7
        %v339 = vsub.s32 %v336, %v338
        %v340 = vrot.slane %v283, %v339
        %v341 = vcombine.high %v340, %v340
        %v343 = vunpack.c.l.s4 1983009808
        %v344 = vunpack.c.0.s8 %v343
        %v345 = vlaneseq
        %v346 = vshrl.u32 %v345, 7
        %v347 = vsub.s32 %v344, %v346
        %v348 = vrot.slane %v284, %v347
        %v349 = vcombine.high %v348, %v348
        %v351 = vunpack.c.l.s4 1983009808
        %v352 = vunpack.c.0.s8 %v351
        %v353 = vlaneseq
        %v354 = vshrl.u32 %v353, 7
        %v355 = vsub.s32 %v352, %v354
        %v356 = vrot.slane %v285, %v355
        %v357 = vcombine.high %v356, %v356
        %vm358 = vsmask.f32 1280
        %vm359 = vsmask.f32 3336
        %vm360 = vmor %vm358, %vm359
        %vm361 = vsmask.f32 5392
        %vm362 = vmor %vm360, %vm361
        %vm363 = vsmask.f32 7448
        %vm364 = vmor %vm362, %vm363
        %v366 = vshrl.u32 %v300, 16
        %v368 = vrot.slane %v366, 6
        %v369 = vshll.u32 %v300, 16
        %v371 = vrot.slane %v369, 7
        %v372 = vor.u32 %v368, %v371
        %v373 = vrot.slane %v372, 2
        %v375 = vshll.u32 %v301, 16
        %v377 = vrot.slane %v375, 7
        %v378 = vsel %vm364, %v373, %v377
        %v380 = vshrl.u32 %v308, 16
        %v382 = vrot.slane %v380, 6
        %v383 = vshll.u32 %v308, 16
        %v385 = vrot.slane %v383, 7
        %v386 = vor.u32 %v382, %v385
        %v387 = vrot.slane %v386, 2
        %v389 = vshll.u32 %v309, 16
        %v391 = vrot.slane %v389, 7
        %v392 = vsel %vm364, %v387, %v391
        %v394 = vshrl.u32 %v316, 16
        %v396 = vrot.slane %v394, 6
        %v397 = vshll.u32 %v316, 16
        %v399 = vrot.slane %v397, 7
        %v400 = vor.u32 %v396, %v399
        %v401 = vrot.slane %v400, 2
        %v403 = vshll.u32 %v317, 16
        %v405 = vrot.slane %v403, 7
        %v406 = vsel %vm364, %v401, %v405
        %v408 = vshrl.u32 %v324, 16
        %v410 = vrot.slane %v408, 6
        %v411 = vshll.u32 %v324, 16
        %v413 = vrot.slane %v411, 7
        %v414 = vor.u32 %v410, %v413
        %v415 = vrot.slane %v414, 2
        %v417 = vshll.u32 %v325, 16
        %v419 = vrot.slane %v417, 7
        %v420 = vsel %vm364, %v415, %v419
        %v422 = vshrl.u32 %v332, 16
        %v424 = vrot.slane %v422, 6
        %v425 = vshll.u32 %v332, 16
        %v427 = vrot.slane %v425, 7
        %v428 = vor.u32 %v424, %v427
        %v429 = vrot.slane %v428, 2
        %v431 = vshll.u32 %v333, 16
        %v433 = vrot.slane %v431, 7
        %v434 = vsel %vm364, %v429, %v433
        %v436 = vshrl.u32 %v340, 16
        %v438 = vrot.slane %v436, 6
        %v439 = vshll.u32 %v340, 16
        %v441 = vrot.slane %v439, 7
        %v442 = vor.u32 %v438, %v441
        %v443 = vrot.slane %v442, 2
        %v445 = vshll.u32 %v341, 16
        %v447 = vrot.slane %v445, 7
        %v448 = vsel %vm364, %v443, %v447
        %v450 = vshrl.u32 %v348, 16
        %v452 = vrot.slane %v450, 6
        %v453 = vshll.u32 %v348, 16
        %v455 = vrot.slane %v453, 7
        %v456 = vor.u32 %v452, %v455
        %v457 = vrot.slane %v456, 2
        %v459 = vshll.u32 %v349, 16
        %v461 = vrot.slane %v459, 7
        %v462 = vsel %vm364, %v457, %v461
        %v464 = vshrl.u32 %v356, 16
        %v466 = vrot.slane %v464, 6
        %v467 = vshll.u32 %v356, 16
        %v469 = vrot.slane %v467, 7
        %v470 = vor.u32 %v466, %v469
        %v471 = vrot.slane %v470, 2
        %v473 = vshll.u32 %v357, 16
        %v475 = vrot.slane %v473, 7
        %v476 = vsel %vm364, %v471, %v475
        %v477 = vld [vmem:[%s252] sm:$0x6]
        %v478 = vld [vmem:[%s252 + $0x4] sm:$0x6]
        %v479 = vld [vmem:[%s252 + $0x8] sm:$0x6]
        %v480 = vld [vmem:[%s252 + $0xc] sm:$0x6]
        %v481 = vld [vmem:[%s252 + $0x10] sm:$0x6]
        %v482 = vld [vmem:[%s252 + $0x14] sm:$0x6]
        %v483 = vld [vmem:[%s252 + $0x18] sm:$0x6]
        %v484 = vld [vmem:[%s252 + $0x1c] sm:$0x6]
        %v494 = vunpack.c.l.s4 1983009808
        %v495 = vunpack.c.0.s8 %v494
        %v496 = vlaneseq
        %v497 = vshrl.u32 %v496, 7
        %v498 = vsub.s32 %v495, %v497
        %v499 = vrot.slane %v477, %v498
        %v500 = vcombine.high %v499, %v499
        %v502 = vunpack.c.l.s4 1983009808
        %v503 = vunpack.c.0.s8 %v502
        %v504 = vlaneseq
        %v505 = vshrl.u32 %v504, 7
        %v506 = vsub.s32 %v503, %v505
        %v507 = vrot.slane %v478, %v506
        %v508 = vcombine.high %v507, %v507
        %v510 = vunpack.c.l.s4 1983009808
        %v511 = vunpack.c.0.s8 %v510
        %v512 = vlaneseq
        %v513 = vshrl.u32 %v512, 7
        %v514 = vsub.s32 %v511, %v513
        %v515 = vrot.slane %v479, %v514
        %v516 = vcombine.high %v515, %v515
        %v518 = vunpack.c.l.s4 1983009808
        %v519 = vunpack.c.0.s8 %v518
        %v520 = vlaneseq
        %v521 = vshrl.u32 %v520, 7
        %v522 = vsub.s32 %v519, %v521
        %v523 = vrot.slane %v480, %v522
        %v524 = vcombine.high %v523, %v523
        %v526 = vunpack.c.l.s4 1983009808
        %v527 = vunpack.c.0.s8 %v526
        %v528 = vlaneseq
        %v529 = vshrl.u32 %v528, 7
        %v530 = vsub.s32 %v527, %v529
        %v531 = vrot.slane %v481, %v530
        %v532 = vcombine.high %v531, %v531
        %v534 = vunpack.c.l.s4 1983009808
        %v535 = vunpack.c.0.s8 %v534
        %v536 = vlaneseq
        %v537 = vshrl.u32 %v536, 7
        %v538 = vsub.s32 %v535, %v537
        %v539 = vrot.slane %v482, %v538
        %v540 = vcombine.high %v539, %v539
        %v542 = vunpack.c.l.s4 1983009808
        %v543 = vunpack.c.0.s8 %v542
        %v544 = vlaneseq
        %v545 = vshrl.u32 %v544, 7
        %v546 = vsub.s32 %v543, %v545
        %v547 = vrot.slane %v483, %v546
        %v548 = vcombine.high %v547, %v547
        %v550 = vunpack.c.l.s4 1983009808
        %v551 = vunpack.c.0.s8 %v550
        %v552 = vlaneseq
        %v553 = vshrl.u32 %v552, 7
        %v554 = vsub.s32 %v551, %v553
        %v555 = vrot.slane %v484, %v554
        %v556 = vcombine.high %v555, %v555
        %vm557 = vcmask 1040384
        %vm558 = vcmask 1042434
        %vm559 = vmor %vm557, %vm558
        %vm560 = vcmask 1044484
        %vm561 = vmor %vm559, %vm560
        %vm562 = vcmask 1046534
        %vm563 = vmor %vm561, %vm562
        %v564 = vrot.slane %v499, 7
        %v565 = vrot.slane %v564, 2
        %v566 = vrot.slane %v500, 7
        %v567 = vsel %vm563, %v565, %v566
        %v568 = vrot.slane %v507, 7
        %v569 = vrot.slane %v568, 2
        %v570 = vrot.slane %v508, 7
        %v571 = vsel %vm563, %v569, %v570
        %v572 = vrot.slane %v515, 7
        %v573 = vrot.slane %v572, 2
        %v574 = vrot.slane %v516, 7
        %v575 = vsel %vm563, %v573, %v574
        %v576 = vrot.slane %v523, 7
        %v577 = vrot.slane %v576, 2
        %v578 = vrot.slane %v524, 7
        %v579 = vsel %vm563, %v577, %v578
        %v580 = vrot.slane %v531, 7
        %v581 = vrot.slane %v580, 2
        %v582 = vrot.slane %v532, 7
        %v583 = vsel %vm563, %v581, %v582
        %v584 = vrot.slane %v539, 7
        %v585 = vrot.slane %v584, 2
        %v586 = vrot.slane %v540, 7
        %v587 = vsel %vm563, %v585, %v586
        %v588 = vrot.slane %v547, 7
        %v589 = vrot.slane %v588, 2
        %v590 = vrot.slane %v548, 7
        %v591 = vsel %vm563, %v589, %v590
        %v592 = vrot.slane %v555, 7
        %v593 = vrot.slane %v592, 2
        %v594 = vrot.slane %v556, 7
        %v595 = vsel %vm563, %v593, %v594
        %s596 = scalar_lea.vmem %s252, 4
        %v597 = vld [vmem:[%s596] sm:$0x3]
        %v598 = vld [vmem:[%s596 + $0x4] sm:$0x3]
        %v599 = vld [vmem:[%s596 + $0x8] sm:$0x3]
        %v600 = vld [vmem:[%s596 + $0xc] sm:$0x3]
        %v601 = vld [vmem:[%s596 + $0x10] sm:$0x3]
        %v602 = vld [vmem:[%s596 + $0x14] sm:$0x3]
        %v603 = vld [vmem:[%s596 + $0x18] sm:$0x3]
        %v604 = vld [vmem:[%s596 + $0x1c] sm:$0x3]
        %v605 = vld [vmem:[%s596] sm:$0x7]
        %v606 = vld [vmem:[%s596 + $0x4] sm:$0x7]
        %v607 = vld [vmem:[%s596 + $0x8] sm:$0x7]
        %v608 = vld [vmem:[%s596 + $0xc] sm:$0x7]
        %v609 = vld [vmem:[%s596 + $0x10] sm:$0x7]
        %v610 = vld [vmem:[%s596 + $0x14] sm:$0x7]
        %v611 = vld [vmem:[%s596 + $0x18] sm:$0x7]
        %v612 = vld [vmem:[%s596 + $0x1c] sm:$0x7]
        %v622 = vunpack.c.l.s4 1983009808
        %v623 = vunpack.c.0.s8 %v622
        %v624 = vlaneseq
        %v625 = vshrl.u32 %v624, 7
        %v626 = vsub.s32 %v623, %v625
        %v627 = vrot.slane %v605, %v626
        %v628 = vcombine.high %v627, %v627
        %v630 = vunpack.c.l.s4 1983009808
        %v631 = vunpack.c.0.s8 %v630
        %v632 = vlaneseq
        %v633 = vshrl.u32 %v632, 7
        %v634 = vsub.s32 %v631, %v633
        %v635 = vrot.slane %v606, %v634
        %v636 = vcombine.high %v635, %v635
        %v638 = vunpack.c.l.s4 1983009808
        %v639 = vunpack.c.0.s8 %v638
        %v640 = vlaneseq
        %v641 = vshrl.u32 %v640, 7
        %v642 = vsub.s32 %v639, %v641
        %v643 = vrot.slane %v607, %v642
        %v644 = vcombine.high %v643, %v643
        %v646 = vunpack.c.l.s4 1983009808
        %v647 = vunpack.c.0.s8 %v646
        %v648 = vlaneseq
        %v649 = vshrl.u32 %v648, 7
        %v650 = vsub.s32 %v647, %v649
        %v651 = vrot.slane %v608, %v650
        %v652 = vcombine.high %v651, %v651
        %v654 = vunpack.c.l.s4 1983009808
        %v655 = vunpack.c.0.s8 %v654
        %v656 = vlaneseq
        %v657 = vshrl.u32 %v656, 7
        %v658 = vsub.s32 %v655, %v657
        %v659 = vrot.slane %v609, %v658
        %v660 = vcombine.high %v659, %v659
        %v662 = vunpack.c.l.s4 1983009808
        %v663 = vunpack.c.0.s8 %v662
        %v664 = vlaneseq
        %v665 = vshrl.u32 %v664, 7
        %v666 = vsub.s32 %v663, %v665
        %v667 = vrot.slane %v610, %v666
        %v668 = vcombine.high %v667, %v667
        %v670 = vunpack.c.l.s4 1983009808
        %v671 = vunpack.c.0.s8 %v670
        %v672 = vlaneseq
        %v673 = vshrl.u32 %v672, 7
        %v674 = vsub.s32 %v671, %v673
        %v675 = vrot.slane %v611, %v674
        %v676 = vcombine.high %v675, %v675
        %v678 = vunpack.c.l.s4 1983009808
        %v679 = vunpack.c.0.s8 %v678
        %v680 = vlaneseq
        %v681 = vshrl.u32 %v680, 7
        %v682 = vsub.s32 %v679, %v681
        %v683 = vrot.slane %v612, %v682
        %v684 = vcombine.high %v683, %v683
        %v686 = vshrl.u32 %v627, 16
        %v688 = vrot.slane %v686, 6
        %v689 = vshll.u32 %v627, 16
        %v691 = vrot.slane %v689, 7
        %v692 = vor.u32 %v688, %v691
        %v693 = vrot.slane %v692, 2
        %v695 = vshll.u32 %v628, 16
        %v697 = vrot.slane %v695, 7
        %v698 = vsel %vm364, %v693, %v697
        %v700 = vshrl.u32 %v635, 16
        %v702 = vrot.slane %v700, 6
        %v703 = vshll.u32 %v635, 16
        %v705 = vrot.slane %v703, 7
        %v706 = vor.u32 %v702, %v705
        %v707 = vrot.slane %v706, 2
        %v709 = vshll.u32 %v636, 16
        %v711 = vrot.slane %v709, 7
        %v712 = vsel %vm364, %v707, %v711
        %v714 = vshrl.u32 %v643, 16
        %v716 = vrot.slane %v714, 6
        %v717 = vshll.u32 %v643, 16
        %v719 = vrot.slane %v717, 7
        %v720 = vor.u32 %v716, %v719
        %v721 = vrot.slane %v720, 2
        %v723 = vshll.u32 %v644, 16
        %v725 = vrot.slane %v723, 7
        %v726 = vsel %vm364, %v721, %v725
        %v728 = vshrl.u32 %v651, 16
        %v730 = vrot.slane %v728, 6
        %v731 = vshll.u32 %v651, 16
        %v733 = vrot.slane %v731, 7
        %v734 = vor.u32 %v730, %v733
        %v735 = vrot.slane %v734, 2
        %v737 = vshll.u32 %v652, 16
        %v739 = vrot.slane %v737, 7
        %v740 = vsel %vm364, %v735, %v739
        %v742 = vshrl.u32 %v659, 16
        %v744 = vrot.slane %v742, 6
        %v745 = vshll.u32 %v659, 16
        %v747 = vrot.slane %v745, 7
        %v748 = vor.u32 %v744, %v747
        %v749 = vrot.slane %v748, 2
        %v751 = vshll.u32 %v660, 16
        %v753 = vrot.slane %v751, 7
        %v754 = vsel %vm364, %v749, %v753
        %v756 = vshrl.u32 %v667, 16
        %v758 = vrot.slane %v756, 6
        %v759 = vshll.u32 %v667, 16
        %v761 = vrot.slane %v759, 7
        %v762 = vor.u32 %v758, %v761
        %v763 = vrot.slane %v762, 2
        %v765 = vshll.u32 %v668, 16
        %v767 = vrot.slane %v765, 7
        %v768 = vsel %vm364, %v763, %v767
        %v770 = vshrl.u32 %v675, 16
        %v772 = vrot.slane %v770, 6
        %v773 = vshll.u32 %v675, 16
        %v775 = vrot.slane %v773, 7
        %v776 = vor.u32 %v772, %v775
        %v777 = vrot.slane %v776, 2
        %v779 = vshll.u32 %v676, 16
        %v781 = vrot.slane %v779, 7
        %v782 = vsel %vm364, %v777, %v781
        %v784 = vshrl.u32 %v683, 16
        %v786 = vrot.slane %v784, 6
        %v787 = vshll.u32 %v683, 16
        %v789 = vrot.slane %v787, 7
        %v790 = vor.u32 %v786, %v789
        %v791 = vrot.slane %v790, 2
        %v793 = vshll.u32 %v684, 16
        %v795 = vrot.slane %v793, 7
        %v796 = vsel %vm364, %v791, %v795
        %v797 = vld [vmem:[%s596] sm:$0x6]
        %v798 = vld [vmem:[%s596 + $0x4] sm:$0x6]
        %v799 = vld [vmem:[%s596 + $0x8] sm:$0x6]
        %v800 = vld [vmem:[%s596 + $0xc] sm:$0x6]
        %v801 = vld [vmem:[%s596 + $0x10] sm:$0x6]
        %v802 = vld [vmem:[%s596 + $0x14] sm:$0x6]
        %v803 = vld [vmem:[%s596 + $0x18] sm:$0x6]
        %v804 = vld [vmem:[%s596 + $0x1c] sm:$0x6]
        %v814 = vunpack.c.l.s4 1983009808
        %v815 = vunpack.c.0.s8 %v814
        %v816 = vlaneseq
        %v817 = vshrl.u32 %v816, 7
        %v818 = vsub.s32 %v815, %v817
        %v819 = vrot.slane %v797, %v818
        %v820 = vcombine.high %v819, %v819
        %v822 = vunpack.c.l.s4 1983009808
        %v823 = vunpack.c.0.s8 %v822
        %v824 = vlaneseq
        %v825 = vshrl.u32 %v824, 7
        %v826 = vsub.s32 %v823, %v825
        %v827 = vrot.slane %v798, %v826
        %v828 = vcombine.high %v827, %v827
        %v830 = vunpack.c.l.s4 1983009808
        %v831 = vunpack.c.0.s8 %v830
        %v832 = vlaneseq
        %v833 = vshrl.u32 %v832, 7
        %v834 = vsub.s32 %v831, %v833
        %v835 = vrot.slane %v799, %v834
        %v836 = vcombine.high %v835, %v835
        %v838 = vunpack.c.l.s4 1983009808
        %v839 = vunpack.c.0.s8 %v838
        %v840 = vlaneseq
        %v841 = vshrl.u32 %v840, 7
        %v842 = vsub.s32 %v839, %v841
        %v843 = vrot.slane %v800, %v842
        %v844 = vcombine.high %v843, %v843
        %v846 = vunpack.c.l.s4 1983009808
        %v847 = vunpack.c.0.s8 %v846
        %v848 = vlaneseq
        %v849 = vshrl.u32 %v848, 7
        %v850 = vsub.s32 %v847, %v849
        %v851 = vrot.slane %v801, %v850
        %v852 = vcombine.high %v851, %v851
        %v854 = vunpack.c.l.s4 1983009808
        %v855 = vunpack.c.0.s8 %v854
        %v856 = vlaneseq
        %v857 = vshrl.u32 %v856, 7
        %v858 = vsub.s32 %v855, %v857
        %v859 = vrot.slane %v802, %v858
        %v860 = vcombine.high %v859, %v859
        %v862 = vunpack.c.l.s4 1983009808
        %v863 = vunpack.c.0.s8 %v862
        %v864 = vlaneseq
        %v865 = vshrl.u32 %v864, 7
        %v866 = vsub.s32 %v863, %v865
        %v867 = vrot.slane %v803, %v866
        %v868 = vcombine.high %v867, %v867
        %v870 = vunpack.c.l.s4 1983009808
        %v871 = vunpack.c.0.s8 %v870
        %v872 = vlaneseq
        %v873 = vshrl.u32 %v872, 7
        %v874 = vsub.s32 %v871, %v873
        %v875 = vrot.slane %v804, %v874
        %v876 = vcombine.high %v875, %v875
        %v877 = vrot.slane %v819, 7
        %v878 = vrot.slane %v877, 2
        %v879 = vrot.slane %v820, 7
        %v880 = vsel %vm563, %v878, %v879
        %v881 = vrot.slane %v827, 7
        %v882 = vrot.slane %v881, 2
        %v883 = vrot.slane %v828, 7
        %v884 = vsel %vm563, %v882, %v883
        %v885 = vrot.slane %v835, 7
        %v886 = vrot.slane %v885, 2
        %v887 = vrot.slane %v836, 7
        %v888 = vsel %vm563, %v886, %v887
        %v889 = vrot.slane %v843, 7
        %v890 = vrot.slane %v889, 2
        %v891 = vrot.slane %v844, 7
        %v892 = vsel %vm563, %v890, %v891
        %v893 = vrot.slane %v851, 7
        %v894 = vrot.slane %v893, 2
        %v895 = vrot.slane %v852, 7
        %v896 = vsel %vm563, %v894, %v895
        %v897 = vrot.slane %v859, 7
        %v898 = vrot.slane %v897, 2
        %v899 = vrot.slane %v860, 7
        %v900 = vsel %vm563, %v898, %v899
        %v901 = vrot.slane %v867, 7
        %v902 = vrot.slane %v901, 2
        %v903 = vrot.slane %v868, 7
        %v904 = vsel %vm563, %v902, %v903
        %v905 = vrot.slane %v875, 7
        %v906 = vrot.slane %v905, 2
        %v907 = vrot.slane %v876, 7
        %v908 = vsel %vm563, %v906, %v907
        %s909 = scalar_lea.vmem %s252, 8
        %v910 = vld [vmem:[%s909] sm:$0x3]
        %v911 = vld [vmem:[%s909 + $0x4] sm:$0x3]
        %v912 = vld [vmem:[%s909 + $0x8] sm:$0x3]
        %v913 = vld [vmem:[%s909 + $0xc] sm:$0x3]
        %v914 = vld [vmem:[%s909 + $0x10] sm:$0x3]
        %v915 = vld [vmem:[%s909 + $0x14] sm:$0x3]
        %v916 = vld [vmem:[%s909 + $0x18] sm:$0x3]
        %v917 = vld [vmem:[%s909 + $0x1c] sm:$0x3]
        %v918 = vld [vmem:[%s909] sm:$0x7]
        %v919 = vld [vmem:[%s909 + $0x4] sm:$0x7]
        %v920 = vld [vmem:[%s909 + $0x8] sm:$0x7]
        %v921 = vld [vmem:[%s909 + $0xc] sm:$0x7]
        %v922 = vld [vmem:[%s909 + $0x10] sm:$0x7]
        %v923 = vld [vmem:[%s909 + $0x14] sm:$0x7]
        %v924 = vld [vmem:[%s909 + $0x18] sm:$0x7]
        %v925 = vld [vmem:[%s909 + $0x1c] sm:$0x7]
        %v935 = vunpack.c.l.s4 1983009808
        %v936 = vunpack.c.0.s8 %v935
        %v937 = vlaneseq
        %v938 = vshrl.u32 %v937, 7
        %v939 = vsub.s32 %v936, %v938
        %v940 = vrot.slane %v918, %v939
        %v941 = vcombine.high %v940, %v940
        %v943 = vunpack.c.l.s4 1983009808
        %v944 = vunpack.c.0.s8 %v943
        %v945 = vlaneseq
        %v946 = vshrl.u32 %v945, 7
        %v947 = vsub.s32 %v944, %v946
        %v948 = vrot.slane %v919, %v947
        %v949 = vcombine.high %v948, %v948
        %v951 = vunpack.c.l.s4 1983009808
        %v952 = vunpack.c.0.s8 %v951
        %v953 = vlaneseq
        %v954 = vshrl.u32 %v953, 7
        %v955 = vsub.s32 %v952, %v954
        %v956 = vrot.slane %v920, %v955
        %v957 = vcombine.high %v956, %v956
        %v959 = vunpack.c.l.s4 1983009808
        %v960 = vunpack.c.0.s8 %v959
        %v961 = vlaneseq
        %v962 = vshrl.u32 %v961, 7
        %v963 = vsub.s32 %v960, %v962
        %v964 = vrot.slane %v921, %v963
        %v965 = vcombine.high %v964, %v964
        %v967 = vunpack.c.l.s4 1983009808
        %v968 = vunpack.c.0.s8 %v967
        %v969 = vlaneseq
        %v970 = vshrl.u32 %v969, 7
        %v971 = vsub.s32 %v968, %v970
        %v972 = vrot.slane %v922, %v971
        %v973 = vcombine.high %v972, %v972
        %v975 = vunpack.c.l.s4 1983009808
        %v976 = vunpack.c.0.s8 %v975
        %v977 = vlaneseq
        %v978 = vshrl.u32 %v977, 7
        %v979 = vsub.s32 %v976, %v978
        %v980 = vrot.slane %v923, %v979
        %v981 = vcombine.high %v980, %v980
        %v983 = vunpack.c.l.s4 1983009808
        %v984 = vunpack.c.0.s8 %v983
        %v985 = vlaneseq
        %v986 = vshrl.u32 %v985, 7
        %v987 = vsub.s32 %v984, %v986
        %v988 = vrot.slane %v924, %v987
        %v989 = vcombine.high %v988, %v988
        %v991 = vunpack.c.l.s4 1983009808
        %v992 = vunpack.c.0.s8 %v991
        %v993 = vlaneseq
        %v994 = vshrl.u32 %v993, 7
        %v995 = vsub.s32 %v992, %v994
        %v996 = vrot.slane %v925, %v995
        %v997 = vcombine.high %v996, %v996
        %v999 = vshrl.u32 %v940, 16
        %v1001 = vrot.slane %v999, 6
        %v1002 = vshll.u32 %v940, 16
        %v1004 = vrot.slane %v1002, 7
        %v1005 = vor.u32 %v1001, %v1004
        %v1006 = vrot.slane %v1005, 2
        %v1008 = vshll.u32 %v941, 16
        %v1010 = vrot.slane %v1008, 7
        %v1011 = vsel %vm364, %v1006, %v1010
        %v1013 = vshrl.u32 %v948, 16
        %v1015 = vrot.slane %v1013, 6
        %v1016 = vshll.u32 %v948, 16
        %v1018 = vrot.slane %v1016, 7
        %v1019 = vor.u32 %v1015, %v1018
        %v1020 = vrot.slane %v1019, 2
        %v1022 = vshll.u32 %v949, 16
        %v1024 = vrot.slane %v1022, 7
        %v1025 = vsel %vm364, %v1020, %v1024
        %v1027 = vshrl.u32 %v956, 16
        %v1029 = vrot.slane %v1027, 6
        %v1030 = vshll.u32 %v956, 16
        %v1032 = vrot.slane %v1030, 7
        %v1033 = vor.u32 %v1029, %v1032
        %v1034 = vrot.slane %v1033, 2
        %v1036 = vshll.u32 %v957, 16
        %v1038 = vrot.slane %v1036, 7
        %v1039 = vsel %vm364, %v1034, %v1038
        %v1041 = vshrl.u32 %v964, 16
        %v1043 = vrot.slane %v1041, 6
        %v1044 = vshll.u32 %v964, 16
        %v1046 = vrot.slane %v1044, 7
        %v1047 = vor.u32 %v1043, %v1046
        %v1048 = vrot.slane %v1047, 2
        %v1050 = vshll.u32 %v965, 16
        %v1052 = vrot.slane %v1050, 7
        %v1053 = vsel %vm364, %v1048, %v1052
        %v1055 = vshrl.u32 %v972, 16
        %v1057 = vrot.slane %v1055, 6
        %v1058 = vshll.u32 %v972, 16
        %v1060 = vrot.slane %v1058, 7
        %v1061 = vor.u32 %v1057, %v1060
        %v1062 = vrot.slane %v1061, 2
        %v1064 = vshll.u32 %v973, 16
        %v1066 = vrot.slane %v1064, 7
        %v1067 = vsel %vm364, %v1062, %v1066
        %v1069 = vshrl.u32 %v980, 16
        %v1071 = vrot.slane %v1069, 6
        %v1072 = vshll.u32 %v980, 16
        %v1074 = vrot.slane %v1072, 7
        %v1075 = vor.u32 %v1071, %v1074
        %v1076 = vrot.slane %v1075, 2
        %v1078 = vshll.u32 %v981, 16
        %v1080 = vrot.slane %v1078, 7
        %v1081 = vsel %vm364, %v1076, %v1080
        %v1083 = vshrl.u32 %v988, 16
        %v1085 = vrot.slane %v1083, 6
        %v1086 = vshll.u32 %v988, 16
        %v1088 = vrot.slane %v1086, 7
        %v1089 = vor.u32 %v1085, %v1088
        %v1090 = vrot.slane %v1089, 2
        %v1092 = vshll.u32 %v989, 16
        %v1094 = vrot.slane %v1092, 7
        %v1095 = vsel %vm364, %v1090, %v1094
        %v1097 = vshrl.u32 %v996, 16
        %v1099 = vrot.slane %v1097, 6
        %v1100 = vshll.u32 %v996, 16
        %v1102 = vrot.slane %v1100, 7
        %v1103 = vor.u32 %v1099, %v1102
        %v1104 = vrot.slane %v1103, 2
        %v1106 = vshll.u32 %v997, 16
        %v1108 = vrot.slane %v1106, 7
        %v1109 = vsel %vm364, %v1104, %v1108
        %v1110 = vld [vmem:[%s909] sm:$0x6]
        %v1111 = vld [vmem:[%s909 + $0x4] sm:$0x6]
        %v1112 = vld [vmem:[%s909 + $0x8] sm:$0x6]
        %v1113 = vld [vmem:[%s909 + $0xc] sm:$0x6]
        %v1114 = vld [vmem:[%s909 + $0x10] sm:$0x6]
        %v1115 = vld [vmem:[%s909 + $0x14] sm:$0x6]
        %v1116 = vld [vmem:[%s909 + $0x18] sm:$0x6]
        %v1117 = vld [vmem:[%s909 + $0x1c] sm:$0x6]
        %v1127 = vunpack.c.l.s4 1983009808
        %v1128 = vunpack.c.0.s8 %v1127
        %v1129 = vlaneseq
        %v1130 = vshrl.u32 %v1129, 7
        %v1131 = vsub.s32 %v1128, %v1130
        %v1132 = vrot.slane %v1110, %v1131
        %v1133 = vcombine.high %v1132, %v1132
        %v1135 = vunpack.c.l.s4 1983009808
        %v1136 = vunpack.c.0.s8 %v1135
        %v1137 = vlaneseq
        %v1138 = vshrl.u32 %v1137, 7
        %v1139 = vsub.s32 %v1136, %v1138
        %v1140 = vrot.slane %v1111, %v1139
        %v1141 = vcombine.high %v1140, %v1140
        %v1143 = vunpack.c.l.s4 1983009808
        %v1144 = vunpack.c.0.s8 %v1143
        %v1145 = vlaneseq
        %v1146 = vshrl.u32 %v1145, 7
        %v1147 = vsub.s32 %v1144, %v1146
        %v1148 = vrot.slane %v1112, %v1147
        %v1149 = vcombine.high %v1148, %v1148
        %v1151 = vunpack.c.l.s4 1983009808
        %v1152 = vunpack.c.0.s8 %v1151
        %v1153 = vlaneseq
        %v1154 = vshrl.u32 %v1153, 7
        %v1155 = vsub.s32 %v1152, %v1154
        %v1156 = vrot.slane %v1113, %v1155
        %v1157 = vcombine.high %v1156, %v1156
        %v1159 = vunpack.c.l.s4 1983009808
        %v1160 = vunpack.c.0.s8 %v1159
        %v1161 = vlaneseq
        %v1162 = vshrl.u32 %v1161, 7
        %v1163 = vsub.s32 %v1160, %v1162
        %v1164 = vrot.slane %v1114, %v1163
        %v1165 = vcombine.high %v1164, %v1164
        %v1167 = vunpack.c.l.s4 1983009808
        %v1168 = vunpack.c.0.s8 %v1167
        %v1169 = vlaneseq
        %v1170 = vshrl.u32 %v1169, 7
        %v1171 = vsub.s32 %v1168, %v1170
        %v1172 = vrot.slane %v1115, %v1171
        %v1173 = vcombine.high %v1172, %v1172
        %v1175 = vunpack.c.l.s4 1983009808
        %v1176 = vunpack.c.0.s8 %v1175
        %v1177 = vlaneseq
        %v1178 = vshrl.u32 %v1177, 7
        %v1179 = vsub.s32 %v1176, %v1178
        %v1180 = vrot.slane %v1116, %v1179
        %v1181 = vcombine.high %v1180, %v1180
        %v1183 = vunpack.c.l.s4 1983009808
        %v1184 = vunpack.c.0.s8 %v1183
        %v1185 = vlaneseq
        %v1186 = vshrl.u32 %v1185, 7
        %v1187 = vsub.s32 %v1184, %v1186
        %v1188 = vrot.slane %v1117, %v1187
        %v1189 = vcombine.high %v1188, %v1188
        %v1190 = vrot.slane %v1132, 7
        %v1191 = vrot.slane %v1190, 2
        %v1192 = vrot.slane %v1133, 7
        %v1193 = vsel %vm563, %v1191, %v1192
        %v1194 = vrot.slane %v1140, 7
        %v1195 = vrot.slane %v1194, 2
        %v1196 = vrot.slane %v1141, 7
        %v1197 = vsel %vm563, %v1195, %v1196
        %v1198 = vrot.slane %v1148, 7
        %v1199 = vrot.slane %v1198, 2
        %v1200 = vrot.slane %v1149, 7
        %v1201 = vsel %vm563, %v1199, %v1200
        %v1202 = vrot.slane %v1156, 7
        %v1203 = vrot.slane %v1202, 2
        %v1204 = vrot.slane %v1157, 7
        %v1205 = vsel %vm563, %v1203, %v1204
        %v1206 = vrot.slane %v1164, 7
        %v1207 = vrot.slane %v1206, 2
        %v1208 = vrot.slane %v1165, 7
        %v1209 = vsel %vm563, %v1207, %v1208
        %v1210 = vrot.slane %v1172, 7
        %v1211 = vrot.slane %v1210, 2
        %v1212 = vrot.slane %v1173, 7
        %v1213 = vsel %vm563, %v1211, %v1212
        %v1214 = vrot.slane %v1180, 7
        %v1215 = vrot.slane %v1214, 2
        %v1216 = vrot.slane %v1181, 7
        %v1217 = vsel %vm563, %v1215, %v1216
        %v1218 = vrot.slane %v1188, 7
        %v1219 = vrot.slane %v1218, 2
        %v1220 = vrot.slane %v1189, 7
        %v1221 = vsel %vm563, %v1219, %v1220
        %v1230 = vcombine.low %v270, %v271
        %v1231 = vcombine.low %v272, %v273
        %v1233 = vunpack.c.l.s4 1983009808
        %v1234 = vunpack.c.0.s8 %v1233
        %v1235 = vlaneseq
        %v1236 = vshrl.u32 %v1235, 7
        %v1237 = vsub.s32 %v1234, %v1236
        %v1238 = vrot.slane %v1230, %v1237
        %v1240 = vunpack.c.l.s4 1983009808
        %v1241 = vunpack.c.0.s8 %v1240
        %v1242 = vlaneseq
        %v1243 = vshrl.u32 %v1242, 7
        %v1244 = vsub.s32 %v1241, %v1243
        %v1245 = vrot.slane %v1231, %v1244
        %v1246 = vcombine.low %v1238, %v1245
        %v1247 = vcombine.low %v274, %v275
        %v1248 = vcombine.low %v276, %v277
        %v1250 = vunpack.c.l.s4 1983009808
        %v1251 = vunpack.c.0.s8 %v1250
        %v1252 = vlaneseq
        %v1253 = vshrl.u32 %v1252, 7
        %v1254 = vsub.s32 %v1251, %v1253
        %v1255 = vrot.slane %v1247, %v1254
        %v1257 = vunpack.c.l.s4 1983009808
        %v1258 = vunpack.c.0.s8 %v1257
        %v1259 = vlaneseq
        %v1260 = vshrl.u32 %v1259, 7
        %v1261 = vsub.s32 %v1258, %v1260
        %v1262 = vrot.slane %v1248, %v1261
        %v1263 = vcombine.low %v1255, %v1262
        %v1266 = vcombine.low %v378, %v392
        %v1267 = vcombine.low %v406, %v420
        %v1269 = vunpack.c.l.s4 1983009808
        %v1270 = vunpack.c.0.s8 %v1269
        %v1271 = vlaneseq
        %v1272 = vshrl.u32 %v1271, 7
        %v1273 = vsub.s32 %v1270, %v1272
        %v1274 = vrot.slane %v1266, %v1273
        %v1276 = vunpack.c.l.s4 1983009808
        %v1277 = vunpack.c.0.s8 %v1276
        %v1278 = vlaneseq
        %v1279 = vshrl.u32 %v1278, 7
        %v1280 = vsub.s32 %v1277, %v1279
        %v1281 = vrot.slane %v1267, %v1280
        %v1282 = vcombine.low %v1274, %v1281
        %v1283 = vcombine.low %v434, %v448
        %v1284 = vcombine.low %v462, %v476
        %v1286 = vunpack.c.l.s4 1983009808
        %v1287 = vunpack.c.0.s8 %v1286
        %v1288 = vlaneseq
        %v1289 = vshrl.u32 %v1288, 7
        %v1290 = vsub.s32 %v1287, %v1289
        %v1291 = vrot.slane %v1283, %v1290
        %v1293 = vunpack.c.l.s4 1983009808
        %v1294 = vunpack.c.0.s8 %v1293
        %v1295 = vlaneseq
        %v1296 = vshrl.u32 %v1295, 7
        %v1297 = vsub.s32 %v1294, %v1296
        %v1298 = vrot.slane %v1284, %v1297
        %v1299 = vcombine.low %v1291, %v1298
        %v1302 = vcombine.low %v567, %v571
        %v1303 = vcombine.low %v575, %v579
        %v1305 = vunpack.c.l.s4 1983009808
        %v1306 = vunpack.c.0.s8 %v1305
        %v1307 = vlaneseq
        %v1308 = vshrl.u32 %v1307, 7
        %v1309 = vsub.s32 %v1306, %v1308
        %v1310 = vrot.slane %v1302, %v1309
        %v1312 = vunpack.c.l.s4 1983009808
        %v1313 = vunpack.c.0.s8 %v1312
        %v1314 = vlaneseq
        %v1315 = vshrl.u32 %v1314, 7
        %v1316 = vsub.s32 %v1313, %v1315
        %v1317 = vrot.slane %v1303, %v1316
        %v1318 = vcombine.low %v1310, %v1317
        %v1319 = vcombine.low %v583, %v587
        %v1320 = vcombine.low %v591, %v595
        %v1322 = vunpack.c.l.s4 1983009808
        %v1323 = vunpack.c.0.s8 %v1322
        %v1324 = vlaneseq
        %v1325 = vshrl.u32 %v1324, 7
        %v1326 = vsub.s32 %v1323, %v1325
        %v1327 = vrot.slane %v1319, %v1326
        %v1329 = vunpack.c.l.s4 1983009808
        %v1330 = vunpack.c.0.s8 %v1329
        %v1331 = vlaneseq
        %v1332 = vshrl.u32 %v1331, 7
        %v1333 = vsub.s32 %v1330, %v1332
        %v1334 = vrot.slane %v1320, %v1333
        %v1335 = vcombine.low %v1327, %v1334
        %v1346 = vcombine.low %v597, %v598
        %v1347 = vcombine.low %v599, %v600
        %v1349 = vunpack.c.l.s4 1983009808
        %v1350 = vunpack.c.0.s8 %v1349
        %v1351 = vlaneseq
        %v1352 = vshrl.u32 %v1351, 7
        %v1353 = vsub.s32 %v1350, %v1352
        %v1354 = vrot.slane %v1346, %v1353
        %v1356 = vunpack.c.l.s4 1983009808
        %v1357 = vunpack.c.0.s8 %v1356
        %v1358 = vlaneseq
        %v1359 = vshrl.u32 %v1358, 7
        %v1360 = vsub.s32 %v1357, %v1359
        %v1361 = vrot.slane %v1347, %v1360
        %v1362 = vcombine.low %v1354, %v1361
        %v1363 = vcombine.low %v601, %v602
        %v1364 = vcombine.low %v603, %v604
        %v1366 = vunpack.c.l.s4 1983009808
        %v1367 = vunpack.c.0.s8 %v1366
        %v1368 = vlaneseq
        %v1369 = vshrl.u32 %v1368, 7
        %v1370 = vsub.s32 %v1367, %v1369
        %v1371 = vrot.slane %v1363, %v1370
        %v1373 = vunpack.c.l.s4 1983009808
        %v1374 = vunpack.c.0.s8 %v1373
        %v1375 = vlaneseq
        %v1376 = vshrl.u32 %v1375, 7
        %v1377 = vsub.s32 %v1374, %v1376
        %v1378 = vrot.slane %v1364, %v1377
        %v1379 = vcombine.low %v1371, %v1378
        %v1382 = vcombine.low %v698, %v712
        %v1383 = vcombine.low %v726, %v740
        %v1385 = vunpack.c.l.s4 1983009808
        %v1386 = vunpack.c.0.s8 %v1385
        %v1387 = vlaneseq
        %v1388 = vshrl.u32 %v1387, 7
        %v1389 = vsub.s32 %v1386, %v1388
        %v1390 = vrot.slane %v1382, %v1389
        %v1392 = vunpack.c.l.s4 1983009808
        %v1393 = vunpack.c.0.s8 %v1392
        %v1394 = vlaneseq
        %v1395 = vshrl.u32 %v1394, 7
        %v1396 = vsub.s32 %v1393, %v1395
        %v1397 = vrot.slane %v1383, %v1396
        %v1398 = vcombine.low %v1390, %v1397
        %v1399 = vcombine.low %v754, %v768
        %v1400 = vcombine.low %v782, %v796
        %v1402 = vunpack.c.l.s4 1983009808
        %v1403 = vunpack.c.0.s8 %v1402
        %v1404 = vlaneseq
        %v1405 = vshrl.u32 %v1404, 7
        %v1406 = vsub.s32 %v1403, %v1405
        %v1407 = vrot.slane %v1399, %v1406
        %v1409 = vunpack.c.l.s4 1983009808
        %v1410 = vunpack.c.0.s8 %v1409
        %v1411 = vlaneseq
        %v1412 = vshrl.u32 %v1411, 7
        %v1413 = vsub.s32 %v1410, %v1412
        %v1414 = vrot.slane %v1400, %v1413
        %v1415 = vcombine.low %v1407, %v1414
        %v1418 = vcombine.low %v880, %v884
        %v1419 = vcombine.low %v888, %v892
        %v1421 = vunpack.c.l.s4 1983009808
        %v1422 = vunpack.c.0.s8 %v1421
        %v1423 = vlaneseq
        %v1424 = vshrl.u32 %v1423, 7
        %v1425 = vsub.s32 %v1422, %v1424
        %v1426 = vrot.slane %v1418, %v1425
        %v1428 = vunpack.c.l.s4 1983009808
        %v1429 = vunpack.c.0.s8 %v1428
        %v1430 = vlaneseq
        %v1431 = vshrl.u32 %v1430, 7
        %v1432 = vsub.s32 %v1429, %v1431
        %v1433 = vrot.slane %v1419, %v1432
        %v1434 = vcombine.low %v1426, %v1433
        %v1435 = vcombine.low %v896, %v900
        %v1436 = vcombine.low %v904, %v908
        %v1438 = vunpack.c.l.s4 1983009808
        %v1439 = vunpack.c.0.s8 %v1438
        %v1440 = vlaneseq
        %v1441 = vshrl.u32 %v1440, 7
        %v1442 = vsub.s32 %v1439, %v1441
        %v1443 = vrot.slane %v1435, %v1442
        %v1445 = vunpack.c.l.s4 1983009808
        %v1446 = vunpack.c.0.s8 %v1445
        %v1447 = vlaneseq
        %v1448 = vshrl.u32 %v1447, 7
        %v1449 = vsub.s32 %v1446, %v1448
        %v1450 = vrot.slane %v1436, %v1449
        %v1451 = vcombine.low %v1443, %v1450
        %v1462 = vcombine.low %v910, %v911
        %v1463 = vcombine.low %v912, %v913
        %v1465 = vunpack.c.l.s4 1983009808
        %v1466 = vunpack.c.0.s8 %v1465
        %v1467 = vlaneseq
        %v1468 = vshrl.u32 %v1467, 7
        %v1469 = vsub.s32 %v1466, %v1468
        %v1470 = vrot.slane %v1462, %v1469
        %v1472 = vunpack.c.l.s4 1983009808
        %v1473 = vunpack.c.0.s8 %v1472
        %v1474 = vlaneseq
        %v1475 = vshrl.u32 %v1474, 7
        %v1476 = vsub.s32 %v1473, %v1475
        %v1477 = vrot.slane %v1463, %v1476
        %v1478 = vcombine.low %v1470, %v1477
        %v1479 = vcombine.low %v914, %v915
        %v1480 = vcombine.low %v916, %v917
        %v1482 = vunpack.c.l.s4 1983009808
        %v1483 = vunpack.c.0.s8 %v1482
        %v1484 = vlaneseq
        %v1485 = vshrl.u32 %v1484, 7
        %v1486 = vsub.s32 %v1483, %v1485
        %v1487 = vrot.slane %v1479, %v1486
        %v1489 = vunpack.c.l.s4 1983009808
        %v1490 = vunpack.c.0.s8 %v1489
        %v1491 = vlaneseq
        %v1492 = vshrl.u32 %v1491, 7
        %v1493 = vsub.s32 %v1490, %v1492
        %v1494 = vrot.slane %v1480, %v1493
        %v1495 = vcombine.low %v1487, %v1494
        %v1498 = vcombine.low %v1011, %v1025
        %v1499 = vcombine.low %v1039, %v1053
        %v1501 = vunpack.c.l.s4 1983009808
        %v1502 = vunpack.c.0.s8 %v1501
        %v1503 = vlaneseq
        %v1504 = vshrl.u32 %v1503, 7
        %v1505 = vsub.s32 %v1502, %v1504
        %v1506 = vrot.slane %v1498, %v1505
        %v1508 = vunpack.c.l.s4 1983009808
        %v1509 = vunpack.c.0.s8 %v1508
        %v1510 = vlaneseq
        %v1511 = vshrl.u32 %v1510, 7
        %v1512 = vsub.s32 %v1509, %v1511
        %v1513 = vrot.slane %v1499, %v1512
        %v1514 = vcombine.low %v1506, %v1513
        %v1515 = vcombine.low %v1067, %v1081
        %v1516 = vcombine.low %v1095, %v1109
        %v1518 = vunpack.c.l.s4 1983009808
        %v1519 = vunpack.c.0.s8 %v1518
        %v1520 = vlaneseq
        %v1521 = vshrl.u32 %v1520, 7
        %v1522 = vsub.s32 %v1519, %v1521
        %v1523 = vrot.slane %v1515, %v1522
        %v1525 = vunpack.c.l.s4 1983009808
        %v1526 = vunpack.c.0.s8 %v1525
        %v1527 = vlaneseq
        %v1528 = vshrl.u32 %v1527, 7
        %v1529 = vsub.s32 %v1526, %v1528
        %v1530 = vrot.slane %v1516, %v1529
        %v1531 = vcombine.low %v1523, %v1530
        %v1534 = vcombine.low %v1193, %v1197
        %v1535 = vcombine.low %v1201, %v1205
        %v1537 = vunpack.c.l.s4 1983009808
        %v1538 = vunpack.c.0.s8 %v1537
        %v1539 = vlaneseq
        %v1540 = vshrl.u32 %v1539, 7
        %v1541 = vsub.s32 %v1538, %v1540
        %v1542 = vrot.slane %v1534, %v1541
        %v1544 = vunpack.c.l.s4 1983009808
        %v1545 = vunpack.c.0.s8 %v1544
        %v1546 = vlaneseq
        %v1547 = vshrl.u32 %v1546, 7
        %v1548 = vsub.s32 %v1545, %v1547
        %v1549 = vrot.slane %v1535, %v1548
        %v1550 = vcombine.low %v1542, %v1549
        %v1551 = vcombine.low %v1209, %v1213
        %v1552 = vcombine.low %v1217, %v1221
        %v1554 = vunpack.c.l.s4 1983009808
        %v1555 = vunpack.c.0.s8 %v1554
        %v1556 = vlaneseq
        %v1557 = vshrl.u32 %v1556, 7
        %v1558 = vsub.s32 %v1555, %v1557
        %v1559 = vrot.slane %v1551, %v1558
        %v1561 = vunpack.c.l.s4 1983009808
        %v1562 = vunpack.c.0.s8 %v1561
        %v1563 = vlaneseq
        %v1564 = vshrl.u32 %v1563, 7
        %v1565 = vsub.s32 %v1562, %v1564
        %v1566 = vrot.slane %v1552, %v1565
        %v1567 = vcombine.low %v1559, %v1566
        %v1570 = vld [vmem:[#allocation3] sm:$0xf]
        %v1571 = vld [vmem:[#allocation3 + $0x4] sm:$0xf]
        %v1572 = vld [vmem:[#allocation3 + $0x8] sm:$0xf]
        %v1573 = vld [vmem:[#allocation3 + $0xc] sm:$0xf]
        %v1574 = vld [vmem:[#allocation3 + $0x10] sm:$0xf]
        %v1575 = vld [vmem:[#allocation3 + $0x14] sm:$0xf]
        %v1576 = vld [vmem:[#allocation3 + $0x18] sm:$0xf]
        %v1577 = vld [vmem:[#allocation3 + $0x1c] sm:$0xf]
        %v1578 = vld [vmem:[#allocation3 + $0x20] sm:$0xf]
        %v1579 = vld [vmem:[#allocation3 + $0x24] sm:$0xf]
        %v1580 = vld [vmem:[#allocation3 + $0x28] sm:$0xf]
        %v1581 = vld [vmem:[#allocation3 + $0x2c] sm:$0xf]
        %v1582 = vld [vmem:[#allocation3 + $0x30] sm:$0xf]
        %v1583 = vld [vmem:[#allocation3 + $0x34] sm:$0xf]
        %v1584 = vld [vmem:[#allocation3 + $0x38] sm:$0xf]
        %v1585 = vld [vmem:[#allocation3 + $0x3c] sm:$0xf]
        %v1586 = vld [vmem:[#allocation3 + $0x40] sm:$0xf]
        %v1587 = vld [vmem:[#allocation3 + $0x44] sm:$0xf]
        %v1588 = vld [vmem:[#allocation3 + $0x48] sm:$0xf]
        %v1589 = vld [vmem:[#allocation3 + $0x4c] sm:$0xf]
        %v1590 = vld [vmem:[#allocation3 + $0x50] sm:$0xf]
        %v1591 = vld [vmem:[#allocation3 + $0x54] sm:$0xf]
        %v1592 = vld [vmem:[#allocation3 + $0x58] sm:$0xf]
        %v1593 = vld [vmem:[#allocation3 + $0x5c] sm:$0xf]
        %v1594 = vld [vmem:[#allocation3 + $0x60] sm:$0xf]
        %v1595 = vld [vmem:[#allocation3 + $0x64] sm:$0xf]
        %v1596 = vld [vmem:[#allocation3 + $0x68] sm:$0xf]
        %v1597 = vld [vmem:[#allocation3 + $0x6c] sm:$0xf]
        %v1598 = vld [vmem:[#allocation3 + $0x70] sm:$0xf]
        %v1599 = vld [vmem:[#allocation3 + $0x74] sm:$0xf]
        %v1600 = vld [vmem:[#allocation3 + $0x78] sm:$0xf]
        %v1601 = vld [vmem:[#allocation3 + $0x7c] sm:$0xf]
        %v1602 = vld [vmem:[#allocation3 + $0x80] sm:$0xf]
        %v1603 = vld [vmem:[#allocation3 + $0x84] sm:$0xf]
        %v1604 = vld [vmem:[#allocation3 + $0x88] sm:$0xf]
        %v1605 = vld [vmem:[#allocation3 + $0x8c] sm:$0xf]
        %v1606 = vld [vmem:[#allocation3 + $0x90] sm:$0xf]
        %v1607 = vld [vmem:[#allocation3 + $0x94] sm:$0xf]
        %v1608 = vld [vmem:[#allocation3 + $0x98] sm:$0xf]
        %v1609 = vld [vmem:[#allocation3 + $0x9c] sm:$0xf]
        %v1610 = vld [vmem:[#allocation3 + $0xa0] sm:$0xf]
        %v1611 = vld [vmem:[#allocation3 + $0xa4] sm:$0xf]
        %v1612 = vld [vmem:[#allocation3 + $0xa8] sm:$0xf]
        %v1613 = vld [vmem:[#allocation3 + $0xac] sm:$0xf]
        %v1614 = vld [vmem:[#allocation3 + $0xb0] sm:$0xf]
        %v1615 = vld [vmem:[#allocation3 + $0xb4] sm:$0xf]
        %v1616 = vld [vmem:[#allocation3 + $0xb8] sm:$0xf]
        %v1617 = vld [vmem:[#allocation3 + $0xbc] sm:$0xf]
        %v1618 = vld [vmem:[#allocation3 + $0xc0] sm:$0xf]
        %v1619 = vld [vmem:[#allocation3 + $0xc4] sm:$0xf]
        %v1620 = vld [vmem:[#allocation3 + $0xc8] sm:$0xf]
        %v1621 = vld [vmem:[#allocation3 + $0xcc] sm:$0xf]
        %v1622 = vld [vmem:[#allocation3 + $0xd0] sm:$0xf]
        %v1623 = vld [vmem:[#allocation3 + $0xd4] sm:$0xf]
        %v1624 = vld [vmem:[#allocation3 + $0xd8] sm:$0xf]
        %v1625 = vld [vmem:[#allocation3 + $0xdc] sm:$0xf]
        %v1626 = vld [vmem:[#allocation3 + $0xe0] sm:$0xf]
        %v1627 = vld [vmem:[#allocation3 + $0xe4] sm:$0xf]
        %v1628 = vld [vmem:[#allocation3 + $0xe8] sm:$0xf]
        %v1629 = vld [vmem:[#allocation3 + $0xec] sm:$0xf]
        %v1630 = vld [vmem:[#allocation3 + $0xf0] sm:$0xf]
        %v1631 = vld [vmem:[#allocation3 + $0xf4] sm:$0xf]
        %v1632 = vld [vmem:[#allocation3 + $0xf8] sm:$0xf]
        %v1633 = vld [vmem:[#allocation3 + $0xfc] sm:$0xf]
        %v1634 = vld [vmem:[#allocation3 + $0x100] sm:$0xf]
        %v1635 = vld [vmem:[#allocation3 + $0x104] sm:$0xf]
        %v1636 = vld [vmem:[#allocation3 + $0x108] sm:$0xf]
        %v1637 = vld [vmem:[#allocation3 + $0x10c] sm:$0xf]
        %v1638 = vld [vmem:[#allocation3 + $0x110] sm:$0xf]
        %v1639 = vld [vmem:[#allocation3 + $0x114] sm:$0xf]
        %v1640 = vld [vmem:[#allocation3 + $0x118] sm:$0xf]
        %v1641 = vld [vmem:[#allocation3 + $0x11c] sm:$0xf]
        %v1642 = vld [vmem:[#allocation3 + $0x120] sm:$0xf]
        %v1643 = vld [vmem:[#allocation3 + $0x124] sm:$0xf]
        %v1644 = vld [vmem:[#allocation3 + $0x128] sm:$0xf]
        %v1645 = vld [vmem:[#allocation3 + $0x12c] sm:$0xf]
        %v1646 = vld [vmem:[#allocation3 + $0x130] sm:$0xf]
        %v1647 = vld [vmem:[#allocation3 + $0x134] sm:$0xf]
        %v1648 = vld [vmem:[#allocation3 + $0x138] sm:$0xf]
        %v1649 = vld [vmem:[#allocation3 + $0x13c] sm:$0xf]
        %v1650 = vld [vmem:[#allocation3 + $0x140] sm:$0xf]
        %v1651 = vld [vmem:[#allocation3 + $0x144] sm:$0xf]
        %v1652 = vld [vmem:[#allocation3 + $0x148] sm:$0xf]
        %v1653 = vld [vmem:[#allocation3 + $0x14c] sm:$0xf]
        %v1654 = vld [vmem:[#allocation3 + $0x150] sm:$0xf]
        %v1655 = vld [vmem:[#allocation3 + $0x154] sm:$0xf]
        %v1656 = vld [vmem:[#allocation3 + $0x158] sm:$0xf]
        %v1657 = vld [vmem:[#allocation3 + $0x15c] sm:$0xf]
        %v1658 = vld [vmem:[#allocation3 + $0x160] sm:$0xf]
        %v1659 = vld [vmem:[#allocation3 + $0x164] sm:$0xf]
        %v1660 = vld [vmem:[#allocation3 + $0x168] sm:$0xf]
        %v1661 = vld [vmem:[#allocation3 + $0x16c] sm:$0xf]
        %v1662 = vld [vmem:[#allocation3 + $0x170] sm:$0xf]
        %v1663 = vld [vmem:[#allocation3 + $0x174] sm:$0xf]
        %v1664 = vld [vmem:[#allocation3 + $0x178] sm:$0xf]
        %v1665 = vld [vmem:[#allocation3 + $0x17c] sm:$0xf]
        %v1666 = vld [vmem:[#allocation3 + $0x180] sm:$0xf]
        %v1667 = vld [vmem:[#allocation3 + $0x184] sm:$0xf]
        %v1668 = vld [vmem:[#allocation3 + $0x188] sm:$0xf]
        %v1669 = vld [vmem:[#allocation3 + $0x18c] sm:$0xf]
        %v1670 = vld [vmem:[#allocation3 + $0x190] sm:$0xf]
        %v1671 = vld [vmem:[#allocation3 + $0x194] sm:$0xf]
        %v1672 = vld [vmem:[#allocation3 + $0x198] sm:$0xf]
        %v1673 = vld [vmem:[#allocation3 + $0x19c] sm:$0xf]
        %v1674 = vld [vmem:[#allocation3 + $0x1a0] sm:$0xf]
        %v1675 = vld [vmem:[#allocation3 + $0x1a4] sm:$0xf]
        %v1676 = vld [vmem:[#allocation3 + $0x1a8] sm:$0xf]
        %v1677 = vld [vmem:[#allocation3 + $0x1ac] sm:$0xf]
        %v1678 = vld [vmem:[#allocation3 + $0x1b0] sm:$0xf]
        %v1679 = vld [vmem:[#allocation3 + $0x1b4] sm:$0xf]
        %v1680 = vld [vmem:[#allocation3 + $0x1b8] sm:$0xf]
        %v1681 = vld [vmem:[#allocation3 + $0x1bc] sm:$0xf]
        %v1682 = vld [vmem:[#allocation3 + $0x1c0] sm:$0xf]
        %v1683 = vld [vmem:[#allocation3 + $0x1c4] sm:$0xf]
        %v1684 = vld [vmem:[#allocation3 + $0x1c8] sm:$0xf]
        %v1685 = vld [vmem:[#allocation3 + $0x1cc] sm:$0xf]
        %v1686 = vld [vmem:[#allocation3 + $0x1d0] sm:$0xf]
        %v1687 = vld [vmem:[#allocation3 + $0x1d4] sm:$0xf]
        %v1688 = vld [vmem:[#allocation3 + $0x1d8] sm:$0xf]
        %v1689 = vld [vmem:[#allocation3 + $0x1dc] sm:$0xf]
        %v1690 = vld [vmem:[#allocation3 + $0x1e0] sm:$0xf]
        %v1691 = vld [vmem:[#allocation3 + $0x1e4] sm:$0xf]
        %v1692 = vld [vmem:[#allocation3 + $0x1e8] sm:$0xf]
        %v1693 = vld [vmem:[#allocation3 + $0x1ec] sm:$0xf]
        %v1694 = vld [vmem:[#allocation3 + $0x1f0] sm:$0xf]
        %v1695 = vld [vmem:[#allocation3 + $0x1f4] sm:$0xf]
        %v1696 = vld [vmem:[#allocation3 + $0x1f8] sm:$0xf]
        %v1697 = vld [vmem:[#allocation3 + $0x1fc] sm:$0xf]
        %v1698 = vld [vmem:[#allocation3 + $0x200] sm:$0xf]
        %v1699 = vld [vmem:[#allocation3 + $0x204] sm:$0xf]
        %v1700 = vld [vmem:[#allocation3 + $0x208] sm:$0xf]
        %v1701 = vld [vmem:[#allocation3 + $0x20c] sm:$0xf]
        %v1702 = vld [vmem:[#allocation3 + $0x210] sm:$0xf]
        %v1703 = vld [vmem:[#allocation3 + $0x214] sm:$0xf]
        %v1704 = vld [vmem:[#allocation3 + $0x218] sm:$0xf]
        %v1705 = vld [vmem:[#allocation3 + $0x21c] sm:$0xf]
        %v1706 = vld [vmem:[#allocation3 + $0x220] sm:$0xf]
        %v1707 = vld [vmem:[#allocation3 + $0x224] sm:$0xf]
        %v1708 = vld [vmem:[#allocation3 + $0x228] sm:$0xf]
        %v1709 = vld [vmem:[#allocation3 + $0x22c] sm:$0xf]
        %v1710 = vld [vmem:[#allocation3 + $0x230] sm:$0xf]
        %v1711 = vld [vmem:[#allocation3 + $0x234] sm:$0xf]
        %v1712 = vld [vmem:[#allocation3 + $0x238] sm:$0xf]
        %v1713 = vld [vmem:[#allocation3 + $0x23c] sm:$0xf]
        %v1714 = vld [vmem:[%s4] sm:$0x1]
        %v1715 = vlaneseq
        %v1716 = vshrl.u32 %v1715, 7
        %v1717 = vsub.s32 0, %v1716
        %v1718 = vrot.slane %v1714, %v1717
        %v1863 = vunpack.c.l.b16 %v1570
        %v1864 = vunpack.c.l.b16 %v1571
        %v1865 = vunpack.c.l.b16 %v1572
        %v1866 = vunpack.c.l.b16 %v1573
        %v1867 = vunpack.c.l.b16 %v1574
        %v1868 = vunpack.c.l.b16 %v1575
        %v1869 = vunpack.c.l.b16 %v1576
        %v1870 = vunpack.c.l.b16 %v1577
        %v1871 = vunpack.c.l.b16 %v1578
        %v1872 = vunpack.c.l.b16 %v1579
        %v1873 = vunpack.c.l.b16 %v1580
        %v1874 = vunpack.c.l.b16 %v1581
        %v1875 = vunpack.c.l.b16 %v1582
        %v1876 = vunpack.c.l.b16 %v1583
        %v1877 = vunpack.c.l.b16 %v1584
        %v1878 = vunpack.c.l.b16 %v1585
        %v1879 = vunpack.c.l.b16 %v1586
        %v1880 = vunpack.c.l.b16 %v1587
        %v1881 = vunpack.c.l.b16 %v1588
        %v1882 = vunpack.c.l.b16 %v1589
        %v1883 = vunpack.c.l.b16 %v1590
        %v1884 = vunpack.c.l.b16 %v1591
        %v1885 = vunpack.c.l.b16 %v1592
        %v1886 = vunpack.c.l.b16 %v1593
        %v1887 = vunpack.c.l.b16 %v1594
        %v1888 = vunpack.c.l.b16 %v1595
        %v1889 = vunpack.c.l.b16 %v1596
        %v1890 = vunpack.c.l.b16 %v1597
        %v1891 = vunpack.c.l.b16 %v1598
        %v1892 = vunpack.c.l.b16 %v1599
        %v1893 = vunpack.c.l.b16 %v1600
        %v1894 = vunpack.c.l.b16 %v1601
        %v1895 = vunpack.c.l.b16 %v1602
        %v1896 = vunpack.c.l.b16 %v1603
        %v1897 = vunpack.c.l.b16 %v1604
        %v1898 = vunpack.c.l.b16 %v1605
        %v1899 = vunpack.c.l.b16 %v1606
        %v1900 = vunpack.c.l.b16 %v1607
        %v1901 = vunpack.c.l.b16 %v1608
        %v1902 = vunpack.c.l.b16 %v1609
        %v1903 = vunpack.c.l.b16 %v1610
        %v1904 = vunpack.c.l.b16 %v1611
        %v1905 = vunpack.c.l.b16 %v1612
        %v1906 = vunpack.c.l.b16 %v1613
        %v1907 = vunpack.c.l.b16 %v1614
        %v1908 = vunpack.c.l.b16 %v1615
        %v1909 = vunpack.c.l.b16 %v1616
        %v1910 = vunpack.c.l.b16 %v1617
        %v1911 = vunpack.c.l.b16 %v1618
        %v1912 = vunpack.c.l.b16 %v1619
        %v1913 = vunpack.c.l.b16 %v1620
        %v1914 = vunpack.c.l.b16 %v1621
        %v1915 = vunpack.c.l.b16 %v1622
        %v1916 = vunpack.c.l.b16 %v1623
        %v1917 = vunpack.c.l.b16 %v1624
        %v1918 = vunpack.c.l.b16 %v1625
        %v1919 = vunpack.c.l.b16 %v1626
        %v1920 = vunpack.c.l.b16 %v1627
        %v1921 = vunpack.c.l.b16 %v1628
        %v1922 = vunpack.c.l.b16 %v1629
        %v1923 = vunpack.c.l.b16 %v1630
        %v1924 = vunpack.c.l.b16 %v1631
        %v1925 = vunpack.c.l.b16 %v1632
        %v1926 = vunpack.c.l.b16 %v1633
        %v1927 = vunpack.c.l.b16 %v1634
        %v1928 = vunpack.c.l.b16 %v1635
        %v1929 = vunpack.c.l.b16 %v1636
        %v1930 = vunpack.c.l.b16 %v1637
        %v1931 = vunpack.c.l.b16 %v1638
        %v1932 = vunpack.c.l.b16 %v1639
        %v1933 = vunpack.c.l.b16 %v1640
        %v1934 = vunpack.c.l.b16 %v1641
        %v1935 = vunpack.c.l.b16 %v1642
        %v1936 = vunpack.c.l.b16 %v1643
        %v1937 = vunpack.c.l.b16 %v1644
        %v1938 = vunpack.c.l.b16 %v1645
        %v1939 = vunpack.c.l.b16 %v1646
        %v1940 = vunpack.c.l.b16 %v1647
        %v1941 = vunpack.c.l.b16 %v1648
        %v1942 = vunpack.c.l.b16 %v1649
        %v1943 = vunpack.c.l.b16 %v1650
        %v1944 = vunpack.c.l.b16 %v1651
        %v1945 = vunpack.c.l.b16 %v1652
        %v1946 = vunpack.c.l.b16 %v1653
        %v1947 = vunpack.c.l.b16 %v1654
        %v1948 = vunpack.c.l.b16 %v1655
        %v1949 = vunpack.c.l.b16 %v1656
        %v1950 = vunpack.c.l.b16 %v1657
        %v1951 = vunpack.c.l.b16 %v1658
        %v1952 = vunpack.c.l.b16 %v1659
        %v1953 = vunpack.c.l.b16 %v1660
        %v1954 = vunpack.c.l.b16 %v1661
        %v1955 = vunpack.c.l.b16 %v1662
        %v1956 = vunpack.c.l.b16 %v1663
        %v1957 = vunpack.c.l.b16 %v1664
        %v1958 = vunpack.c.l.b16 %v1665
        %v1959 = vunpack.c.l.b16 %v1666
        %v1960 = vunpack.c.l.b16 %v1667
        %v1961 = vunpack.c.l.b16 %v1668
        %v1962 = vunpack.c.l.b16 %v1669
        %v1963 = vunpack.c.l.b16 %v1670
        %v1964 = vunpack.c.l.b16 %v1671
        %v1965 = vunpack.c.l.b16 %v1672
        %v1966 = vunpack.c.l.b16 %v1673
        %v1967 = vunpack.c.l.b16 %v1674
        %v1968 = vunpack.c.l.b16 %v1675
        %v1969 = vunpack.c.l.b16 %v1676
        %v1970 = vunpack.c.l.b16 %v1677
        %v1971 = vunpack.c.l.b16 %v1678
        %v1972 = vunpack.c.l.b16 %v1679
        %v1973 = vunpack.c.l.b16 %v1680
        %v1974 = vunpack.c.l.b16 %v1681
        %v1975 = vunpack.c.l.b16 %v1682
        %v1976 = vunpack.c.l.b16 %v1683
        %v1977 = vunpack.c.l.b16 %v1684
        %v1978 = vunpack.c.l.b16 %v1685
        %v1979 = vunpack.c.l.b16 %v1686
        %v1980 = vunpack.c.l.b16 %v1687
        %v1981 = vunpack.c.l.b16 %v1688
        %v1982 = vunpack.c.l.b16 %v1689
        %v1983 = vunpack.c.l.b16 %v1690
        %v1984 = vunpack.c.l.b16 %v1691
        %v1985 = vunpack.c.l.b16 %v1692
        %v1986 = vunpack.c.l.b16 %v1693
        %v1987 = vunpack.c.l.b16 %v1694
        %v1988 = vunpack.c.l.b16 %v1695
        %v1989 = vunpack.c.l.b16 %v1696
        %v1990 = vunpack.c.l.b16 %v1697
        %v1991 = vunpack.c.l.b16 %v1698
        %v1992 = vunpack.c.l.b16 %v1699
        %v1993 = vunpack.c.l.b16 %v1700
        %v1994 = vunpack.c.l.b16 %v1701
        %v1995 = vunpack.c.l.b16 %v1702
        %v1996 = vunpack.c.l.b16 %v1703
        %v1997 = vunpack.c.l.b16 %v1704
        %v1998 = vunpack.c.l.b16 %v1705
        %v1999 = vunpack.c.l.b16 %v1706
        %v2000 = vunpack.c.l.b16 %v1707
        %v2001 = vunpack.c.l.b16 %v1708
        %v2002 = vunpack.c.l.b16 %v1709
        %v2003 = vunpack.c.l.b16 %v1710
        %v2004 = vunpack.c.l.b16 %v1711
        %v2005 = vunpack.c.l.b16 %v1712
        %v2006 = vunpack.c.l.b16 %v1713
        %v2007 = vpack.c.b16 %v1864, %v1863
        %v2008 = vpack.c.b16 %v1866, %v1865
        %v2009 = vpack.c.b16 %v1868, %v1867
        %v2010 = vpack.c.b16 %v1870, %v1869
        %v2011 = vpack.c.b16 %v1872, %v1871
        %v2012 = vpack.c.b16 %v1874, %v1873
        %v2013 = vpack.c.b16 %v1876, %v1875
        %v2014 = vpack.c.b16 %v1878, %v1877
        %v2015 = vpack.c.b16 %v1880, %v1879
        %v2016 = vpack.c.b16 %v1882, %v1881
        %v2017 = vpack.c.b16 %v1884, %v1883
        %v2018 = vpack.c.b16 %v1886, %v1885
        %v2019 = vpack.c.b16 %v1888, %v1887
        %v2020 = vpack.c.b16 %v1890, %v1889
        %v2021 = vpack.c.b16 %v1892, %v1891
        %v2022 = vpack.c.b16 %v1894, %v1893
        %v2023 = vpack.c.b16 %v1896, %v1895
        %v2024 = vpack.c.b16 %v1898, %v1897
        %v2025 = vpack.c.b16 %v1900, %v1899
        %v2026 = vpack.c.b16 %v1902, %v1901
        %v2027 = vpack.c.b16 %v1904, %v1903
        %v2028 = vpack.c.b16 %v1906, %v1905
        %v2029 = vpack.c.b16 %v1908, %v1907
        %v2030 = vpack.c.b16 %v1910, %v1909
        %v2031 = vpack.c.b16 %v1912, %v1911
        %v2032 = vpack.c.b16 %v1914, %v1913
        %v2033 = vpack.c.b16 %v1916, %v1915
        %v2034 = vpack.c.b16 %v1918, %v1917
        %v2035 = vpack.c.b16 %v1920, %v1919
        %v2036 = vpack.c.b16 %v1922, %v1921
        %v2037 = vpack.c.b16 %v1924, %v1923
        %v2038 = vpack.c.b16 %v1926, %v1925
        %v2039 = vpack.c.b16 %v1928, %v1927
        %v2040 = vpack.c.b16 %v1930, %v1929
        %v2041 = vpack.c.b16 %v1932, %v1931
        %v2042 = vpack.c.b16 %v1934, %v1933
        %v2043 = vpack.c.b16 %v1936, %v1935
        %v2044 = vpack.c.b16 %v1938, %v1937
        %v2045 = vpack.c.b16 %v1940, %v1939
        %v2046 = vpack.c.b16 %v1942, %v1941
        %v2047 = vpack.c.b16 %v1944, %v1943
        %v2048 = vpack.c.b16 %v1946, %v1945
        %v2049 = vpack.c.b16 %v1948, %v1947
        %v2050 = vpack.c.b16 %v1950, %v1949
        %v2051 = vpack.c.b16 %v1952, %v1951
        %v2052 = vpack.c.b16 %v1954, %v1953
        %v2053 = vpack.c.b16 %v1956, %v1955
        %v2054 = vpack.c.b16 %v1958, %v1957
        %v2055 = vpack.c.b16 %v1960, %v1959
        %v2056 = vpack.c.b16 %v1962, %v1961
        %v2057 = vpack.c.b16 %v1964, %v1963
        %v2058 = vpack.c.b16 %v1966, %v1965
        %v2059 = vpack.c.b16 %v1968, %v1967
        %v2060 = vpack.c.b16 %v1970, %v1969
        %v2061 = vpack.c.b16 %v1972, %v1971
        %v2062 = vpack.c.b16 %v1974, %v1973
        %v2063 = vpack.c.b16 %v1976, %v1975
        %v2064 = vpack.c.b16 %v1978, %v1977
        %v2065 = vpack.c.b16 %v1980, %v1979
        %v2066 = vpack.c.b16 %v1982, %v1981
        %v2067 = vpack.c.b16 %v1984, %v1983
        %v2068 = vpack.c.b16 %v1986, %v1985
        %v2069 = vpack.c.b16 %v1988, %v1987
        %v2070 = vpack.c.b16 %v1990, %v1989
        %v2071 = vpack.c.b16 %v1992, %v1991
        %v2072 = vpack.c.b16 %v1994, %v1993
        %v2073 = vpack.c.b16 %v1996, %v1995
        %v2074 = vpack.c.b16 %v1998, %v1997
        %v2075 = vpack.c.b16 %v2000, %v1999
        %v2076 = vpack.c.b16 %v2002, %v2001
        %v2077 = vpack.c.b16 %v2004, %v2003
        %v2078 = vpack.c.b16 %v2006, %v2005
        %2151 = vmatprep.subr.bf16.mxu0 0
        %2152 = vmatpush1.bf16.msra.mxu0 %v2014
        %2153 = vmatprep.subr.bf16.mxu0 0
        %2154 = vmatpush1.bf16.msra.mxu0 %v2013
        %2155 = vmatprep.subr.bf16.mxu0 0
        %2156 = vmatpush1.bf16.msra.mxu0 %v2012
        %2157 = vmatprep.subr.bf16.mxu0 0
        %2158 = vmatpush1.bf16.msra.mxu0 %v2011
        %2159 = vmatprep.subr.bf16.mxu0 0
        %2160 = vmatpush1.bf16.msra.mxu0 %v2010
        %2161 = vmatprep.subr.bf16.mxu0 0
        %2162 = vmatpush1.bf16.msra.mxu0 %v2009
        %2163 = vmatprep.subr.bf16.mxu0 0
        %2164 = vmatpush1.bf16.msra.mxu0 %v2008
        %2165 = vmatprep.subr.bf16.mxu0 0
        %2166 = vmatpush1.bf16.msra.mxu0 %v2007
        %2167 = vmatprep.subr.bf16.mxu0 0
        %2168 = vmatpush2.bf16.msra.mxu0 %v2022
        %2169 = vmatprep.subr.bf16.mxu0 0
        %2170 = vmatpush2.bf16.msra.mxu0 %v2021
        %2171 = vmatprep.subr.bf16.mxu0 0
        %2172 = vmatpush2.bf16.msra.mxu0 %v2020
        %2173 = vmatprep.subr.bf16.mxu0 0
        %2174 = vmatpush2.bf16.msra.mxu0 %v2019
        %2175 = vmatprep.subr.bf16.mxu0 0
        %2176 = vmatpush2.bf16.msra.mxu0 %v2018
        %2177 = vmatprep.subr.bf16.mxu0 0
        %2178 = vmatpush2.bf16.msra.mxu0 %v2017
        %2179 = vmatprep.subr.bf16.mxu0 0
        %2180 = vmatpush2.bf16.msra.mxu0 %v2016
        %2181 = vmatprep.subr.bf16.mxu0 0
        %2182 = vmatpush2.bf16.msra.mxu0 %v2015
        %2183 = vmatprep.mubr.bf16.mxu0 %v1282
        %2184 = vmatmul.mubr.bf16.gmra.mxu0 %v1246
        %v2185 = vpop.f32.mrf.mxu0
        %v2186 = vadd.f32 %v1718, %v2185
        %v2187 = vpop.f32.mrf.mxu0
        %v2188 = vpop.f32.mrf.mxu0
        %v2189 = vadd.f32 %v1718, %v2188
        %v2190 = vpop.f32.mrf.mxu0
        %2191 = vmatprep.mubr.bf16.mxu0 %v1299
        %2192 = vmatmul.mubr.bf16.gmra.mxu0 %v1263
        %v2193 = vpop.f32.mrf.mxu0
        %v2194 = vadd.f32 %v1718, %v2193
        %v2195 = vpop.f32.mrf.mxu0
        %v2196 = vpop.f32.mrf.mxu0
        %v2197 = vadd.f32 %v1718, %v2196
        %v2198 = vpop.f32.mrf.mxu0
        %2199 = vdwg.mxu0
        %2200 = vmatprep.subr.bf16.mxu0 0
        %2201 = vmatpush1.bf16.msra.mxu0 %v2030
        %2202 = vmatprep.subr.bf16.mxu0 0
        %2203 = vmatpush1.bf16.msra.mxu0 %v2029
        %2204 = vmatprep.subr.bf16.mxu0 0
        %2205 = vmatpush1.bf16.msra.mxu0 %v2028
        %2206 = vmatprep.subr.bf16.mxu0 0
        %2207 = vmatpush1.bf16.msra.mxu0 %v2027
        %2208 = vmatprep.subr.bf16.mxu0 0
        %2209 = vmatpush1.bf16.msra.mxu0 %v2026
        %2210 = vmatprep.subr.bf16.mxu0 0
        %2211 = vmatpush1.bf16.msra.mxu0 %v2025
        %2212 = vmatprep.subr.bf16.mxu0 0
        %2213 = vmatpush1.bf16.msra.mxu0 %v2024
        %2214 = vmatprep.subr.bf16.mxu0 0
        %2215 = vmatpush1.bf16.msra.mxu0 %v2023
        %2216 = vmatprep.subr.bf16.mxu0 0
        %2217 = vmatpush2.bf16.msra.mxu0 %v2038
        %2218 = vmatprep.subr.bf16.mxu0 0
        %2219 = vmatpush2.bf16.msra.mxu0 %v2037
        %2220 = vmatprep.subr.bf16.mxu0 0
        %2221 = vmatpush2.bf16.msra.mxu0 %v2036
        %2222 = vmatprep.subr.bf16.mxu0 0
        %2223 = vmatpush2.bf16.msra.mxu0 %v2035
        %2224 = vmatprep.subr.bf16.mxu0 0
        %2225 = vmatpush2.bf16.msra.mxu0 %v2034
        %2226 = vmatprep.subr.bf16.mxu0 0
        %2227 = vmatpush2.bf16.msra.mxu0 %v2033
        %2228 = vmatprep.subr.bf16.mxu0 0
        %2229 = vmatpush2.bf16.msra.mxu0 %v2032
        %2230 = vmatprep.subr.bf16.mxu0 0
        %2231 = vmatpush2.bf16.msra.mxu0 %v2031
        %2232 = vmatprep.mubr.bf16.mxu0 %v1362
        %2233 = vmatmul.mubr.bf16.gmra.mxu0 %v1318
        %v2234 = vpop.f32.mrf.mxu0
        %v2235 = vadd.f32 %v2186, %v2234
        %v2236 = vpop.f32.mrf.mxu0
        %v2237 = vpop.f32.mrf.mxu0
        %v2238 = vadd.f32 %v2189, %v2237
        %v2239 = vpop.f32.mrf.mxu0
        %2240 = vmatprep.mubr.bf16.mxu0 %v1379
        %2241 = vmatmul.mubr.bf16.gmra.mxu0 %v1335
        %v2242 = vpop.f32.mrf.mxu0
        %v2243 = vadd.f32 %v2194, %v2242
        %v2244 = vpop.f32.mrf.mxu0
        %v2245 = vpop.f32.mrf.mxu0
        %v2246 = vadd.f32 %v2197, %v2245
        %v2247 = vpop.f32.mrf.mxu0
        %2248 = vdwg.mxu0
        %2249 = vmatprep.subr.bf16.mxu0 0
        %2250 = vmatpush1.bf16.msra.mxu0 %v2046
        %2251 = vmatprep.subr.bf16.mxu0 0
        %2252 = vmatpush1.bf16.msra.mxu0 %v2045
        %2253 = vmatprep.subr.bf16.mxu0 0
        %2254 = vmatpush1.bf16.msra.mxu0 %v2044
        %2255 = vmatprep.subr.bf16.mxu0 0
        %2256 = vmatpush1.bf16.msra.mxu0 %v2043
        %2257 = vmatprep.subr.bf16.mxu0 0
        %2258 = vmatpush1.bf16.msra.mxu0 %v2042
        %2259 = vmatprep.subr.bf16.mxu0 0
        %2260 = vmatpush1.bf16.msra.mxu0 %v2041
        %2261 = vmatprep.subr.bf16.mxu0 0
        %2262 = vmatpush1.bf16.msra.mxu0 %v2040
        %2263 = vmatprep.subr.bf16.mxu0 0
        %2264 = vmatpush1.bf16.msra.mxu0 %v2039
        %2265 = vmatprep.subr.bf16.mxu0 0
        %2266 = vmatpush2.bf16.msra.mxu0 %v2054
        %2267 = vmatprep.subr.bf16.mxu0 0
        %2268 = vmatpush2.bf16.msra.mxu0 %v2053
        %2269 = vmatprep.subr.bf16.mxu0 0
        %2270 = vmatpush2.bf16.msra.mxu0 %v2052
        %2271 = vmatprep.subr.bf16.mxu0 0
        %2272 = vmatpush2.bf16.msra.mxu0 %v2051
        %2273 = vmatprep.subr.bf16.mxu0 0
        %2274 = vmatpush2.bf16.msra.mxu0 %v2050
        %2275 = vmatprep.subr.bf16.mxu0 0
        %2276 = vmatpush2.bf16.msra.mxu0 %v2049
        %2277 = vmatprep.subr.bf16.mxu0 0
        %2278 = vmatpush2.bf16.msra.mxu0 %v2048
        %2279 = vmatprep.subr.bf16.mxu0 0
        %2280 = vmatpush2.bf16.msra.mxu0 %v2047
        %2281 = vmatprep.mubr.bf16.mxu0 %v1434
        %2282 = vmatmul.mubr.bf16.gmra.mxu0 %v1398
        %v2283 = vpop.f32.mrf.mxu0
        %v2284 = vadd.f32 %v2235, %v2283
        %v2285 = vpop.f32.mrf.mxu0
        %v2286 = vpop.f32.mrf.mxu0
        %v2287 = vadd.f32 %v2238, %v2286
        %v2288 = vpop.f32.mrf.mxu0
        %2289 = vmatprep.mubr.bf16.mxu0 %v1451
        %2290 = vmatmul.mubr.bf16.gmra.mxu0 %v1415
        %v2291 = vpop.f32.mrf.mxu0
        %v2292 = vadd.f32 %v2243, %v2291
        %v2293 = vpop.f32.mrf.mxu0
        %v2294 = vpop.f32.mrf.mxu0
        %v2295 = vadd.f32 %v2246, %v2294
        %v2296 = vpop.f32.mrf.mxu0
        %2297 = vdwg.mxu0
        %2298 = vmatprep.subr.bf16.mxu0 0
        %2299 = vmatpush1.bf16.msra.mxu0 %v2062
        %2300 = vmatprep.subr.bf16.mxu0 0
        %2301 = vmatpush1.bf16.msra.mxu0 %v2061
        %2302 = vmatprep.subr.bf16.mxu0 0
        %2303 = vmatpush1.bf16.msra.mxu0 %v2060
        %2304 = vmatprep.subr.bf16.mxu0 0
        %2305 = vmatpush1.bf16.msra.mxu0 %v2059
        %2306 = vmatprep.subr.bf16.mxu0 0
        %2307 = vmatpush1.bf16.msra.mxu0 %v2058
        %2308 = vmatprep.subr.bf16.mxu0 0
        %2309 = vmatpush1.bf16.msra.mxu0 %v2057
        %2310 = vmatprep.subr.bf16.mxu0 0
        %2311 = vmatpush1.bf16.msra.mxu0 %v2056
        %2312 = vmatprep.subr.bf16.mxu0 0
        %2313 = vmatpush1.bf16.msra.mxu0 %v2055
        %2314 = vmatprep.subr.bf16.mxu0 0
        %2315 = vmatpush2.bf16.msra.mxu0 %v2070
        %2316 = vmatprep.subr.bf16.mxu0 0
        %2317 = vmatpush2.bf16.msra.mxu0 %v2069
        %2318 = vmatprep.subr.bf16.mxu0 0
        %2319 = vmatpush2.bf16.msra.mxu0 %v2068
        %2320 = vmatprep.subr.bf16.mxu0 0
        %2321 = vmatpush2.bf16.msra.mxu0 %v2067
        %2322 = vmatprep.subr.bf16.mxu0 0
        %2323 = vmatpush2.bf16.msra.mxu0 %v2066
        %2324 = vmatprep.subr.bf16.mxu0 0
        %2325 = vmatpush2.bf16.msra.mxu0 %v2065
        %2326 = vmatprep.subr.bf16.mxu0 0
        %2327 = vmatpush2.bf16.msra.mxu0 %v2064
        %2328 = vmatprep.subr.bf16.mxu0 0
        %2329 = vmatpush2.bf16.msra.mxu0 %v2063
        %2330 = vmatprep.mubr.bf16.mxu0 %v1514
        %2331 = vmatmul.mubr.bf16.gmra.mxu0 %v1478
        %v2332 = vpop.f32.mrf.mxu0
        %v2333 = vadd.f32 %v2284, %v2332
        %v2334 = vpop.f32.mrf.mxu0
        %v2335 = vpop.f32.mrf.mxu0
        %v2336 = vadd.f32 %v2287, %v2335
        %v2337 = vpop.f32.mrf.mxu0
        %2338 = vmatprep.mubr.bf16.mxu0 %v1531
        %2339 = vmatmul.mubr.bf16.gmra.mxu0 %v1495
        %v2340 = vpop.f32.mrf.mxu0
        %v2341 = vadd.f32 %v2292, %v2340
        %v2342 = vpop.f32.mrf.mxu0
        %v2343 = vpop.f32.mrf.mxu0
        %v2344 = vadd.f32 %v2295, %v2343
        %v2345 = vpop.f32.mrf.mxu0
        %2346 = vdwg.mxu0
        %2347 = vmatprep.subr.bf16.mxu0 0
        %2348 = vmatpush1.bf16.msra.mxu0 %v2078
        %2349 = vmatprep.subr.bf16.mxu0 0
        %2350 = vmatpush1.bf16.msra.mxu0 %v2077
        %2351 = vmatprep.subr.bf16.mxu0 0
        %2352 = vmatpush1.bf16.msra.mxu0 %v2076
        %2353 = vmatprep.subr.bf16.mxu0 0
        %2354 = vmatpush1.bf16.msra.mxu0 %v2075
        %2355 = vmatprep.subr.bf16.mxu0 0
        %2356 = vmatpush1.bf16.msra.mxu0 %v2074
        %2357 = vmatprep.subr.bf16.mxu0 0
        %2358 = vmatpush1.bf16.msra.mxu0 %v2073
        %2359 = vmatprep.subr.bf16.mxu0 0
        %2360 = vmatpush1.bf16.msra.mxu0 %v2072
        %2361 = vmatprep.subr.bf16.mxu0 0
        %2362 = vmatpush1.bf16.msra.mxu0 %v2071
        %2363 = vmatprep.subr.bf16.mxu0 0
        %2364 = vmatpush2.bf16.msra.mxu0 0
        %2365 = vmatprep.subr.bf16.mxu0 0
        %2366 = vmatpush2.bf16.msra.mxu0 0
        %2367 = vmatprep.subr.bf16.mxu0 0
        %2368 = vmatpush2.bf16.msra.mxu0 0
        %2369 = vmatprep.subr.bf16.mxu0 0
        %2370 = vmatpush2.bf16.msra.mxu0 0
        %2371 = vmatprep.subr.bf16.mxu0 0
        %2372 = vmatpush2.bf16.msra.mxu0 0
        %2373 = vmatprep.subr.bf16.mxu0 0
        %2374 = vmatpush2.bf16.msra.mxu0 0
        %2375 = vmatprep.subr.bf16.mxu0 0
        %2376 = vmatpush2.bf16.msra.mxu0 0
        %2377 = vmatprep.subr.bf16.mxu0 0
        %2378 = vmatpush2.bf16.msra.mxu0 0
        %2379 = vmatprep.mubr.bf16.mxu0 0
        %2380 = vmatmul.mubr.bf16.gmra.mxu0 %v1550
        %v2381 = vpop.f32.mrf.mxu0
        %v2382 = vadd.f32 %v2333, %v2381
        %v2383 = vpop.f32.mrf.mxu0
        %v2384 = vpop.f32.mrf.mxu0
        %v2385 = vadd.f32 %v2336, %v2384
        %v2386 = vpop.f32.mrf.mxu0
        %2387 = vmatprep.mubr.bf16.mxu0 0
        %2388 = vmatmul.mubr.bf16.gmra.mxu0 %v1567
        %v2389 = vpop.f32.mrf.mxu0
        %v2390 = vadd.f32 %v2341, %v2389
        %v2391 = vpop.f32.mrf.mxu0
        %v2392 = vpop.f32.mrf.mxu0
        %v2393 = vadd.f32 %v2344, %v2392
        %v2394 = vpop.f32.mrf.mxu0
        %2395 = vdwg.mxu0
        %v2396 = vld [vmem:[%s4 + $0x1] sm:$0x1]
        %v2397 = vld [vmem:[%s4 + $0x4] sm:$0x1]
        %v2398 = vmul.f32 %v2382, %v2382
        %v2399 = vmul.f32 %v2385, %v2385
        %v2400 = vmul.f32 %v2390, %v2390
        %v2401 = vmul.f32 %v2393, %v2393
        %v2402 = vpack.c.bf16 %v2399, %v2398
        %v2403 = vpack.c.bf16 %v2401, %v2400
        %v2420 = vunpack.c.l.b16 %v254
        %v2421 = vunpack.c.l.b16 %v255
        %v2422 = vunpack.c.l.b16 %v256
        %v2423 = vunpack.c.l.b16 %v257
        %v2424 = vunpack.c.l.b16 %v258
        %v2425 = vunpack.c.l.b16 %v259
        %v2426 = vunpack.c.l.b16 %v260
        %v2427 = vunpack.c.l.b16 %v261
        %v2428 = vunpack.c.l.b16 %v262
        %v2429 = vunpack.c.l.b16 %v263
        %v2430 = vunpack.c.l.b16 %v264
        %v2431 = vunpack.c.l.b16 %v265
        %v2432 = vunpack.c.l.b16 %v266
        %v2433 = vunpack.c.l.b16 %v267
        %v2434 = vunpack.c.l.b16 %v268
        %v2435 = vunpack.c.l.b16 %v269
        %v2436 = vpack.c.b16 %v2421, %v2420
        %v2437 = vpack.c.b16 %v2423, %v2422
        %v2438 = vpack.c.b16 %v2425, %v2424
        %v2439 = vpack.c.b16 %v2427, %v2426
        %v2440 = vpack.c.b16 %v2429, %v2428
        %v2441 = vpack.c.b16 %v2431, %v2430
        %v2442 = vpack.c.b16 %v2433, %v2432
        %v2443 = vpack.c.b16 %v2435, %v2434
        %2452 = vmatprep.subr.bf16.mxu0 0
        %2453 = vmatpush1.bf16.msra.mxu0 %v2443
        %2454 = vmatprep.subr.bf16.mxu0 0
        %2455 = vmatpush1.bf16.msra.mxu0 %v2442
        %2456 = vmatprep.subr.bf16.mxu0 0
        %2457 = vmatpush1.bf16.msra.mxu0 %v2441
        %2458 = vmatprep.subr.bf16.mxu0 0
        %2459 = vmatpush1.bf16.msra.mxu0 %v2440
        %2460 = vmatprep.subr.bf16.mxu0 0
        %2461 = vmatpush1.bf16.msra.mxu0 %v2439
        %2462 = vmatprep.subr.bf16.mxu0 0
        %2463 = vmatpush1.bf16.msra.mxu0 %v2438
        %2464 = vmatprep.subr.bf16.mxu0 0
        %2465 = vmatpush1.bf16.msra.mxu0 %v2437
        %2466 = vmatprep.subr.bf16.mxu0 0
        %2467 = vmatpush1.bf16.msra.mxu0 %v2436
        %2468 = vmatprep.subr.bf16.mxu0 0
        %2469 = vmatpush2.bf16.msra.mxu0 0
        %2470 = vmatprep.subr.bf16.mxu0 0
        %2471 = vmatpush2.bf16.msra.mxu0 0
        %2472 = vmatprep.subr.bf16.mxu0 0
        %2473 = vmatpush2.bf16.msra.mxu0 0
        %2474 = vmatprep.subr.bf16.mxu0 0
        %2475 = vmatpush2.bf16.msra.mxu0 0
        %2476 = vmatprep.subr.bf16.mxu0 0
        %2477 = vmatpush2.bf16.msra.mxu0 0
        %2478 = vmatprep.subr.bf16.mxu0 0
        %2479 = vmatpush2.bf16.msra.mxu0 0
        %2480 = vmatprep.subr.bf16.mxu0 0
        %2481 = vmatpush2.bf16.msra.mxu0 0
        %2482 = vmatprep.subr.bf16.mxu0 0
        %2483 = vmatpush2.bf16.msra.mxu0 0
        %2484 = vmatprep.mubr.bf16.mxu0 0
        %2485 = vmatmul.mubr.bf16.gmra.mxu0 %v2402
        %v2486 = vpop.f32.mrf.mxu0
        %v2487 = vadd.f32 1e-06, %v2486
        %v2488 = vpop.f32.mrf.mxu0
        %v2489 = vpop.f32.mrf.mxu0
        %v2490 = vadd.f32 1e-06, %v2489
        %v2491 = vpop.f32.mrf.mxu0
        %2492 = vmatprep.mubr.bf16.mxu0 0
        %2493 = vmatmul.mubr.bf16.gmra.mxu0 %v2403
        %v2494 = vpop.f32.mrf.mxu0
        %v2495 = vadd.f32 1e-06, %v2494
        %v2496 = vpop.f32.mrf.mxu0
        %v2497 = vpop.f32.mrf.mxu0
        %v2498 = vadd.f32 1e-06, %v2497
        %v2499 = vpop.f32.mrf.mxu0
        %2500 = vdwg.mxu0
        %v2501 = vrsqrt.pop %v2487
        %v2502 = vrsqrt.pop %v2490
        %v2503 = vrsqrt.pop %v2495
        %v2504 = vrsqrt.pop %v2498
        %v2505 = vmul.f32 %v2487, %v2501
        %v2506 = vmul.f32 %v2490, %v2502
        %v2507 = vmul.f32 %v2495, %v2503
        %v2508 = vmul.f32 %v2498, %v2504
        %v2509 = vlaneseq
        %v2510 = vshrl.u32 %v2509, 7
        %v2511 = vsub.s32 0, %v2510
        %v2512 = vrot.slane %v2396, %v2511
        %v2513 = vsub.f32 %v2505, %v2512
        %v2514 = vsub.f32 %v2506, %v2512
        %v2515 = vsub.f32 %v2507, %v2512
        %v2516 = vsub.f32 %v2508, %v2512
        %v2517 = vmax.f32 %v2513, 0.0
        %v2518 = vmax.f32 %v2514, 0.0
        %v2519 = vmax.f32 %v2515, 0.0
        %v2520 = vmax.f32 %v2516, 0.0
        %vm2521 = vcmp.ne.f32.partialorder %v2513, %v2513
        %vm2522 = vcmp.ne.f32.partialorder %v2514, %v2514
        %vm2523 = vcmp.ne.f32.partialorder %v2515, %v2515
        %vm2524 = vcmp.ne.f32.partialorder %v2516, %v2516
        %v2525 = vadd.f32 %v2513, 0.0
        %v2526 = vadd.f32 %v2514, 0.0
        %v2527 = vadd.f32 %v2515, 0.0
        %v2528 = vadd.f32 %v2516, 0.0
        %v2529 = vand.u32 2147483647, %v2513
        %v2530 = vand.u32 2147483647, %v2514
        %v2531 = vand.u32 2147483647, %v2515
        %v2532 = vand.u32 2147483647, %v2516
        %v2533 = vsub.f32 0.0, %v2529
        %v2534 = vsub.f32 0.0, %v2530
        %v2535 = vsub.f32 0.0, %v2531
        %v2536 = vsub.f32 0.0, %v2532
        %v2537 = vmul.f32 %v2533, 1.442695
        %v2538 = vpow.pop %v2537
        %v2539 = vmul.f32 %v2534, 1.442695
        %v2540 = vpow.pop %v2539
        %v2541 = vmul.f32 %v2535, 1.442695
        %v2542 = vpow.pop %v2541
        %v2543 = vmul.f32 %v2536, 1.442695
        %v2544 = vpow.pop %v2543
        %v2545 = vadd.f32 %v2538, 1.0
        %v2546 = vlog2.pop %v2545
        %v2547 = vmul.f32 %v2546, 0.6931472
        %v2548 = vmul.f32 -0.5, %v2538
        %v2549 = vadd.f32 %v2548, 1.0
        %v2550 = vmul.f32 %v2549, %v2538
        %v2551 = vand.u32 2147483647, %v2538
        %vm2552 = vcmp.lt.f32.partialorder %v2551, 0.0004427343
        %v2553 = vsel %vm2552, %v2550, %v2547
        %v2554 = vadd.f32 %v2540, 1.0
        %v2555 = vlog2.pop %v2554
        %v2556 = vmul.f32 %v2555, 0.6931472
        %v2557 = vmul.f32 -0.5, %v2540
        %v2558 = vadd.f32 %v2557, 1.0
        %v2559 = vmul.f32 %v2558, %v2540
        %v2560 = vand.u32 2147483647, %v2540
        %vm2561 = vcmp.lt.f32.partialorder %v2560, 0.0004427343
        %v2562 = vsel %vm2561, %v2559, %v2556
        %v2563 = vadd.f32 %v2542, 1.0
        %v2564 = vlog2.pop %v2563
        %v2565 = vmul.f32 %v2564, 0.6931472
        %v2566 = vmul.f32 -0.5, %v2542
        %v2567 = vadd.f32 %v2566, 1.0
        %v2568 = vmul.f32 %v2567, %v2542
        %v2569 = vand.u32 2147483647, %v2542
        %vm2570 = vcmp.lt.f32.partialorder %v2569, 0.0004427343
        %v2571 = vsel %vm2570, %v2568, %v2565
        %v2572 = vadd.f32 %v2544, 1.0
        %v2573 = vlog2.pop %v2572
        %v2574 = vmul.f32 %v2573, 0.6931472
        %v2575 = vmul.f32 -0.5, %v2544
        %v2576 = vadd.f32 %v2575, 1.0
        %v2577 = vmul.f32 %v2576, %v2544
        %v2578 = vand.u32 2147483647, %v2544
        %vm2579 = vcmp.lt.f32.partialorder %v2578, 0.0004427343
        %v2580 = vsel %vm2579, %v2577, %v2574
        %v2581 = vadd.f32 %v2517, %v2553
        %v2582 = vadd.f32 %v2518, %v2562
        %v2583 = vadd.f32 %v2519, %v2571
        %v2584 = vadd.f32 %v2520, %v2580
        %v2585 = vsel %vm2521, %v2525, %v2581
        %v2586 = vsel %vm2522, %v2526, %v2582
        %v2587 = vsel %vm2523, %v2527, %v2583
        %v2588 = vsel %vm2524, %v2528, %v2584
        %v2589 = vmul.f32 %v2585, %v2501
        %v2590 = vmul.f32 %v2586, %v2502
        %v2591 = vmul.f32 %v2587, %v2503
        %v2592 = vmul.f32 %v2588, %v2504
        %vm2593 = vcmp.gt.f32.partialorder %v2397, 0.5
        %v2594 = vmax.f32 %v2382, 0.0
        %v2595 = vmax.f32 %v2385, 0.0
        %v2596 = vmax.f32 %v2390, 0.0
        %v2597 = vmax.f32 %v2393, 0.0
        %v2598 = vmul.f32 %v2382, %v2589
        %v2599 = vmul.f32 %v2385, %v2590
        %v2600 = vmul.f32 %v2390, %v2591
        %v2601 = vmul.f32 %v2393, %v2592
        %v2602 = vsel %vm2593, 1, 0
        %v2603 = vlaneseq
        %v2604 = vshrl.u32 %v2603, 7
        %v2605 = vsub.s32 0, %v2604
        %v2606 = vrot.slane %v2602, %v2605
        %vm2607 = vcmp.eq.s32.totalorder %v2606, 1
        %v2608 = vsel %vm2607, %v2594, %v2598
        %v2609 = vsel %vm2607, %v2595, %v2599
        %v2610 = vsel %vm2607, %v2596, %v2600
        %v2611 = vsel %vm2607, %v2597, %v2601
        %2612 = vst [vmem:[#allocation2] sm:$0x7] 0
        %s2613 = scalar_lea.vmem [#allocation2], 36
        %2614 = vst [vmem:[%s2613] sm:$0x7] 0
        %vm2615 = vsmask.f32 256
        %vm2616 = vmand %vm557, %vm2615
        %v2617 = vld [vmem:[#allocation2] sm:$0x1]
        %v2618 = vsel %vm2616, 0, %v2617
        %2619 = vst [vmem:[#allocation2] sm:$0x1] %v2618
        %v2620 = vld [vmem:[#allocation2 + $0x4] sm:$0x1]
        %v2621 = vsel %vm2616, 0, %v2620
        %2622 = vst [vmem:[#allocation2 + $0x4] sm:$0x1] %v2621
        %v2623 = vld [vmem:[#allocation2 + $0x8] sm:$0x1]
        %v2624 = vsel %vm2616, 0, %v2623
        %2625 = vst [vmem:[#allocation2 + $0x8] sm:$0x1] %v2624
        %v2626 = vld [vmem:[#allocation2 + $0xc] sm:$0x1]
        %v2627 = vsel %vm2616, 0, %v2626
        %2628 = vst [vmem:[#allocation2 + $0xc] sm:$0x1] %v2627
        %v2629 = vld [vmem:[#allocation2 + $0x10] sm:$0x1]
        %v2630 = vsel %vm2616, 0, %v2629
        %2631 = vst [vmem:[#allocation2 + $0x10] sm:$0x1] %v2630
        %v2632 = vld [vmem:[#allocation2 + $0x14] sm:$0x1]
        %v2633 = vsel %vm2616, 0, %v2632
        %2634 = vst [vmem:[#allocation2 + $0x14] sm:$0x1] %v2633
        %v2635 = vld [vmem:[#allocation2 + $0x18] sm:$0x1]
        %v2636 = vsel %vm2616, 0, %v2635
        %2637 = vst [vmem:[#allocation2 + $0x18] sm:$0x1] %v2636
        %v2638 = vld [vmem:[#allocation2 + $0x1c] sm:$0x1]
        %v2639 = vsel %vm2616, 0, %v2638
        %2640 = vst [vmem:[#allocation2 + $0x1c] sm:$0x1] %v2639
        %v2641 = vld [vmem:[#allocation2 + $0x20] sm:$0x1]
        %v2642 = vsel %vm2616, 0, %v2641
        %2643 = vst [vmem:[#allocation2 + $0x20] sm:$0x1] %v2642
        %v2644 = vld [vmem:[#allocation2 + $0x24] sm:$0x1]
        %v2645 = vsel %vm2616, 0, %v2644
        %2646 = vst [vmem:[#allocation2 + $0x24] sm:$0x1] %v2645
        %vm2647 = vsmask.f32 7946
        %vm2648 = vmand %vm558, %vm2647
        %v2649 = vld [vmem:[#allocation2] sm:$0x4]
        %v2650 = vsel %vm2648, 0, %v2649
        %2651 = vst [vmem:[#allocation2] sm:$0x4] %v2650
        %v2652 = vld [vmem:[#allocation2 + $0x4] sm:$0x4]
        %v2653 = vsel %vm2648, 0, %v2652
        %2654 = vst [vmem:[#allocation2 + $0x4] sm:$0x4] %v2653
        %v2655 = vld [vmem:[#allocation2 + $0x8] sm:$0x4]
        %v2656 = vsel %vm2648, 0, %v2655
        %2657 = vst [vmem:[#allocation2 + $0x8] sm:$0x4] %v2656
        %v2658 = vld [vmem:[#allocation2 + $0xc] sm:$0x4]
        %v2659 = vsel %vm2648, 0, %v2658
        %2660 = vst [vmem:[#allocation2 + $0xc] sm:$0x4] %v2659
        %v2661 = vld [vmem:[#allocation2 + $0x10] sm:$0x4]
        %v2662 = vsel %vm2648, 0, %v2661
        %2663 = vst [vmem:[#allocation2 + $0x10] sm:$0x4] %v2662
        %v2664 = vld [vmem:[#allocation2 + $0x14] sm:$0x4]
        %v2665 = vsel %vm2648, 0, %v2664
        %2666 = vst [vmem:[#allocation2 + $0x14] sm:$0x4] %v2665
        %v2667 = vld [vmem:[#allocation2 + $0x18] sm:$0x4]
        %v2668 = vsel %vm2648, 0, %v2667
        %2669 = vst [vmem:[#allocation2 + $0x18] sm:$0x4] %v2668
        %v2670 = vld [vmem:[#allocation2 + $0x1c] sm:$0x4]
        %v2671 = vsel %vm2648, 0, %v2670
        %2672 = vst [vmem:[#allocation2 + $0x1c] sm:$0x4] %v2671
        %v2673 = vld [vmem:[#allocation2 + $0x20] sm:$0x4]
        %v2674 = vsel %vm2648, 0, %v2673
        %2675 = vst [vmem:[#allocation2 + $0x20] sm:$0x4] %v2674
        %v2676 = vld [vmem:[#allocation2 + $0x24] sm:$0x4]
        %v2677 = vsel %vm2648, 0, %v2676
        %2678 = vst [vmem:[#allocation2 + $0x24] sm:$0x4] %v2677
        %v2679 = vpack.c.bf16 %v2609, %v2608
        %v2680 = vpack.c.bf16 %v2611, %v2610
        %v2683 = vcombine.high %v2679, %v2679
        %v2685 = vunpack.c.l.s4 1983009808
        %v2686 = vunpack.c.0.s8 %v2685
        %v2687 = vlaneseq
        %v2688 = vshrl.u32 %v2687, 7
        %v2689 = vsub.s32 %v2686, %v2688
        %v2690 = vrot.slane %v2679, %v2689
        %v2692 = vunpack.c.l.s4 1983009808
        %v2693 = vunpack.c.0.s8 %v2692
        %v2694 = vlaneseq
        %v2695 = vshrl.u32 %v2694, 7
        %v2696 = vsub.s32 %v2693, %v2695
        %v2697 = vrot.slane %v2683, %v2696
        %v2698 = vcombine.high %v2690, %v2690
        %v2699 = vcombine.high %v2697, %v2697
        %v2700 = vcombine.high %v2680, %v2680
        %v2702 = vunpack.c.l.s4 1983009808
        %v2703 = vunpack.c.0.s8 %v2702
        %v2704 = vlaneseq
        %v2705 = vshrl.u32 %v2704, 7
        %v2706 = vsub.s32 %v2703, %v2705
        %v2707 = vrot.slane %v2680, %v2706
        %v2709 = vunpack.c.l.s4 1983009808
        %v2710 = vunpack.c.0.s8 %v2709
        %v2711 = vlaneseq
        %v2712 = vshrl.u32 %v2711, 7
        %v2713 = vsub.s32 %v2710, %v2712
        %v2714 = vrot.slane %v2700, %v2713
        %v2715 = vcombine.high %v2707, %v2707
        %v2716 = vcombine.high %v2714, %v2714
        %v2718 = vunpack.c.l.s4 1983009808
        %v2719 = vunpack.c.0.s8 %v2718
        %v2720 = vlaneseq
        %v2721 = vshrl.u32 %v2720, 7
        %v2722 = vsub.s32 %v2719, %v2721
        %v2723 = vrot.slane %v2690, %v2722
        %v2725 = vunpack.c.l.s4 1983009808
        %v2726 = vunpack.c.0.s8 %v2725
        %v2727 = vlaneseq
        %v2728 = vshrl.u32 %v2727, 7
        %v2729 = vsub.s32 %v2726, %v2728
        %v2730 = vrot.slane %v2698, %v2729
        %v2732 = vunpack.c.l.s4 1983009808
        %v2733 = vunpack.c.0.s8 %v2732
        %v2734 = vlaneseq
        %v2735 = vshrl.u32 %v2734, 7
        %v2736 = vsub.s32 %v2733, %v2735
        %v2737 = vrot.slane %v2697, %v2736
        %v2739 = vunpack.c.l.s4 1983009808
        %v2740 = vunpack.c.0.s8 %v2739
        %v2741 = vlaneseq
        %v2742 = vshrl.u32 %v2741, 7
        %v2743 = vsub.s32 %v2740, %v2742
        %v2744 = vrot.slane %v2699, %v2743
        %v2746 = vunpack.c.l.s4 1983009808
        %v2747 = vunpack.c.0.s8 %v2746
        %v2748 = vlaneseq
        %v2749 = vshrl.u32 %v2748, 7
        %v2750 = vsub.s32 %v2747, %v2749
        %v2751 = vrot.slane %v2707, %v2750
        %v2753 = vunpack.c.l.s4 1983009808
        %v2754 = vunpack.c.0.s8 %v2753
        %v2755 = vlaneseq
        %v2756 = vshrl.u32 %v2755, 7
        %v2757 = vsub.s32 %v2754, %v2756
        %v2758 = vrot.slane %v2715, %v2757
        %v2760 = vunpack.c.l.s4 1983009808
        %v2761 = vunpack.c.0.s8 %v2760
        %v2762 = vlaneseq
        %v2763 = vshrl.u32 %v2762, 7
        %v2764 = vsub.s32 %v2761, %v2763
        %v2765 = vrot.slane %v2714, %v2764
        %v2767 = vunpack.c.l.s4 1983009808
        %v2768 = vunpack.c.0.s8 %v2767
        %v2769 = vlaneseq
        %v2770 = vshrl.u32 %v2769, 7
        %v2771 = vsub.s32 %v2768, %v2770
        %v2772 = vrot.slane %v2716, %v2771
        %v2774 = vshrl.u32 %v2723, 16
        %v2776 = vrot.slane %v2774, 7
        %v2777 = vshll.u32 %v2723, 16
        %v2779 = vor.u32 %v2776, %v2777
        %v2781 = vshrl.u32 %v2730, 16
        %v2783 = vrot.slane %v2781, 7
        %v2784 = vshll.u32 %v2730, 16
        %v2786 = vor.u32 %v2783, %v2784
        %v2788 = vshrl.u32 %v2737, 16
        %v2790 = vrot.slane %v2788, 7
        %v2791 = vshll.u32 %v2737, 16
        %v2793 = vor.u32 %v2790, %v2791
        %v2795 = vshrl.u32 %v2744, 16
        %v2797 = vrot.slane %v2795, 7
        %v2798 = vshll.u32 %v2744, 16
        %v2800 = vor.u32 %v2797, %v2798
        %v2802 = vshrl.u32 %v2751, 16
        %v2804 = vrot.slane %v2802, 7
        %v2805 = vshll.u32 %v2751, 16
        %v2807 = vor.u32 %v2804, %v2805
        %v2809 = vshrl.u32 %v2758, 16
        %v2811 = vrot.slane %v2809, 7
        %v2812 = vshll.u32 %v2758, 16
        %v2814 = vor.u32 %v2811, %v2812
        %v2816 = vshrl.u32 %v2765, 16
        %v2818 = vrot.slane %v2816, 7
        %v2819 = vshll.u32 %v2765, 16
        %v2821 = vor.u32 %v2818, %v2819
        %v2823 = vshrl.u32 %v2772, 16
        %v2825 = vrot.slane %v2823, 7
        %v2826 = vshll.u32 %v2772, 16
        %v2828 = vor.u32 %v2825, %v2826
        %s2837 = scalar_lea.vmem [#allocation2], 4
        %vm2838 = vcmask 1042432
        %vm2839 = vsmask.f32 2306
        %vm2840 = vmand %vm2838, %vm2839
        %v2841 = vld [vmem:[%s2837] sm:$0x7]
        %v2842 = vsel %vm2840, %v2779, %v2841
        %2843 = vst [vmem:[%s2837] sm:$0x7] %v2842
        %v2844 = vld [vmem:[%s2837 + $0x4] sm:$0x7]
        %v2845 = vsel %vm2840, %v2786, %v2844
        %2846 = vst [vmem:[%s2837 + $0x4] sm:$0x7] %v2845
        %v2847 = vld [vmem:[%s2837 + $0x8] sm:$0x7]
        %v2848 = vsel %vm2840, %v2793, %v2847
        %2849 = vst [vmem:[%s2837 + $0x8] sm:$0x7] %v2848
        %v2850 = vld [vmem:[%s2837 + $0xc] sm:$0x7]
        %v2851 = vsel %vm2840, %v2800, %v2850
        %2852 = vst [vmem:[%s2837 + $0xc] sm:$0x7] %v2851
        %v2853 = vld [vmem:[%s2837 + $0x10] sm:$0x7]
        %v2854 = vsel %vm2840, %v2807, %v2853
        %2855 = vst [vmem:[%s2837 + $0x10] sm:$0x7] %v2854
        %v2856 = vld [vmem:[%s2837 + $0x14] sm:$0x7]
        %v2857 = vsel %vm2840, %v2814, %v2856
        %2858 = vst [vmem:[%s2837 + $0x14] sm:$0x7] %v2857
        %v2859 = vld [vmem:[%s2837 + $0x18] sm:$0x7]
        %v2860 = vsel %vm2840, %v2821, %v2859
        %2861 = vst [vmem:[%s2837 + $0x18] sm:$0x7] %v2860
        %v2862 = vld [vmem:[%s2837 + $0x1c] sm:$0x7]
        %v2863 = vsel %vm2840, %v2828, %v2862
        %2864 = vst [vmem:[%s2837 + $0x1c] sm:$0x7] %v2863
        %v2865 = vld [vmem:[#allocation2] sm:$0x3]
        %v2866 = vld [vmem:[#allocation2 + $0x4] sm:$0x3]
        %v2867 = vld [vmem:[#allocation2 + $0x8] sm:$0x3]
        %v2868 = vld [vmem:[#allocation2 + $0xc] sm:$0x3]
        %v2869 = vld [vmem:[#allocation2 + $0x10] sm:$0x3]
        %v2870 = vld [vmem:[#allocation2 + $0x14] sm:$0x3]
        %v2871 = vld [vmem:[#allocation2 + $0x18] sm:$0x3]
        %v2872 = vld [vmem:[#allocation2 + $0x1c] sm:$0x3]
        %v2873 = vld [vmem:[#allocation2] sm:$0x7]
        %v2874 = vld [vmem:[#allocation2 + $0x4] sm:$0x7]
        %v2875 = vld [vmem:[#allocation2 + $0x8] sm:$0x7]
        %v2876 = vld [vmem:[#allocation2 + $0xc] sm:$0x7]
        %v2877 = vld [vmem:[#allocation2 + $0x10] sm:$0x7]
        %v2878 = vld [vmem:[#allocation2 + $0x14] sm:$0x7]
        %v2879 = vld [vmem:[#allocation2 + $0x18] sm:$0x7]
        %v2880 = vld [vmem:[#allocation2 + $0x1c] sm:$0x7]
        %v2890 = vunpack.c.l.s4 1983009808
        %v2891 = vunpack.c.0.s8 %v2890
        %v2892 = vlaneseq
        %v2893 = vshrl.u32 %v2892, 7
        %v2894 = vsub.s32 %v2891, %v2893
        %v2895 = vrot.slane %v2873, %v2894
        %v2896 = vcombine.high %v2895, %v2895
        %v2898 = vunpack.c.l.s4 1983009808
        %v2899 = vunpack.c.0.s8 %v2898
        %v2900 = vlaneseq
        %v2901 = vshrl.u32 %v2900, 7
        %v2902 = vsub.s32 %v2899, %v2901
        %v2903 = vrot.slane %v2874, %v2902
        %v2904 = vcombine.high %v2903, %v2903
        %v2906 = vunpack.c.l.s4 1983009808
        %v2907 = vunpack.c.0.s8 %v2906
        %v2908 = vlaneseq
        %v2909 = vshrl.u32 %v2908, 7
        %v2910 = vsub.s32 %v2907, %v2909
        %v2911 = vrot.slane %v2875, %v2910
        %v2912 = vcombine.high %v2911, %v2911
        %v2914 = vunpack.c.l.s4 1983009808
        %v2915 = vunpack.c.0.s8 %v2914
        %v2916 = vlaneseq
        %v2917 = vshrl.u32 %v2916, 7
        %v2918 = vsub.s32 %v2915, %v2917
        %v2919 = vrot.slane %v2876, %v2918
        %v2920 = vcombine.high %v2919, %v2919
        %v2922 = vunpack.c.l.s4 1983009808
        %v2923 = vunpack.c.0.s8 %v2922
        %v2924 = vlaneseq
        %v2925 = vshrl.u32 %v2924, 7
        %v2926 = vsub.s32 %v2923, %v2925
        %v2927 = vrot.slane %v2877, %v2926
        %v2928 = vcombine.high %v2927, %v2927
        %v2930 = vunpack.c.l.s4 1983009808
        %v2931 = vunpack.c.0.s8 %v2930
        %v2932 = vlaneseq
        %v2933 = vshrl.u32 %v2932, 7
        %v2934 = vsub.s32 %v2931, %v2933
        %v2935 = vrot.slane %v2878, %v2934
        %v2936 = vcombine.high %v2935, %v2935
        %v2938 = vunpack.c.l.s4 1983009808
        %v2939 = vunpack.c.0.s8 %v2938
        %v2940 = vlaneseq
        %v2941 = vshrl.u32 %v2940, 7
        %v2942 = vsub.s32 %v2939, %v2941
        %v2943 = vrot.slane %v2879, %v2942
        %v2944 = vcombine.high %v2943, %v2943
        %v2946 = vunpack.c.l.s4 1983009808
        %v2947 = vunpack.c.0.s8 %v2946
        %v2948 = vlaneseq
        %v2949 = vshrl.u32 %v2948, 7
        %v2950 = vsub.s32 %v2947, %v2949
        %v2951 = vrot.slane %v2880, %v2950
        %v2952 = vcombine.high %v2951, %v2951
        %v2954 = vshrl.u32 %v2895, 16
        %v2956 = vrot.slane %v2954, 6
        %v2957 = vshll.u32 %v2895, 16
        %v2959 = vrot.slane %v2957, 7
        %v2960 = vor.u32 %v2956, %v2959
        %v2961 = vrot.slane %v2960, 2
        %v2963 = vshll.u32 %v2896, 16
        %v2965 = vrot.slane %v2963, 7
        %v2966 = vsel %vm364, %v2961, %v2965
        %v2968 = vshrl.u32 %v2903, 16
        %v2970 = vrot.slane %v2968, 6
        %v2971 = vshll.u32 %v2903, 16
        %v2973 = vrot.slane %v2971, 7
        %v2974 = vor.u32 %v2970, %v2973
        %v2975 = vrot.slane %v2974, 2
        %v2977 = vshll.u32 %v2904, 16
        %v2979 = vrot.slane %v2977, 7
        %v2980 = vsel %vm364, %v2975, %v2979
        %v2982 = vshrl.u32 %v2911, 16
        %v2984 = vrot.slane %v2982, 6
        %v2985 = vshll.u32 %v2911, 16
        %v2987 = vrot.slane %v2985, 7
        %v2988 = vor.u32 %v2984, %v2987
        %v2989 = vrot.slane %v2988, 2
        %v2991 = vshll.u32 %v2912, 16
        %v2993 = vrot.slane %v2991, 7
        %v2994 = vsel %vm364, %v2989, %v2993
        %v2996 = vshrl.u32 %v2919, 16
        %v2998 = vrot.slane %v2996, 6
        %v2999 = vshll.u32 %v2919, 16
        %v3001 = vrot.slane %v2999, 7
        %v3002 = vor.u32 %v2998, %v3001
        %v3003 = vrot.slane %v3002, 2
        %v3005 = vshll.u32 %v2920, 16
        %v3007 = vrot.slane %v3005, 7
        %v3008 = vsel %vm364, %v3003, %v3007
        %v3010 = vshrl.u32 %v2927, 16
        %v3012 = vrot.slane %v3010, 6
        %v3013 = vshll.u32 %v2927, 16
        %v3015 = vrot.slane %v3013, 7
        %v3016 = vor.u32 %v3012, %v3015
        %v3017 = vrot.slane %v3016, 2
        %v3019 = vshll.u32 %v2928, 16
        %v3021 = vrot.slane %v3019, 7
        %v3022 = vsel %vm364, %v3017, %v3021
        %v3024 = vshrl.u32 %v2935, 16
        %v3026 = vrot.slane %v3024, 6
        %v3027 = vshll.u32 %v2935, 16
        %v3029 = vrot.slane %v3027, 7
        %v3030 = vor.u32 %v3026, %v3029
        %v3031 = vrot.slane %v3030, 2
        %v3033 = vshll.u32 %v2936, 16
        %v3035 = vrot.slane %v3033, 7
        %v3036 = vsel %vm364, %v3031, %v3035
        %v3038 = vshrl.u32 %v2943, 16
        %v3040 = vrot.slane %v3038, 6
        %v3041 = vshll.u32 %v2943, 16
        %v3043 = vrot.slane %v3041, 7
        %v3044 = vor.u32 %v3040, %v3043
        %v3045 = vrot.slane %v3044, 2
        %v3047 = vshll.u32 %v2944, 16
        %v3049 = vrot.slane %v3047, 7
        %v3050 = vsel %vm364, %v3045, %v3049
        %v3052 = vshrl.u32 %v2951, 16
        %v3054 = vrot.slane %v3052, 6
        %v3055 = vshll.u32 %v2951, 16
        %v3057 = vrot.slane %v3055, 7
        %v3058 = vor.u32 %v3054, %v3057
        %v3059 = vrot.slane %v3058, 2
        %v3061 = vshll.u32 %v2952, 16
        %v3063 = vrot.slane %v3061, 7
        %v3064 = vsel %vm364, %v3059, %v3063
        %v3065 = vld [vmem:[#allocation2] sm:$0x6]
        %v3066 = vld [vmem:[#allocation2 + $0x4] sm:$0x6]
        %v3067 = vld [vmem:[#allocation2 + $0x8] sm:$0x6]
        %v3068 = vld [vmem:[#allocation2 + $0xc] sm:$0x6]
        %v3069 = vld [vmem:[#allocation2 + $0x10] sm:$0x6]
        %v3070 = vld [vmem:[#allocation2 + $0x14] sm:$0x6]
        %v3071 = vld [vmem:[#allocation2 + $0x18] sm:$0x6]
        %v3072 = vld [vmem:[#allocation2 + $0x1c] sm:$0x6]
        %v3082 = vunpack.c.l.s4 1983009808
        %v3083 = vunpack.c.0.s8 %v3082
        %v3084 = vlaneseq
        %v3085 = vshrl.u32 %v3084, 7
        %v3086 = vsub.s32 %v3083, %v3085
        %v3087 = vrot.slane %v3065, %v3086
        %v3088 = vcombine.high %v3087, %v3087
        %v3090 = vunpack.c.l.s4 1983009808
        %v3091 = vunpack.c.0.s8 %v3090
        %v3092 = vlaneseq
        %v3093 = vshrl.u32 %v3092, 7
        %v3094 = vsub.s32 %v3091, %v3093
        %v3095 = vrot.slane %v3066, %v3094
        %v3096 = vcombine.high %v3095, %v3095
        %v3098 = vunpack.c.l.s4 1983009808
        %v3099 = vunpack.c.0.s8 %v3098
        %v3100 = vlaneseq
        %v3101 = vshrl.u32 %v3100, 7
        %v3102 = vsub.s32 %v3099, %v3101
        %v3103 = vrot.slane %v3067, %v3102
        %v3104 = vcombine.high %v3103, %v3103
        %v3106 = vunpack.c.l.s4 1983009808
        %v3107 = vunpack.c.0.s8 %v3106
        %v3108 = vlaneseq
        %v3109 = vshrl.u32 %v3108, 7
        %v3110 = vsub.s32 %v3107, %v3109
        %v3111 = vrot.slane %v3068, %v3110
        %v3112 = vcombine.high %v3111, %v3111
        %v3114 = vunpack.c.l.s4 1983009808
        %v3115 = vunpack.c.0.s8 %v3114
        %v3116 = vlaneseq
        %v3117 = vshrl.u32 %v3116, 7
        %v3118 = vsub.s32 %v3115, %v3117
        %v3119 = vrot.slane %v3069, %v3118
        %v3120 = vcombine.high %v3119, %v3119
        %v3122 = vunpack.c.l.s4 1983009808
        %v3123 = vunpack.c.0.s8 %v3122
        %v3124 = vlaneseq
        %v3125 = vshrl.u32 %v3124, 7
        %v3126 = vsub.s32 %v3123, %v3125
        %v3127 = vrot.slane %v3070, %v3126
        %v3128 = vcombine.high %v3127, %v3127
        %v3130 = vunpack.c.l.s4 1983009808
        %v3131 = vunpack.c.0.s8 %v3130
        %v3132 = vlaneseq
        %v3133 = vshrl.u32 %v3132, 7
        %v3134 = vsub.s32 %v3131, %v3133
        %v3135 = vrot.slane %v3071, %v3134
        %v3136 = vcombine.high %v3135, %v3135
        %v3138 = vunpack.c.l.s4 1983009808
        %v3139 = vunpack.c.0.s8 %v3138
        %v3140 = vlaneseq
        %v3141 = vshrl.u32 %v3140, 7
        %v3142 = vsub.s32 %v3139, %v3141
        %v3143 = vrot.slane %v3072, %v3142
        %v3144 = vcombine.high %v3143, %v3143
        %v3145 = vrot.slane %v3087, 7
        %v3146 = vrot.slane %v3145, 2
        %v3147 = vrot.slane %v3088, 7
        %v3148 = vsel %vm563, %v3146, %v3147
        %v3149 = vrot.slane %v3095, 7
        %v3150 = vrot.slane %v3149, 2
        %v3151 = vrot.slane %v3096, 7
        %v3152 = vsel %vm563, %v3150, %v3151
        %v3153 = vrot.slane %v3103, 7
        %v3154 = vrot.slane %v3153, 2
        %v3155 = vrot.slane %v3104, 7
        %v3156 = vsel %vm563, %v3154, %v3155
        %v3157 = vrot.slane %v3111, 7
        %v3158 = vrot.slane %v3157, 2
        %v3159 = vrot.slane %v3112, 7
        %v3160 = vsel %vm563, %v3158, %v3159
        %v3161 = vrot.slane %v3119, 7
        %v3162 = vrot.slane %v3161, 2
        %v3163 = vrot.slane %v3120, 7
        %v3164 = vsel %vm563, %v3162, %v3163
        %v3165 = vrot.slane %v3127, 7
        %v3166 = vrot.slane %v3165, 2
        %v3167 = vrot.slane %v3128, 7
        %v3168 = vsel %vm563, %v3166, %v3167
        %v3169 = vrot.slane %v3135, 7
        %v3170 = vrot.slane %v3169, 2
        %v3171 = vrot.slane %v3136, 7
        %v3172 = vsel %vm563, %v3170, %v3171
        %v3173 = vrot.slane %v3143, 7
        %v3174 = vrot.slane %v3173, 2
        %v3175 = vrot.slane %v3144, 7
        %v3176 = vsel %vm563, %v3174, %v3175
        %v3177 = vld [vmem:[%s2837] sm:$0x3]
        %v3178 = vld [vmem:[%s2837 + $0x4] sm:$0x3]
        %v3179 = vld [vmem:[%s2837 + $0x8] sm:$0x3]
        %v3180 = vld [vmem:[%s2837 + $0xc] sm:$0x3]
        %v3181 = vld [vmem:[%s2837 + $0x10] sm:$0x3]
        %v3182 = vld [vmem:[%s2837 + $0x14] sm:$0x3]
        %v3183 = vld [vmem:[%s2837 + $0x18] sm:$0x3]
        %v3184 = vld [vmem:[%s2837 + $0x1c] sm:$0x3]
        %v3185 = vld [vmem:[%s2837] sm:$0x7]
        %v3186 = vld [vmem:[%s2837 + $0x4] sm:$0x7]
        %v3187 = vld [vmem:[%s2837 + $0x8] sm:$0x7]
        %v3188 = vld [vmem:[%s2837 + $0xc] sm:$0x7]
        %v3189 = vld [vmem:[%s2837 + $0x10] sm:$0x7]
        %v3190 = vld [vmem:[%s2837 + $0x14] sm:$0x7]
        %v3191 = vld [vmem:[%s2837 + $0x18] sm:$0x7]
        %v3192 = vld [vmem:[%s2837 + $0x1c] sm:$0x7]
        %v3202 = vunpack.c.l.s4 1983009808
        %v3203 = vunpack.c.0.s8 %v3202
        %v3204 = vlaneseq
        %v3205 = vshrl.u32 %v3204, 7
        %v3206 = vsub.s32 %v3203, %v3205
        %v3207 = vrot.slane %v3185, %v3206
        %v3208 = vcombine.high %v3207, %v3207
        %v3210 = vunpack.c.l.s4 1983009808
        %v3211 = vunpack.c.0.s8 %v3210
        %v3212 = vlaneseq
        %v3213 = vshrl.u32 %v3212, 7
        %v3214 = vsub.s32 %v3211, %v3213
        %v3215 = vrot.slane %v3186, %v3214
        %v3216 = vcombine.high %v3215, %v3215
        %v3218 = vunpack.c.l.s4 1983009808
        %v3219 = vunpack.c.0.s8 %v3218
        %v3220 = vlaneseq
        %v3221 = vshrl.u32 %v3220, 7
        %v3222 = vsub.s32 %v3219, %v3221
        %v3223 = vrot.slane %v3187, %v3222
        %v3224 = vcombine.high %v3223, %v3223
        %v3226 = vunpack.c.l.s4 1983009808
        %v3227 = vunpack.c.0.s8 %v3226
        %v3228 = vlaneseq
        %v3229 = vshrl.u32 %v3228, 7
        %v3230 = vsub.s32 %v3227, %v3229
        %v3231 = vrot.slane %v3188, %v3230
        %v3232 = vcombine.high %v3231, %v3231
        %v3234 = vunpack.c.l.s4 1983009808
        %v3235 = vunpack.c.0.s8 %v3234
        %v3236 = vlaneseq
        %v3237 = vshrl.u32 %v3236, 7
        %v3238 = vsub.s32 %v3235, %v3237
        %v3239 = vrot.slane %v3189, %v3238
        %v3240 = vcombine.high %v3239, %v3239
        %v3242 = vunpack.c.l.s4 1983009808
        %v3243 = vunpack.c.0.s8 %v3242
        %v3244 = vlaneseq
        %v3245 = vshrl.u32 %v3244, 7
        %v3246 = vsub.s32 %v3243, %v3245
        %v3247 = vrot.slane %v3190, %v3246
        %v3248 = vcombine.high %v3247, %v3247
        %v3250 = vunpack.c.l.s4 1983009808
        %v3251 = vunpack.c.0.s8 %v3250
        %v3252 = vlaneseq
        %v3253 = vshrl.u32 %v3252, 7
        %v3254 = vsub.s32 %v3251, %v3253
        %v3255 = vrot.slane %v3191, %v3254
        %v3256 = vcombine.high %v3255, %v3255
        %v3258 = vunpack.c.l.s4 1983009808
        %v3259 = vunpack.c.0.s8 %v3258
        %v3260 = vlaneseq
        %v3261 = vshrl.u32 %v3260, 7
        %v3262 = vsub.s32 %v3259, %v3261
        %v3263 = vrot.slane %v3192, %v3262
        %v3264 = vcombine.high %v3263, %v3263
        %v3266 = vshrl.u32 %v3207, 16
        %v3268 = vrot.slane %v3266, 6
        %v3269 = vshll.u32 %v3207, 16
        %v3271 = vrot.slane %v3269, 7
        %v3272 = vor.u32 %v3268, %v3271
        %v3273 = vrot.slane %v3272, 2
        %v3275 = vshll.u32 %v3208, 16
        %v3277 = vrot.slane %v3275, 7
        %v3278 = vsel %vm364, %v3273, %v3277
        %v3280 = vshrl.u32 %v3215, 16
        %v3282 = vrot.slane %v3280, 6
        %v3283 = vshll.u32 %v3215, 16
        %v3285 = vrot.slane %v3283, 7
        %v3286 = vor.u32 %v3282, %v3285
        %v3287 = vrot.slane %v3286, 2
        %v3289 = vshll.u32 %v3216, 16
        %v3291 = vrot.slane %v3289, 7
        %v3292 = vsel %vm364, %v3287, %v3291
        %v3294 = vshrl.u32 %v3223, 16
        %v3296 = vrot.slane %v3294, 6
        %v3297 = vshll.u32 %v3223, 16
        %v3299 = vrot.slane %v3297, 7
        %v3300 = vor.u32 %v3296, %v3299
        %v3301 = vrot.slane %v3300, 2
        %v3303 = vshll.u32 %v3224, 16
        %v3305 = vrot.slane %v3303, 7
        %v3306 = vsel %vm364, %v3301, %v3305
        %v3308 = vshrl.u32 %v3231, 16
        %v3310 = vrot.slane %v3308, 6
        %v3311 = vshll.u32 %v3231, 16
        %v3313 = vrot.slane %v3311, 7
        %v3314 = vor.u32 %v3310, %v3313
        %v3315 = vrot.slane %v3314, 2
        %v3317 = vshll.u32 %v3232, 16
        %v3319 = vrot.slane %v3317, 7
        %v3320 = vsel %vm364, %v3315, %v3319
        %v3322 = vshrl.u32 %v3239, 16
        %v3324 = vrot.slane %v3322, 6
        %v3325 = vshll.u32 %v3239, 16
        %v3327 = vrot.slane %v3325, 7
        %v3328 = vor.u32 %v3324, %v3327
        %v3329 = vrot.slane %v3328, 2
        %v3331 = vshll.u32 %v3240, 16
        %v3333 = vrot.slane %v3331, 7
        %v3334 = vsel %vm364, %v3329, %v3333
        %v3336 = vshrl.u32 %v3247, 16
        %v3338 = vrot.slane %v3336, 6
        %v3339 = vshll.u32 %v3247, 16
        %v3341 = vrot.slane %v3339, 7
        %v3342 = vor.u32 %v3338, %v3341
        %v3343 = vrot.slane %v3342, 2
        %v3345 = vshll.u32 %v3248, 16
        %v3347 = vrot.slane %v3345, 7
        %v3348 = vsel %vm364, %v3343, %v3347
        %v3350 = vshrl.u32 %v3255, 16
        %v3352 = vrot.slane %v3350, 6
        %v3353 = vshll.u32 %v3255, 16
        %v3355 = vrot.slane %v3353, 7
        %v3356 = vor.u32 %v3352, %v3355
        %v3357 = vrot.slane %v3356, 2
        %v3359 = vshll.u32 %v3256, 16
        %v3361 = vrot.slane %v3359, 7
        %v3362 = vsel %vm364, %v3357, %v3361
        %v3364 = vshrl.u32 %v3263, 16
        %v3366 = vrot.slane %v3364, 6
        %v3367 = vshll.u32 %v3263, 16
        %v3369 = vrot.slane %v3367, 7
        %v3370 = vor.u32 %v3366, %v3369
        %v3371 = vrot.slane %v3370, 2
        %v3373 = vshll.u32 %v3264, 16
        %v3375 = vrot.slane %v3373, 7
        %v3376 = vsel %vm364, %v3371, %v3375
        %v3377 = vld [vmem:[%s2837] sm:$0x6]
        %v3378 = vld [vmem:[%s2837 + $0x4] sm:$0x6]
        %v3379 = vld [vmem:[%s2837 + $0x8] sm:$0x6]
        %v3380 = vld [vmem:[%s2837 + $0xc] sm:$0x6]
        %v3381 = vld [vmem:[%s2837 + $0x10] sm:$0x6]
        %v3382 = vld [vmem:[%s2837 + $0x14] sm:$0x6]
        %v3383 = vld [vmem:[%s2837 + $0x18] sm:$0x6]
        %v3384 = vld [vmem:[%s2837 + $0x1c] sm:$0x6]
        %v3394 = vunpack.c.l.s4 1983009808
        %v3395 = vunpack.c.0.s8 %v3394
        %v3396 = vlaneseq
        %v3397 = vshrl.u32 %v3396, 7
        %v3398 = vsub.s32 %v3395, %v3397
        %v3399 = vrot.slane %v3377, %v3398
        %v3400 = vcombine.high %v3399, %v3399
        %v3402 = vunpack.c.l.s4 1983009808
        %v3403 = vunpack.c.0.s8 %v3402
        %v3404 = vlaneseq
        %v3405 = vshrl.u32 %v3404, 7
        %v3406 = vsub.s32 %v3403, %v3405
        %v3407 = vrot.slane %v3378, %v3406
        %v3408 = vcombine.high %v3407, %v3407
        %v3410 = vunpack.c.l.s4 1983009808
        %v3411 = vunpack.c.0.s8 %v3410
        %v3412 = vlaneseq
        %v3413 = vshrl.u32 %v3412, 7
        %v3414 = vsub.s32 %v3411, %v3413
        %v3415 = vrot.slane %v3379, %v3414
        %v3416 = vcombine.high %v3415, %v3415
        %v3418 = vunpack.c.l.s4 1983009808
        %v3419 = vunpack.c.0.s8 %v3418
        %v3420 = vlaneseq
        %v3421 = vshrl.u32 %v3420, 7
        %v3422 = vsub.s32 %v3419, %v3421
        %v3423 = vrot.slane %v3380, %v3422
        %v3424 = vcombine.high %v3423, %v3423
        %v3426 = vunpack.c.l.s4 1983009808
        %v3427 = vunpack.c.0.s8 %v3426
        %v3428 = vlaneseq
        %v3429 = vshrl.u32 %v3428, 7
        %v3430 = vsub.s32 %v3427, %v3429
        %v3431 = vrot.slane %v3381, %v3430
        %v3432 = vcombine.high %v3431, %v3431
        %v3434 = vunpack.c.l.s4 1983009808
        %v3435 = vunpack.c.0.s8 %v3434
        %v3436 = vlaneseq
        %v3437 = vshrl.u32 %v3436, 7
        %v3438 = vsub.s32 %v3435, %v3437
        %v3439 = vrot.slane %v3382, %v3438
        %v3440 = vcombine.high %v3439, %v3439
        %v3442 = vunpack.c.l.s4 1983009808
        %v3443 = vunpack.c.0.s8 %v3442
        %v3444 = vlaneseq
        %v3445 = vshrl.u32 %v3444, 7
        %v3446 = vsub.s32 %v3443, %v3445
        %v3447 = vrot.slane %v3383, %v3446
        %v3448 = vcombine.high %v3447, %v3447
        %v3450 = vunpack.c.l.s4 1983009808
        %v3451 = vunpack.c.0.s8 %v3450
        %v3452 = vlaneseq
        %v3453 = vshrl.u32 %v3452, 7
        %v3454 = vsub.s32 %v3451, %v3453
        %v3455 = vrot.slane %v3384, %v3454
        %v3456 = vcombine.high %v3455, %v3455
        %v3457 = vrot.slane %v3399, 7
        %v3458 = vrot.slane %v3457, 2
        %v3459 = vrot.slane %v3400, 7
        %v3460 = vsel %vm563, %v3458, %v3459
        %v3461 = vrot.slane %v3407, 7
        %v3462 = vrot.slane %v3461, 2
        %v3463 = vrot.slane %v3408, 7
        %v3464 = vsel %vm563, %v3462, %v3463
        %v3465 = vrot.slane %v3415, 7
        %v3466 = vrot.slane %v3465, 2
        %v3467 = vrot.slane %v3416, 7
        %v3468 = vsel %vm563, %v3466, %v3467
        %v3469 = vrot.slane %v3423, 7
        %v3470 = vrot.slane %v3469, 2
        %v3471 = vrot.slane %v3424, 7
        %v3472 = vsel %vm563, %v3470, %v3471
        %v3473 = vrot.slane %v3431, 7
        %v3474 = vrot.slane %v3473, 2
        %v3475 = vrot.slane %v3432, 7
        %v3476 = vsel %vm563, %v3474, %v3475
        %v3477 = vrot.slane %v3439, 7
        %v3478 = vrot.slane %v3477, 2
        %v3479 = vrot.slane %v3440, 7
        %v3480 = vsel %vm563, %v3478, %v3479
        %v3481 = vrot.slane %v3447, 7
        %v3482 = vrot.slane %v3481, 2
        %v3483 = vrot.slane %v3448, 7
        %v3484 = vsel %vm563, %v3482, %v3483
        %v3485 = vrot.slane %v3455, 7
        %v3486 = vrot.slane %v3485, 2
        %v3487 = vrot.slane %v3456, 7
        %v3488 = vsel %vm563, %v3486, %v3487
        %s3489 = scalar_lea.vmem [#allocation2], 8
        %v3490 = vld [vmem:[%s3489] sm:$0x3]
        %v3491 = vld [vmem:[%s3489 + $0x4] sm:$0x3]
        %v3492 = vld [vmem:[%s3489 + $0x8] sm:$0x3]
        %v3493 = vld [vmem:[%s3489 + $0xc] sm:$0x3]
        %v3494 = vld [vmem:[%s3489 + $0x10] sm:$0x3]
        %v3495 = vld [vmem:[%s3489 + $0x14] sm:$0x3]
        %v3496 = vld [vmem:[%s3489 + $0x18] sm:$0x3]
        %v3497 = vld [vmem:[%s3489 + $0x1c] sm:$0x3]
        %v3498 = vld [vmem:[%s3489] sm:$0x7]
        %v3499 = vld [vmem:[%s3489 + $0x4] sm:$0x7]
        %v3500 = vld [vmem:[%s3489 + $0x8] sm:$0x7]
        %v3501 = vld [vmem:[%s3489 + $0xc] sm:$0x7]
        %v3502 = vld [vmem:[%s3489 + $0x10] sm:$0x7]
        %v3503 = vld [vmem:[%s3489 + $0x14] sm:$0x7]
        %v3504 = vld [vmem:[%s3489 + $0x18] sm:$0x7]
        %v3505 = vld [vmem:[%s3489 + $0x1c] sm:$0x7]
        %v3515 = vunpack.c.l.s4 1983009808
        %v3516 = vunpack.c.0.s8 %v3515
        %v3517 = vlaneseq
        %v3518 = vshrl.u32 %v3517, 7
        %v3519 = vsub.s32 %v3516, %v3518
        %v3520 = vrot.slane %v3498, %v3519
        %v3521 = vcombine.high %v3520, %v3520
        %v3523 = vunpack.c.l.s4 1983009808
        %v3524 = vunpack.c.0.s8 %v3523
        %v3525 = vlaneseq
        %v3526 = vshrl.u32 %v3525, 7
        %v3527 = vsub.s32 %v3524, %v3526
        %v3528 = vrot.slane %v3499, %v3527
        %v3529 = vcombine.high %v3528, %v3528
        %v3531 = vunpack.c.l.s4 1983009808
        %v3532 = vunpack.c.0.s8 %v3531
        %v3533 = vlaneseq
        %v3534 = vshrl.u32 %v3533, 7
        %v3535 = vsub.s32 %v3532, %v3534
        %v3536 = vrot.slane %v3500, %v3535
        %v3537 = vcombine.high %v3536, %v3536
        %v3539 = vunpack.c.l.s4 1983009808
        %v3540 = vunpack.c.0.s8 %v3539
        %v3541 = vlaneseq
        %v3542 = vshrl.u32 %v3541, 7
        %v3543 = vsub.s32 %v3540, %v3542
        %v3544 = vrot.slane %v3501, %v3543
        %v3545 = vcombine.high %v3544, %v3544
        %v3547 = vunpack.c.l.s4 1983009808
        %v3548 = vunpack.c.0.s8 %v3547
        %v3549 = vlaneseq
        %v3550 = vshrl.u32 %v3549, 7
        %v3551 = vsub.s32 %v3548, %v3550
        %v3552 = vrot.slane %v3502, %v3551
        %v3553 = vcombine.high %v3552, %v3552
        %v3555 = vunpack.c.l.s4 1983009808
        %v3556 = vunpack.c.0.s8 %v3555
        %v3557 = vlaneseq
        %v3558 = vshrl.u32 %v3557, 7
        %v3559 = vsub.s32 %v3556, %v3558
        %v3560 = vrot.slane %v3503, %v3559
        %v3561 = vcombine.high %v3560, %v3560
        %v3563 = vunpack.c.l.s4 1983009808
        %v3564 = vunpack.c.0.s8 %v3563
        %v3565 = vlaneseq
        %v3566 = vshrl.u32 %v3565, 7
        %v3567 = vsub.s32 %v3564, %v3566
        %v3568 = vrot.slane %v3504, %v3567
        %v3569 = vcombine.high %v3568, %v3568
        %v3571 = vunpack.c.l.s4 1983009808
        %v3572 = vunpack.c.0.s8 %v3571
        %v3573 = vlaneseq
        %v3574 = vshrl.u32 %v3573, 7
        %v3575 = vsub.s32 %v3572, %v3574
        %v3576 = vrot.slane %v3505, %v3575
        %v3577 = vcombine.high %v3576, %v3576
        %v3579 = vshrl.u32 %v3520, 16
        %v3581 = vrot.slane %v3579, 6
        %v3582 = vshll.u32 %v3520, 16
        %v3584 = vrot.slane %v3582, 7
        %v3585 = vor.u32 %v3581, %v3584
        %v3586 = vrot.slane %v3585, 2
        %v3588 = vshll.u32 %v3521, 16
        %v3590 = vrot.slane %v3588, 7
        %v3591 = vsel %vm364, %v3586, %v3590
        %v3593 = vshrl.u32 %v3528, 16
        %v3595 = vrot.slane %v3593, 6
        %v3596 = vshll.u32 %v3528, 16
        %v3598 = vrot.slane %v3596, 7
        %v3599 = vor.u32 %v3595, %v3598
        %v3600 = vrot.slane %v3599, 2
        %v3602 = vshll.u32 %v3529, 16
        %v3604 = vrot.slane %v3602, 7
        %v3605 = vsel %vm364, %v3600, %v3604
        %v3607 = vshrl.u32 %v3536, 16
        %v3609 = vrot.slane %v3607, 6
        %v3610 = vshll.u32 %v3536, 16
        %v3612 = vrot.slane %v3610, 7
        %v3613 = vor.u32 %v3609, %v3612
        %v3614 = vrot.slane %v3613, 2
        %v3616 = vshll.u32 %v3537, 16
        %v3618 = vrot.slane %v3616, 7
        %v3619 = vsel %vm364, %v3614, %v3618
        %v3621 = vshrl.u32 %v3544, 16
        %v3623 = vrot.slane %v3621, 6
        %v3624 = vshll.u32 %v3544, 16
        %v3626 = vrot.slane %v3624, 7
        %v3627 = vor.u32 %v3623, %v3626
        %v3628 = vrot.slane %v3627, 2
        %v3630 = vshll.u32 %v3545, 16
        %v3632 = vrot.slane %v3630, 7
        %v3633 = vsel %vm364, %v3628, %v3632
        %v3635 = vshrl.u32 %v3552, 16
        %v3637 = vrot.slane %v3635, 6
        %v3638 = vshll.u32 %v3552, 16
        %v3640 = vrot.slane %v3638, 7
        %v3641 = vor.u32 %v3637, %v3640
        %v3642 = vrot.slane %v3641, 2
        %v3644 = vshll.u32 %v3553, 16
        %v3646 = vrot.slane %v3644, 7
        %v3647 = vsel %vm364, %v3642, %v3646
        %v3649 = vshrl.u32 %v3560, 16
        %v3651 = vrot.slane %v3649, 6
        %v3652 = vshll.u32 %v3560, 16
        %v3654 = vrot.slane %v3652, 7
        %v3655 = vor.u32 %v3651, %v3654
        %v3656 = vrot.slane %v3655, 2
        %v3658 = vshll.u32 %v3561, 16
        %v3660 = vrot.slane %v3658, 7
        %v3661 = vsel %vm364, %v3656, %v3660
        %v3663 = vshrl.u32 %v3568, 16
        %v3665 = vrot.slane %v3663, 6
        %v3666 = vshll.u32 %v3568, 16
        %v3668 = vrot.slane %v3666, 7
        %v3669 = vor.u32 %v3665, %v3668
        %v3670 = vrot.slane %v3669, 2
        %v3672 = vshll.u32 %v3569, 16
        %v3674 = vrot.slane %v3672, 7
        %v3675 = vsel %vm364, %v3670, %v3674
        %v3677 = vshrl.u32 %v3576, 16
        %v3679 = vrot.slane %v3677, 6
        %v3680 = vshll.u32 %v3576, 16
        %v3682 = vrot.slane %v3680, 7
        %v3683 = vor.u32 %v3679, %v3682
        %v3684 = vrot.slane %v3683, 2
        %v3686 = vshll.u32 %v3577, 16
        %v3688 = vrot.slane %v3686, 7
        %v3689 = vsel %vm364, %v3684, %v3688
        %v3690 = vld [vmem:[%s3489] sm:$0x6]
        %v3691 = vld [vmem:[%s3489 + $0x4] sm:$0x6]
        %v3692 = vld [vmem:[%s3489 + $0x8] sm:$0x6]
        %v3693 = vld [vmem:[%s3489 + $0xc] sm:$0x6]
        %v3694 = vld [vmem:[%s3489 + $0x10] sm:$0x6]
        %v3695 = vld [vmem:[%s3489 + $0x14] sm:$0x6]
        %v3696 = vld [vmem:[%s3489 + $0x18] sm:$0x6]
        %v3697 = vld [vmem:[%s3489 + $0x1c] sm:$0x6]
        %v3707 = vunpack.c.l.s4 1983009808
        %v3708 = vunpack.c.0.s8 %v3707
        %v3709 = vlaneseq
        %v3710 = vshrl.u32 %v3709, 7
        %v3711 = vsub.s32 %v3708, %v3710
        %v3712 = vrot.slane %v3690, %v3711
        %v3713 = vcombine.high %v3712, %v3712
        %v3715 = vunpack.c.l.s4 1983009808
        %v3716 = vunpack.c.0.s8 %v3715
        %v3717 = vlaneseq
        %v3718 = vshrl.u32 %v3717, 7
        %v3719 = vsub.s32 %v3716, %v3718
        %v3720 = vrot.slane %v3691, %v3719
        %v3721 = vcombine.high %v3720, %v3720
        %v3723 = vunpack.c.l.s4 1983009808
        %v3724 = vunpack.c.0.s8 %v3723
        %v3725 = vlaneseq
        %v3726 = vshrl.u32 %v3725, 7
        %v3727 = vsub.s32 %v3724, %v3726
        %v3728 = vrot.slane %v3692, %v3727
        %v3729 = vcombine.high %v3728, %v3728
        %v3731 = vunpack.c.l.s4 1983009808
        %v3732 = vunpack.c.0.s8 %v3731
        %v3733 = vlaneseq
        %v3734 = vshrl.u32 %v3733, 7
        %v3735 = vsub.s32 %v3732, %v3734
        %v3736 = vrot.slane %v3693, %v3735
        %v3737 = vcombine.high %v3736, %v3736
        %v3739 = vunpack.c.l.s4 1983009808
        %v3740 = vunpack.c.0.s8 %v3739
        %v3741 = vlaneseq
        %v3742 = vshrl.u32 %v3741, 7
        %v3743 = vsub.s32 %v3740, %v3742
        %v3744 = vrot.slane %v3694, %v3743
        %v3745 = vcombine.high %v3744, %v3744
        %v3747 = vunpack.c.l.s4 1983009808
        %v3748 = vunpack.c.0.s8 %v3747
        %v3749 = vlaneseq
        %v3750 = vshrl.u32 %v3749, 7
        %v3751 = vsub.s32 %v3748, %v3750
        %v3752 = vrot.slane %v3695, %v3751
        %v3753 = vcombine.high %v3752, %v3752
        %v3755 = vunpack.c.l.s4 1983009808
        %v3756 = vunpack.c.0.s8 %v3755
        %v3757 = vlaneseq
        %v3758 = vshrl.u32 %v3757, 7
        %v3759 = vsub.s32 %v3756, %v3758
        %v3760 = vrot.slane %v3696, %v3759
        %v3761 = vcombine.high %v3760, %v3760
        %v3763 = vunpack.c.l.s4 1983009808
        %v3764 = vunpack.c.0.s8 %v3763
        %v3765 = vlaneseq
        %v3766 = vshrl.u32 %v3765, 7
        %v3767 = vsub.s32 %v3764, %v3766
        %v3768 = vrot.slane %v3697, %v3767
        %v3769 = vcombine.high %v3768, %v3768
        %v3770 = vrot.slane %v3712, 7
        %v3771 = vrot.slane %v3770, 2
        %v3772 = vrot.slane %v3713, 7
        %v3773 = vsel %vm563, %v3771, %v3772
        %v3774 = vrot.slane %v3720, 7
        %v3775 = vrot.slane %v3774, 2
        %v3776 = vrot.slane %v3721, 7
        %v3777 = vsel %vm563, %v3775, %v3776
        %v3778 = vrot.slane %v3728, 7
        %v3779 = vrot.slane %v3778, 2
        %v3780 = vrot.slane %v3729, 7
        %v3781 = vsel %vm563, %v3779, %v3780
        %v3782 = vrot.slane %v3736, 7
        %v3783 = vrot.slane %v3782, 2
        %v3784 = vrot.slane %v3737, 7
        %v3785 = vsel %vm563, %v3783, %v3784
        %v3786 = vrot.slane %v3744, 7
        %v3787 = vrot.slane %v3786, 2
        %v3788 = vrot.slane %v3745, 7
        %v3789 = vsel %vm563, %v3787, %v3788
        %v3790 = vrot.slane %v3752, 7
        %v3791 = vrot.slane %v3790, 2
        %v3792 = vrot.slane %v3753, 7
        %v3793 = vsel %vm563, %v3791, %v3792
        %v3794 = vrot.slane %v3760, 7
        %v3795 = vrot.slane %v3794, 2
        %v3796 = vrot.slane %v3761, 7
        %v3797 = vsel %vm563, %v3795, %v3796
        %v3798 = vrot.slane %v3768, 7
        %v3799 = vrot.slane %v3798, 2
        %v3800 = vrot.slane %v3769, 7
        %v3801 = vsel %vm563, %v3799, %v3800
        %v3810 = vcombine.low %v2865, %v2866
        %v3811 = vcombine.low %v2867, %v2868
        %v3813 = vunpack.c.l.s4 1983009808
        %v3814 = vunpack.c.0.s8 %v3813
        %v3815 = vlaneseq
        %v3816 = vshrl.u32 %v3815, 7
        %v3817 = vsub.s32 %v3814, %v3816
        %v3818 = vrot.slane %v3810, %v3817
        %v3820 = vunpack.c.l.s4 1983009808
        %v3821 = vunpack.c.0.s8 %v3820
        %v3822 = vlaneseq
        %v3823 = vshrl.u32 %v3822, 7
        %v3824 = vsub.s32 %v3821, %v3823
        %v3825 = vrot.slane %v3811, %v3824
        %v3826 = vcombine.low %v3818, %v3825
        %v3827 = vcombine.low %v2869, %v2870
        %v3828 = vcombine.low %v2871, %v2872
        %v3830 = vunpack.c.l.s4 1983009808
        %v3831 = vunpack.c.0.s8 %v3830
        %v3832 = vlaneseq
        %v3833 = vshrl.u32 %v3832, 7
        %v3834 = vsub.s32 %v3831, %v3833
        %v3835 = vrot.slane %v3827, %v3834
        %v3837 = vunpack.c.l.s4 1983009808
        %v3838 = vunpack.c.0.s8 %v3837
        %v3839 = vlaneseq
        %v3840 = vshrl.u32 %v3839, 7
        %v3841 = vsub.s32 %v3838, %v3840
        %v3842 = vrot.slane %v3828, %v3841
        %v3843 = vcombine.low %v3835, %v3842
        %v3846 = vcombine.low %v2966, %v2980
        %v3847 = vcombine.low %v2994, %v3008
        %v3849 = vunpack.c.l.s4 1983009808
        %v3850 = vunpack.c.0.s8 %v3849
        %v3851 = vlaneseq
        %v3852 = vshrl.u32 %v3851, 7
        %v3853 = vsub.s32 %v3850, %v3852
        %v3854 = vrot.slane %v3846, %v3853
        %v3856 = vunpack.c.l.s4 1983009808
        %v3857 = vunpack.c.0.s8 %v3856
        %v3858 = vlaneseq
        %v3859 = vshrl.u32 %v3858, 7
        %v3860 = vsub.s32 %v3857, %v3859
        %v3861 = vrot.slane %v3847, %v3860
        %v3862 = vcombine.low %v3854, %v3861
        %v3863 = vcombine.low %v3022, %v3036
        %v3864 = vcombine.low %v3050, %v3064
        %v3866 = vunpack.c.l.s4 1983009808
        %v3867 = vunpack.c.0.s8 %v3866
        %v3868 = vlaneseq
        %v3869 = vshrl.u32 %v3868, 7
        %v3870 = vsub.s32 %v3867, %v3869
        %v3871 = vrot.slane %v3863, %v3870
        %v3873 = vunpack.c.l.s4 1983009808
        %v3874 = vunpack.c.0.s8 %v3873
        %v3875 = vlaneseq
        %v3876 = vshrl.u32 %v3875, 7
        %v3877 = vsub.s32 %v3874, %v3876
        %v3878 = vrot.slane %v3864, %v3877
        %v3879 = vcombine.low %v3871, %v3878
        %v3882 = vcombine.low %v3148, %v3152
        %v3883 = vcombine.low %v3156, %v3160
        %v3885 = vunpack.c.l.s4 1983009808
        %v3886 = vunpack.c.0.s8 %v3885
        %v3887 = vlaneseq
        %v3888 = vshrl.u32 %v3887, 7
        %v3889 = vsub.s32 %v3886, %v3888
        %v3890 = vrot.slane %v3882, %v3889
        %v3892 = vunpack.c.l.s4 1983009808
        %v3893 = vunpack.c.0.s8 %v3892
        %v3894 = vlaneseq
        %v3895 = vshrl.u32 %v3894, 7
        %v3896 = vsub.s32 %v3893, %v3895
        %v3897 = vrot.slane %v3883, %v3896
        %v3898 = vcombine.low %v3890, %v3897
        %v3899 = vcombine.low %v3164, %v3168
        %v3900 = vcombine.low %v3172, %v3176
        %v3902 = vunpack.c.l.s4 1983009808
        %v3903 = vunpack.c.0.s8 %v3902
        %v3904 = vlaneseq
        %v3905 = vshrl.u32 %v3904, 7
        %v3906 = vsub.s32 %v3903, %v3905
        %v3907 = vrot.slane %v3899, %v3906
        %v3909 = vunpack.c.l.s4 1983009808
        %v3910 = vunpack.c.0.s8 %v3909
        %v3911 = vlaneseq
        %v3912 = vshrl.u32 %v3911, 7
        %v3913 = vsub.s32 %v3910, %v3912
        %v3914 = vrot.slane %v3900, %v3913
        %v3915 = vcombine.low %v3907, %v3914
        %v3926 = vcombine.low %v3177, %v3178
        %v3927 = vcombine.low %v3179, %v3180
        %v3929 = vunpack.c.l.s4 1983009808
        %v3930 = vunpack.c.0.s8 %v3929
        %v3931 = vlaneseq
        %v3932 = vshrl.u32 %v3931, 7
        %v3933 = vsub.s32 %v3930, %v3932
        %v3934 = vrot.slane %v3926, %v3933
        %v3936 = vunpack.c.l.s4 1983009808
        %v3937 = vunpack.c.0.s8 %v3936
        %v3938 = vlaneseq
        %v3939 = vshrl.u32 %v3938, 7
        %v3940 = vsub.s32 %v3937, %v3939
        %v3941 = vrot.slane %v3927, %v3940
        %v3942 = vcombine.low %v3934, %v3941
        %v3943 = vcombine.low %v3181, %v3182
        %v3944 = vcombine.low %v3183, %v3184
        %v3946 = vunpack.c.l.s4 1983009808
        %v3947 = vunpack.c.0.s8 %v3946
        %v3948 = vlaneseq
        %v3949 = vshrl.u32 %v3948, 7
        %v3950 = vsub.s32 %v3947, %v3949
        %v3951 = vrot.slane %v3943, %v3950
        %v3953 = vunpack.c.l.s4 1983009808
        %v3954 = vunpack.c.0.s8 %v3953
        %v3955 = vlaneseq
        %v3956 = vshrl.u32 %v3955, 7
        %v3957 = vsub.s32 %v3954, %v3956
        %v3958 = vrot.slane %v3944, %v3957
        %v3959 = vcombine.low %v3951, %v3958
        %v3962 = vcombine.low %v3278, %v3292
        %v3963 = vcombine.low %v3306, %v3320
        %v3965 = vunpack.c.l.s4 1983009808
        %v3966 = vunpack.c.0.s8 %v3965
        %v3967 = vlaneseq
        %v3968 = vshrl.u32 %v3967, 7
        %v3969 = vsub.s32 %v3966, %v3968
        %v3970 = vrot.slane %v3962, %v3969
        %v3972 = vunpack.c.l.s4 1983009808
        %v3973 = vunpack.c.0.s8 %v3972
        %v3974 = vlaneseq
        %v3975 = vshrl.u32 %v3974, 7
        %v3976 = vsub.s32 %v3973, %v3975
        %v3977 = vrot.slane %v3963, %v3976
        %v3978 = vcombine.low %v3970, %v3977
        %v3979 = vcombine.low %v3334, %v3348
        %v3980 = vcombine.low %v3362, %v3376
        %v3982 = vunpack.c.l.s4 1983009808
        %v3983 = vunpack.c.0.s8 %v3982
        %v3984 = vlaneseq
        %v3985 = vshrl.u32 %v3984, 7
        %v3986 = vsub.s32 %v3983, %v3985
        %v3987 = vrot.slane %v3979, %v3986
        %v3989 = vunpack.c.l.s4 1983009808
        %v3990 = vunpack.c.0.s8 %v3989
        %v3991 = vlaneseq
        %v3992 = vshrl.u32 %v3991, 7
        %v3993 = vsub.s32 %v3990, %v3992
        %v3994 = vrot.slane %v3980, %v3993
        %v3995 = vcombine.low %v3987, %v3994
        %v3998 = vcombine.low %v3460, %v3464
        %v3999 = vcombine.low %v3468, %v3472
        %v4001 = vunpack.c.l.s4 1983009808
        %v4002 = vunpack.c.0.s8 %v4001
        %v4003 = vlaneseq
        %v4004 = vshrl.u32 %v4003, 7
        %v4005 = vsub.s32 %v4002, %v4004
        %v4006 = vrot.slane %v3998, %v4005
        %v4008 = vunpack.c.l.s4 1983009808
        %v4009 = vunpack.c.0.s8 %v4008
        %v4010 = vlaneseq
        %v4011 = vshrl.u32 %v4010, 7
        %v4012 = vsub.s32 %v4009, %v4011
        %v4013 = vrot.slane %v3999, %v4012
        %v4014 = vcombine.low %v4006, %v4013
        %v4015 = vcombine.low %v3476, %v3480
        %v4016 = vcombine.low %v3484, %v3488
        %v4018 = vunpack.c.l.s4 1983009808
        %v4019 = vunpack.c.0.s8 %v4018
        %v4020 = vlaneseq
        %v4021 = vshrl.u32 %v4020, 7
        %v4022 = vsub.s32 %v4019, %v4021
        %v4023 = vrot.slane %v4015, %v4022
        %v4025 = vunpack.c.l.s4 1983009808
        %v4026 = vunpack.c.0.s8 %v4025
        %v4027 = vlaneseq
        %v4028 = vshrl.u32 %v4027, 7
        %v4029 = vsub.s32 %v4026, %v4028
        %v4030 = vrot.slane %v4016, %v4029
        %v4031 = vcombine.low %v4023, %v4030
        %v4042 = vcombine.low %v3490, %v3491
        %v4043 = vcombine.low %v3492, %v3493
        %v4045 = vunpack.c.l.s4 1983009808
        %v4046 = vunpack.c.0.s8 %v4045
        %v4047 = vlaneseq
        %v4048 = vshrl.u32 %v4047, 7
        %v4049 = vsub.s32 %v4046, %v4048
        %v4050 = vrot.slane %v4042, %v4049
        %v4052 = vunpack.c.l.s4 1983009808
        %v4053 = vunpack.c.0.s8 %v4052
        %v4054 = vlaneseq
        %v4055 = vshrl.u32 %v4054, 7
        %v4056 = vsub.s32 %v4053, %v4055
        %v4057 = vrot.slane %v4043, %v4056
        %v4058 = vcombine.low %v4050, %v4057
        %v4059 = vcombine.low %v3494, %v3495
        %v4060 = vcombine.low %v3496, %v3497
        %v4062 = vunpack.c.l.s4 1983009808
        %v4063 = vunpack.c.0.s8 %v4062
        %v4064 = vlaneseq
        %v4065 = vshrl.u32 %v4064, 7
        %v4066 = vsub.s32 %v4063, %v4065
        %v4067 = vrot.slane %v4059, %v4066
        %v4069 = vunpack.c.l.s4 1983009808
        %v4070 = vunpack.c.0.s8 %v4069
        %v4071 = vlaneseq
        %v4072 = vshrl.u32 %v4071, 7
        %v4073 = vsub.s32 %v4070, %v4072
        %v4074 = vrot.slane %v4060, %v4073
        %v4075 = vcombine.low %v4067, %v4074
        %v4078 = vcombine.low %v3591, %v3605
        %v4079 = vcombine.low %v3619, %v3633
        %v4081 = vunpack.c.l.s4 1983009808
        %v4082 = vunpack.c.0.s8 %v4081
        %v4083 = vlaneseq
        %v4084 = vshrl.u32 %v4083, 7
        %v4085 = vsub.s32 %v4082, %v4084
        %v4086 = vrot.slane %v4078, %v4085
        %v4088 = vunpack.c.l.s4 1983009808
        %v4089 = vunpack.c.0.s8 %v4088
        %v4090 = vlaneseq
        %v4091 = vshrl.u32 %v4090, 7
        %v4092 = vsub.s32 %v4089, %v4091
        %v4093 = vrot.slane %v4079, %v4092
        %v4094 = vcombine.low %v4086, %v4093
        %v4095 = vcombine.low %v3647, %v3661
        %v4096 = vcombine.low %v3675, %v3689
        %v4098 = vunpack.c.l.s4 1983009808
        %v4099 = vunpack.c.0.s8 %v4098
        %v4100 = vlaneseq
        %v4101 = vshrl.u32 %v4100, 7
        %v4102 = vsub.s32 %v4099, %v4101
        %v4103 = vrot.slane %v4095, %v4102
        %v4105 = vunpack.c.l.s4 1983009808
        %v4106 = vunpack.c.0.s8 %v4105
        %v4107 = vlaneseq
        %v4108 = vshrl.u32 %v4107, 7
        %v4109 = vsub.s32 %v4106, %v4108
        %v4110 = vrot.slane %v4096, %v4109
        %v4111 = vcombine.low %v4103, %v4110
        %v4114 = vcombine.low %v3773, %v3777
        %v4115 = vcombine.low %v3781, %v3785
        %v4117 = vunpack.c.l.s4 1983009808
        %v4118 = vunpack.c.0.s8 %v4117
        %v4119 = vlaneseq
        %v4120 = vshrl.u32 %v4119, 7
        %v4121 = vsub.s32 %v4118, %v4120
        %v4122 = vrot.slane %v4114, %v4121
        %v4124 = vunpack.c.l.s4 1983009808
        %v4125 = vunpack.c.0.s8 %v4124
        %v4126 = vlaneseq
        %v4127 = vshrl.u32 %v4126, 7
        %v4128 = vsub.s32 %v4125, %v4127
        %v4129 = vrot.slane %v4115, %v4128
        %v4130 = vcombine.low %v4122, %v4129
        %v4131 = vcombine.low %v3789, %v3793
        %v4132 = vcombine.low %v3797, %v3801
        %v4134 = vunpack.c.l.s4 1983009808
        %v4135 = vunpack.c.0.s8 %v4134
        %v4136 = vlaneseq
        %v4137 = vshrl.u32 %v4136, 7
        %v4138 = vsub.s32 %v4135, %v4137
        %v4139 = vrot.slane %v4131, %v4138
        %v4141 = vunpack.c.l.s4 1983009808
        %v4142 = vunpack.c.0.s8 %v4141
        %v4143 = vlaneseq
        %v4144 = vshrl.u32 %v4143, 7
        %v4145 = vsub.s32 %v4142, %v4144
        %v4146 = vrot.slane %v4132, %v4145
        %v4147 = vcombine.low %v4139, %v4146
        %v4150 = vld [vmem:[#allocation6] sm:$0xf]
        %v4151 = vld [vmem:[#allocation6 + $0x4] sm:$0xf]
        %v4152 = vld [vmem:[#allocation6 + $0x8] sm:$0xf]
        %v4153 = vld [vmem:[#allocation6 + $0xc] sm:$0xf]
        %v4154 = vld [vmem:[#allocation6 + $0x10] sm:$0xf]
        %v4155 = vld [vmem:[#allocation6 + $0x14] sm:$0xf]
        %v4156 = vld [vmem:[#allocation6 + $0x18] sm:$0xf]
        %v4157 = vld [vmem:[#allocation6 + $0x1c] sm:$0xf]
        %v4158 = vld [vmem:[#allocation6 + $0x20] sm:$0xf]
        %v4159 = vld [vmem:[#allocation6 + $0x24] sm:$0xf]
        %v4160 = vld [vmem:[#allocation6 + $0x28] sm:$0xf]
        %v4161 = vld [vmem:[#allocation6 + $0x2c] sm:$0xf]
        %v4162 = vld [vmem:[#allocation6 + $0x30] sm:$0xf]
        %v4163 = vld [vmem:[#allocation6 + $0x34] sm:$0xf]
        %v4164 = vld [vmem:[#allocation6 + $0x38] sm:$0xf]
        %v4165 = vld [vmem:[#allocation6 + $0x3c] sm:$0xf]
        %v4166 = vld [vmem:[#allocation6 + $0x40] sm:$0xf]
        %v4167 = vld [vmem:[#allocation6 + $0x44] sm:$0xf]
        %v4168 = vld [vmem:[#allocation6 + $0x48] sm:$0xf]
        %v4169 = vld [vmem:[#allocation6 + $0x4c] sm:$0xf]
        %v4170 = vld [vmem:[#allocation6 + $0x50] sm:$0xf]
        %v4171 = vld [vmem:[#allocation6 + $0x54] sm:$0xf]
        %v4172 = vld [vmem:[#allocation6 + $0x58] sm:$0xf]
        %v4173 = vld [vmem:[#allocation6 + $0x5c] sm:$0xf]
        %v4174 = vld [vmem:[#allocation6 + $0x60] sm:$0xf]
        %v4175 = vld [vmem:[#allocation6 + $0x64] sm:$0xf]
        %v4176 = vld [vmem:[#allocation6 + $0x68] sm:$0xf]
        %v4177 = vld [vmem:[#allocation6 + $0x6c] sm:$0xf]
        %v4178 = vld [vmem:[#allocation6 + $0x70] sm:$0xf]
        %v4179 = vld [vmem:[#allocation6 + $0x74] sm:$0xf]
        %v4180 = vld [vmem:[#allocation6 + $0x78] sm:$0xf]
        %v4181 = vld [vmem:[#allocation6 + $0x7c] sm:$0xf]
        %v4182 = vld [vmem:[#allocation6 + $0x80] sm:$0xf]
        %v4183 = vld [vmem:[#allocation6 + $0x84] sm:$0xf]
        %v4184 = vld [vmem:[#allocation6 + $0x88] sm:$0xf]
        %v4185 = vld [vmem:[#allocation6 + $0x8c] sm:$0xf]
        %v4186 = vld [vmem:[#allocation6 + $0x90] sm:$0xf]
        %v4187 = vld [vmem:[#allocation6 + $0x94] sm:$0xf]
        %v4188 = vld [vmem:[#allocation6 + $0x98] sm:$0xf]
        %v4189 = vld [vmem:[#allocation6 + $0x9c] sm:$0xf]
        %v4190 = vld [vmem:[#allocation6 + $0xa0] sm:$0xf]
        %v4191 = vld [vmem:[#allocation6 + $0xa4] sm:$0xf]
        %v4192 = vld [vmem:[#allocation6 + $0xa8] sm:$0xf]
        %v4193 = vld [vmem:[#allocation6 + $0xac] sm:$0xf]
        %v4194 = vld [vmem:[#allocation6 + $0xb0] sm:$0xf]
        %v4195 = vld [vmem:[#allocation6 + $0xb4] sm:$0xf]
        %v4196 = vld [vmem:[#allocation6 + $0xb8] sm:$0xf]
        %v4197 = vld [vmem:[#allocation6 + $0xbc] sm:$0xf]
        %v4198 = vld [vmem:[#allocation6 + $0xc0] sm:$0xf]
        %v4199 = vld [vmem:[#allocation6 + $0xc4] sm:$0xf]
        %v4200 = vld [vmem:[#allocation6 + $0xc8] sm:$0xf]
        %v4201 = vld [vmem:[#allocation6 + $0xcc] sm:$0xf]
        %v4202 = vld [vmem:[#allocation6 + $0xd0] sm:$0xf]
        %v4203 = vld [vmem:[#allocation6 + $0xd4] sm:$0xf]
        %v4204 = vld [vmem:[#allocation6 + $0xd8] sm:$0xf]
        %v4205 = vld [vmem:[#allocation6 + $0xdc] sm:$0xf]
        %v4206 = vld [vmem:[#allocation6 + $0xe0] sm:$0xf]
        %v4207 = vld [vmem:[#allocation6 + $0xe4] sm:$0xf]
        %v4208 = vld [vmem:[#allocation6 + $0xe8] sm:$0xf]
        %v4209 = vld [vmem:[#allocation6 + $0xec] sm:$0xf]
        %v4210 = vld [vmem:[#allocation6 + $0xf0] sm:$0xf]
        %v4211 = vld [vmem:[#allocation6 + $0xf4] sm:$0xf]
        %v4212 = vld [vmem:[#allocation6 + $0xf8] sm:$0xf]
        %v4213 = vld [vmem:[#allocation6 + $0xfc] sm:$0xf]
        %v4214 = vld [vmem:[#allocation6 + $0x100] sm:$0xf]
        %v4215 = vld [vmem:[#allocation6 + $0x104] sm:$0xf]
        %v4216 = vld [vmem:[#allocation6 + $0x108] sm:$0xf]
        %v4217 = vld [vmem:[#allocation6 + $0x10c] sm:$0xf]
        %v4218 = vld [vmem:[#allocation6 + $0x110] sm:$0xf]
        %v4219 = vld [vmem:[#allocation6 + $0x114] sm:$0xf]
        %v4220 = vld [vmem:[#allocation6 + $0x118] sm:$0xf]
        %v4221 = vld [vmem:[#allocation6 + $0x11c] sm:$0xf]
        %v4222 = vld [vmem:[#allocation6 + $0x120] sm:$0xf]
        %v4223 = vld [vmem:[#allocation6 + $0x124] sm:$0xf]
        %v4224 = vld [vmem:[#allocation6 + $0x128] sm:$0xf]
        %v4225 = vld [vmem:[#allocation6 + $0x12c] sm:$0xf]
        %v4226 = vld [vmem:[#allocation6 + $0x130] sm:$0xf]
        %v4227 = vld [vmem:[#allocation6 + $0x134] sm:$0xf]
        %v4228 = vld [vmem:[#allocation6 + $0x138] sm:$0xf]
        %v4229 = vld [vmem:[#allocation6 + $0x13c] sm:$0xf]
        %v4230 = vld [vmem:[#allocation6 + $0x140] sm:$0xf]
        %v4231 = vld [vmem:[#allocation6 + $0x144] sm:$0xf]
        %v4232 = vld [vmem:[#allocation6 + $0x148] sm:$0xf]
        %v4233 = vld [vmem:[#allocation6 + $0x14c] sm:$0xf]
        %v4234 = vld [vmem:[#allocation6 + $0x150] sm:$0xf]
        %v4235 = vld [vmem:[#allocation6 + $0x154] sm:$0xf]
        %v4236 = vld [vmem:[#allocation6 + $0x158] sm:$0xf]
        %v4237 = vld [vmem:[#allocation6 + $0x15c] sm:$0xf]
        %v4238 = vld [vmem:[#allocation6 + $0x160] sm:$0xf]
        %v4239 = vld [vmem:[#allocation6 + $0x164] sm:$0xf]
        %v4240 = vld [vmem:[#allocation6 + $0x168] sm:$0xf]
        %v4241 = vld [vmem:[#allocation6 + $0x16c] sm:$0xf]
        %v4242 = vld [vmem:[#allocation6 + $0x170] sm:$0xf]
        %v4243 = vld [vmem:[#allocation6 + $0x174] sm:$0xf]
        %v4244 = vld [vmem:[#allocation6 + $0x178] sm:$0xf]
        %v4245 = vld [vmem:[#allocation6 + $0x17c] sm:$0xf]
        %v4246 = vld [vmem:[#allocation6 + $0x180] sm:$0xf]
        %v4247 = vld [vmem:[#allocation6 + $0x184] sm:$0xf]
        %v4248 = vld [vmem:[#allocation6 + $0x188] sm:$0xf]
        %v4249 = vld [vmem:[#allocation6 + $0x18c] sm:$0xf]
        %v4250 = vld [vmem:[#allocation6 + $0x190] sm:$0xf]
        %v4251 = vld [vmem:[#allocation6 + $0x194] sm:$0xf]
        %v4252 = vld [vmem:[#allocation6 + $0x198] sm:$0xf]
        %v4253 = vld [vmem:[#allocation6 + $0x19c] sm:$0xf]
        %v4254 = vld [vmem:[#allocation6 + $0x1a0] sm:$0xf]
        %v4255 = vld [vmem:[#allocation6 + $0x1a4] sm:$0xf]
        %v4256 = vld [vmem:[#allocation6 + $0x1a8] sm:$0xf]
        %v4257 = vld [vmem:[#allocation6 + $0x1ac] sm:$0xf]
        %v4258 = vld [vmem:[#allocation6 + $0x1b0] sm:$0xf]
        %v4259 = vld [vmem:[#allocation6 + $0x1b4] sm:$0xf]
        %v4260 = vld [vmem:[#allocation6 + $0x1b8] sm:$0xf]
        %v4261 = vld [vmem:[#allocation6 + $0x1bc] sm:$0xf]
        %v4262 = vld [vmem:[#allocation6 + $0x1c0] sm:$0xf]
        %v4263 = vld [vmem:[#allocation6 + $0x1c4] sm:$0xf]
        %v4264 = vld [vmem:[#allocation6 + $0x1c8] sm:$0xf]
        %v4265 = vld [vmem:[#allocation6 + $0x1cc] sm:$0xf]
        %v4266 = vld [vmem:[#allocation6 + $0x1d0] sm:$0xf]
        %v4267 = vld [vmem:[#allocation6 + $0x1d4] sm:$0xf]
        %v4268 = vld [vmem:[#allocation6 + $0x1d8] sm:$0xf]
        %v4269 = vld [vmem:[#allocation6 + $0x1dc] sm:$0xf]
        %v4270 = vld [vmem:[#allocation6 + $0x1e0] sm:$0xf]
        %v4271 = vld [vmem:[#allocation6 + $0x1e4] sm:$0xf]
        %v4272 = vld [vmem:[#allocation6 + $0x1e8] sm:$0xf]
        %v4273 = vld [vmem:[#allocation6 + $0x1ec] sm:$0xf]
        %v4274 = vld [vmem:[#allocation6 + $0x1f0] sm:$0xf]
        %v4275 = vld [vmem:[#allocation6 + $0x1f4] sm:$0xf]
        %v4276 = vld [vmem:[#allocation6 + $0x1f8] sm:$0xf]
        %v4277 = vld [vmem:[#allocation6 + $0x1fc] sm:$0xf]
        %v4278 = vld [vmem:[#allocation6 + $0x200] sm:$0xf]
        %v4279 = vld [vmem:[#allocation6 + $0x204] sm:$0xf]
        %v4280 = vld [vmem:[#allocation6 + $0x208] sm:$0xf]
        %v4281 = vld [vmem:[#allocation6 + $0x20c] sm:$0xf]
        %v4282 = vld [vmem:[#allocation6 + $0x210] sm:$0xf]
        %v4283 = vld [vmem:[#allocation6 + $0x214] sm:$0xf]
        %v4284 = vld [vmem:[#allocation6 + $0x218] sm:$0xf]
        %v4285 = vld [vmem:[#allocation6 + $0x21c] sm:$0xf]
        %v4286 = vld [vmem:[#allocation6 + $0x220] sm:$0xf]
        %v4287 = vld [vmem:[#allocation6 + $0x224] sm:$0xf]
        %v4288 = vld [vmem:[#allocation6 + $0x228] sm:$0xf]
        %v4289 = vld [vmem:[#allocation6 + $0x22c] sm:$0xf]
        %v4290 = vld [vmem:[#allocation6 + $0x230] sm:$0xf]
        %v4291 = vld [vmem:[#allocation6 + $0x234] sm:$0xf]
        %v4292 = vld [vmem:[#allocation6 + $0x238] sm:$0xf]
        %v4293 = vld [vmem:[#allocation6 + $0x23c] sm:$0xf]
        %v4294 = vld [vmem:[%s596] sm:$0x7]
        %v4295 = vld [vmem:[%s596 + $0x4] sm:$0x7]
        %v4296 = vld [vmem:[%s596 + $0x8] sm:$0x7]
        %v4297 = vld [vmem:[%s596 + $0xc] sm:$0x7]
        %v4298 = vld [vmem:[%s596 + $0x10] sm:$0x7]
        %v4299 = vld [vmem:[%s596 + $0x14] sm:$0x7]
        %v4300 = vld [vmem:[%s596 + $0x18] sm:$0x7]
        %v4301 = vld [vmem:[%s596 + $0x1c] sm:$0x7]
        %v4302 = vunpack.c.l.bf16 %v4294
        %v4303 = vunpack.c.l.bf16 %v4295
        %v4304 = vunpack.c.l.bf16 %v4296
        %v4305 = vunpack.c.l.bf16 %v4297
        %v4306 = vunpack.c.l.bf16 %v4298
        %v4307 = vunpack.c.l.bf16 %v4299
        %v4308 = vunpack.c.l.bf16 %v4300
        %v4309 = vunpack.c.l.bf16 %v4301
        %v4318 = vcombine.high %v4302, %v4302
        %v4319 = vcombine.high %v4303, %v4303
        %v4320 = vcombine.high %v4304, %v4304
        %v4321 = vcombine.high %v4305, %v4305
        %v4322 = vcombine.high %v4306, %v4306
        %v4323 = vcombine.high %v4307, %v4307
        %v4324 = vcombine.high %v4308, %v4308
        %v4325 = vcombine.high %v4309, %v4309
        %vm4326 = vcmask 1042432
        %vm4327 = vcmask 1046532
        %vm4328 = vmor %vm4326, %vm4327
        %v4329 = vrot.slane %v4302, 5
        %v4330 = vrot.slane %v4329, 4
        %v4331 = vrot.slane %v4318, 5
        %v4332 = vsel %vm4328, %v4330, %v4331
        %v4333 = vrot.slane %v4303, 5
        %v4334 = vrot.slane %v4333, 4
        %v4335 = vrot.slane %v4319, 5
        %v4336 = vsel %vm4328, %v4334, %v4335
        %v4337 = vrot.slane %v4304, 5
        %v4338 = vrot.slane %v4337, 4
        %v4339 = vrot.slane %v4320, 5
        %v4340 = vsel %vm4328, %v4338, %v4339
        %v4341 = vrot.slane %v4305, 5
        %v4342 = vrot.slane %v4341, 4
        %v4343 = vrot.slane %v4321, 5
        %v4344 = vsel %vm4328, %v4342, %v4343
        %v4345 = vrot.slane %v4306, 5
        %v4346 = vrot.slane %v4345, 4
        %v4347 = vrot.slane %v4322, 5
        %v4348 = vsel %vm4328, %v4346, %v4347
        %v4349 = vrot.slane %v4307, 5
        %v4350 = vrot.slane %v4349, 4
        %v4351 = vrot.slane %v4323, 5
        %v4352 = vsel %vm4328, %v4350, %v4351
        %v4353 = vrot.slane %v4308, 5
        %v4354 = vrot.slane %v4353, 4
        %v4355 = vrot.slane %v4324, 5
        %v4356 = vsel %vm4328, %v4354, %v4355
        %v4357 = vrot.slane %v4309, 5
        %v4358 = vrot.slane %v4357, 4
        %v4359 = vrot.slane %v4325, 5
        %v4360 = vsel %vm4328, %v4358, %v4359
        %v4361 = vld [vmem:[%s4 + $0x2] sm:$0x1]
        %v4362 = vlaneseq
        %v4363 = vshrl.u32 %v4362, 7
        %v4364 = vsub.s32 0, %v4363
        %v4365 = vrot.slane %v4361, %v4364
        %v4510 = vunpack.c.l.b16 %v4150
        %v4511 = vunpack.c.l.b16 %v4151
        %v4512 = vunpack.c.l.b16 %v4152
        %v4513 = vunpack.c.l.b16 %v4153
        %v4514 = vunpack.c.l.b16 %v4154
        %v4515 = vunpack.c.l.b16 %v4155
        %v4516 = vunpack.c.l.b16 %v4156
        %v4517 = vunpack.c.l.b16 %v4157
        %v4518 = vunpack.c.l.b16 %v4158
        %v4519 = vunpack.c.l.b16 %v4159
        %v4520 = vunpack.c.l.b16 %v4160
        %v4521 = vunpack.c.l.b16 %v4161
        %v4522 = vunpack.c.l.b16 %v4162
        %v4523 = vunpack.c.l.b16 %v4163
        %v4524 = vunpack.c.l.b16 %v4164
        %v4525 = vunpack.c.l.b16 %v4165
        %v4526 = vunpack.c.l.b16 %v4166
        %v4527 = vunpack.c.l.b16 %v4167
        %v4528 = vunpack.c.l.b16 %v4168
        %v4529 = vunpack.c.l.b16 %v4169
        %v4530 = vunpack.c.l.b16 %v4170
        %v4531 = vunpack.c.l.b16 %v4171
        %v4532 = vunpack.c.l.b16 %v4172
        %v4533 = vunpack.c.l.b16 %v4173
        %v4534 = vunpack.c.l.b16 %v4174
        %v4535 = vunpack.c.l.b16 %v4175
        %v4536 = vunpack.c.l.b16 %v4176
        %v4537 = vunpack.c.l.b16 %v4177
        %v4538 = vunpack.c.l.b16 %v4178
        %v4539 = vunpack.c.l.b16 %v4179
        %v4540 = vunpack.c.l.b16 %v4180
        %v4541 = vunpack.c.l.b16 %v4181
        %v4542 = vunpack.c.l.b16 %v4182
        %v4543 = vunpack.c.l.b16 %v4183
        %v4544 = vunpack.c.l.b16 %v4184
        %v4545 = vunpack.c.l.b16 %v4185
        %v4546 = vunpack.c.l.b16 %v4186
        %v4547 = vunpack.c.l.b16 %v4187
        %v4548 = vunpack.c.l.b16 %v4188
        %v4549 = vunpack.c.l.b16 %v4189
        %v4550 = vunpack.c.l.b16 %v4190
        %v4551 = vunpack.c.l.b16 %v4191
        %v4552 = vunpack.c.l.b16 %v4192
        %v4553 = vunpack.c.l.b16 %v4193
        %v4554 = vunpack.c.l.b16 %v4194
        %v4555 = vunpack.c.l.b16 %v4195
        %v4556 = vunpack.c.l.b16 %v4196
        %v4557 = vunpack.c.l.b16 %v4197
        %v4558 = vunpack.c.l.b16 %v4198
        %v4559 = vunpack.c.l.b16 %v4199
        %v4560 = vunpack.c.l.b16 %v4200
        %v4561 = vunpack.c.l.b16 %v4201
        %v4562 = vunpack.c.l.b16 %v4202
        %v4563 = vunpack.c.l.b16 %v4203
        %v4564 = vunpack.c.l.b16 %v4204
        %v4565 = vunpack.c.l.b16 %v4205
        %v4566 = vunpack.c.l.b16 %v4206
        %v4567 = vunpack.c.l.b16 %v4207
        %v4568 = vunpack.c.l.b16 %v4208
        %v4569 = vunpack.c.l.b16 %v4209
        %v4570 = vunpack.c.l.b16 %v4210
        %v4571 = vunpack.c.l.b16 %v4211
        %v4572 = vunpack.c.l.b16 %v4212
        %v4573 = vunpack.c.l.b16 %v4213
        %v4574 = vunpack.c.l.b16 %v4214
        %v4575 = vunpack.c.l.b16 %v4215
        %v4576 = vunpack.c.l.b16 %v4216
        %v4577 = vunpack.c.l.b16 %v4217
        %v4578 = vunpack.c.l.b16 %v4218
        %v4579 = vunpack.c.l.b16 %v4219
        %v4580 = vunpack.c.l.b16 %v4220
        %v4581 = vunpack.c.l.b16 %v4221
        %v4582 = vunpack.c.l.b16 %v4222
        %v4583 = vunpack.c.l.b16 %v4223
        %v4584 = vunpack.c.l.b16 %v4224
        %v4585 = vunpack.c.l.b16 %v4225
        %v4586 = vunpack.c.l.b16 %v4226
        %v4587 = vunpack.c.l.b16 %v4227
        %v4588 = vunpack.c.l.b16 %v4228
        %v4589 = vunpack.c.l.b16 %v4229
        %v4590 = vunpack.c.l.b16 %v4230
        %v4591 = vunpack.c.l.b16 %v4231
        %v4592 = vunpack.c.l.b16 %v4232
        %v4593 = vunpack.c.l.b16 %v4233
        %v4594 = vunpack.c.l.b16 %v4234
        %v4595 = vunpack.c.l.b16 %v4235
        %v4596 = vunpack.c.l.b16 %v4236
        %v4597 = vunpack.c.l.b16 %v4237
        %v4598 = vunpack.c.l.b16 %v4238
        %v4599 = vunpack.c.l.b16 %v4239
        %v4600 = vunpack.c.l.b16 %v4240
        %v4601 = vunpack.c.l.b16 %v4241
        %v4602 = vunpack.c.l.b16 %v4242
        %v4603 = vunpack.c.l.b16 %v4243
        %v4604 = vunpack.c.l.b16 %v4244
        %v4605 = vunpack.c.l.b16 %v4245
        %v4606 = vunpack.c.l.b16 %v4246
        %v4607 = vunpack.c.l.b16 %v4247
        %v4608 = vunpack.c.l.b16 %v4248
        %v4609 = vunpack.c.l.b16 %v4249
        %v4610 = vunpack.c.l.b16 %v4250
        %v4611 = vunpack.c.l.b16 %v4251
        %v4612 = vunpack.c.l.b16 %v4252
        %v4613 = vunpack.c.l.b16 %v4253
        %v4614 = vunpack.c.l.b16 %v4254
        %v4615 = vunpack.c.l.b16 %v4255
        %v4616 = vunpack.c.l.b16 %v4256
        %v4617 = vunpack.c.l.b16 %v4257
        %v4618 = vunpack.c.l.b16 %v4258
        %v4619 = vunpack.c.l.b16 %v4259
        %v4620 = vunpack.c.l.b16 %v4260
        %v4621 = vunpack.c.l.b16 %v4261
        %v4622 = vunpack.c.l.b16 %v4262
        %v4623 = vunpack.c.l.b16 %v4263
        %v4624 = vunpack.c.l.b16 %v4264
        %v4625 = vunpack.c.l.b16 %v4265
        %v4626 = vunpack.c.l.b16 %v4266
        %v4627 = vunpack.c.l.b16 %v4267
        %v4628 = vunpack.c.l.b16 %v4268
        %v4629 = vunpack.c.l.b16 %v4269
        %v4630 = vunpack.c.l.b16 %v4270
        %v4631 = vunpack.c.l.b16 %v4271
        %v4632 = vunpack.c.l.b16 %v4272
        %v4633 = vunpack.c.l.b16 %v4273
        %v4634 = vunpack.c.l.b16 %v4274
        %v4635 = vunpack.c.l.b16 %v4275
        %v4636 = vunpack.c.l.b16 %v4276
        %v4637 = vunpack.c.l.b16 %v4277
        %v4638 = vunpack.c.l.b16 %v4278
        %v4639 = vunpack.c.l.b16 %v4279
        %v4640 = vunpack.c.l.b16 %v4280
        %v4641 = vunpack.c.l.b16 %v4281
        %v4642 = vunpack.c.l.b16 %v4282
        %v4643 = vunpack.c.l.b16 %v4283
        %v4644 = vunpack.c.l.b16 %v4284
        %v4645 = vunpack.c.l.b16 %v4285
        %v4646 = vunpack.c.l.b16 %v4286
        %v4647 = vunpack.c.l.b16 %v4287
        %v4648 = vunpack.c.l.b16 %v4288
        %v4649 = vunpack.c.l.b16 %v4289
        %v4650 = vunpack.c.l.b16 %v4290
        %v4651 = vunpack.c.l.b16 %v4291
        %v4652 = vunpack.c.l.b16 %v4292
        %v4653 = vunpack.c.l.b16 %v4293
        %v4654 = vpack.c.b16 %v4511, %v4510
        %v4655 = vpack.c.b16 %v4513, %v4512
        %v4656 = vpack.c.b16 %v4515, %v4514
        %v4657 = vpack.c.b16 %v4517, %v4516
        %v4658 = vpack.c.b16 %v4519, %v4518
        %v4659 = vpack.c.b16 %v4521, %v4520
        %v4660 = vpack.c.b16 %v4523, %v4522
        %v4661 = vpack.c.b16 %v4525, %v4524
        %v4662 = vpack.c.b16 %v4527, %v4526
        %v4663 = vpack.c.b16 %v4529, %v4528
        %v4664 = vpack.c.b16 %v4531, %v4530
        %v4665 = vpack.c.b16 %v4533, %v4532
        %v4666 = vpack.c.b16 %v4535, %v4534
        %v4667 = vpack.c.b16 %v4537, %v4536
        %v4668 = vpack.c.b16 %v4539, %v4538
        %v4669 = vpack.c.b16 %v4541, %v4540
        %v4670 = vpack.c.b16 %v4543, %v4542
        %v4671 = vpack.c.b16 %v4545, %v4544
        %v4672 = vpack.c.b16 %v4547, %v4546
        %v4673 = vpack.c.b16 %v4549, %v4548
        %v4674 = vpack.c.b16 %v4551, %v4550
        %v4675 = vpack.c.b16 %v4553, %v4552
        %v4676 = vpack.c.b16 %v4555, %v4554
        %v4677 = vpack.c.b16 %v4557, %v4556
        %v4678 = vpack.c.b16 %v4559, %v4558
        %v4679 = vpack.c.b16 %v4561, %v4560
        %v4680 = vpack.c.b16 %v4563, %v4562
        %v4681 = vpack.c.b16 %v4565, %v4564
        %v4682 = vpack.c.b16 %v4567, %v4566
        %v4683 = vpack.c.b16 %v4569, %v4568
        %v4684 = vpack.c.b16 %v4571, %v4570
        %v4685 = vpack.c.b16 %v4573, %v4572
        %v4686 = vpack.c.b16 %v4575, %v4574
        %v4687 = vpack.c.b16 %v4577, %v4576
        %v4688 = vpack.c.b16 %v4579, %v4578
        %v4689 = vpack.c.b16 %v4581, %v4580
        %v4690 = vpack.c.b16 %v4583, %v4582
        %v4691 = vpack.c.b16 %v4585, %v4584
        %v4692 = vpack.c.b16 %v4587, %v4586
        %v4693 = vpack.c.b16 %v4589, %v4588
        %v4694 = vpack.c.b16 %v4591, %v4590
        %v4695 = vpack.c.b16 %v4593, %v4592
        %v4696 = vpack.c.b16 %v4595, %v4594
        %v4697 = vpack.c.b16 %v4597, %v4596
        %v4698 = vpack.c.b16 %v4599, %v4598
        %v4699 = vpack.c.b16 %v4601, %v4600
        %v4700 = vpack.c.b16 %v4603, %v4602
        %v4701 = vpack.c.b16 %v4605, %v4604
        %v4702 = vpack.c.b16 %v4607, %v4606
        %v4703 = vpack.c.b16 %v4609, %v4608
        %v4704 = vpack.c.b16 %v4611, %v4610
        %v4705 = vpack.c.b16 %v4613, %v4612
        %v4706 = vpack.c.b16 %v4615, %v4614
        %v4707 = vpack.c.b16 %v4617, %v4616
        %v4708 = vpack.c.b16 %v4619, %v4618
        %v4709 = vpack.c.b16 %v4621, %v4620
        %v4710 = vpack.c.b16 %v4623, %v4622
        %v4711 = vpack.c.b16 %v4625, %v4624
        %v4712 = vpack.c.b16 %v4627, %v4626
        %v4713 = vpack.c.b16 %v4629, %v4628
        %v4714 = vpack.c.b16 %v4631, %v4630
        %v4715 = vpack.c.b16 %v4633, %v4632
        %v4716 = vpack.c.b16 %v4635, %v4634
        %v4717 = vpack.c.b16 %v4637, %v4636
        %v4718 = vpack.c.b16 %v4639, %v4638
        %v4719 = vpack.c.b16 %v4641, %v4640
        %v4720 = vpack.c.b16 %v4643, %v4642
        %v4721 = vpack.c.b16 %v4645, %v4644
        %v4722 = vpack.c.b16 %v4647, %v4646
        %v4723 = vpack.c.b16 %v4649, %v4648
        %v4724 = vpack.c.b16 %v4651, %v4650
        %v4725 = vpack.c.b16 %v4653, %v4652
        %4798 = vmatprep.subr.bf16.mxu0 0
        %4799 = vmatpush1.bf16.msra.mxu0 %v4661
        %4800 = vmatprep.subr.bf16.mxu0 0
        %4801 = vmatpush1.bf16.msra.mxu0 %v4660
        %4802 = vmatprep.subr.bf16.mxu0 0
        %4803 = vmatpush1.bf16.msra.mxu0 %v4659
        %4804 = vmatprep.subr.bf16.mxu0 0
        %4805 = vmatpush1.bf16.msra.mxu0 %v4658
        %4806 = vmatprep.subr.bf16.mxu0 0
        %4807 = vmatpush1.bf16.msra.mxu0 %v4657
        %4808 = vmatprep.subr.bf16.mxu0 0
        %4809 = vmatpush1.bf16.msra.mxu0 %v4656
        %4810 = vmatprep.subr.bf16.mxu0 0
        %4811 = vmatpush1.bf16.msra.mxu0 %v4655
        %4812 = vmatprep.subr.bf16.mxu0 0
        %4813 = vmatpush1.bf16.msra.mxu0 %v4654
        %4814 = vmatprep.subr.bf16.mxu0 0
        %4815 = vmatpush2.bf16.msra.mxu0 %v4669
        %4816 = vmatprep.subr.bf16.mxu0 0
        %4817 = vmatpush2.bf16.msra.mxu0 %v4668
        %4818 = vmatprep.subr.bf16.mxu0 0
        %4819 = vmatpush2.bf16.msra.mxu0 %v4667
        %4820 = vmatprep.subr.bf16.mxu0 0
        %4821 = vmatpush2.bf16.msra.mxu0 %v4666
        %4822 = vmatprep.subr.bf16.mxu0 0
        %4823 = vmatpush2.bf16.msra.mxu0 %v4665
        %4824 = vmatprep.subr.bf16.mxu0 0
        %4825 = vmatpush2.bf16.msra.mxu0 %v4664
        %4826 = vmatprep.subr.bf16.mxu0 0
        %4827 = vmatpush2.bf16.msra.mxu0 %v4663
        %4828 = vmatprep.subr.bf16.mxu0 0
        %4829 = vmatpush2.bf16.msra.mxu0 %v4662
        %4830 = vmatprep.mubr.bf16.mxu0 %v3862
        %4831 = vmatmul.mubr.bf16.gmra.mxu0 %v3826
        %v4832 = vpop.f32.mrf.mxu0
        %v4833 = vadd.f32 %v4365, %v4832
        %v4834 = vpop.f32.mrf.mxu0
        %v4835 = vpop.f32.mrf.mxu0
        %v4836 = vadd.f32 %v4365, %v4835
        %v4837 = vpop.f32.mrf.mxu0
        %4838 = vmatprep.mubr.bf16.mxu0 %v3879
        %4839 = vmatmul.mubr.bf16.gmra.mxu0 %v3843
        %v4840 = vpop.f32.mrf.mxu0
        %v4841 = vadd.f32 %v4365, %v4840
        %v4842 = vpop.f32.mrf.mxu0
        %v4843 = vpop.f32.mrf.mxu0
        %v4844 = vadd.f32 %v4365, %v4843
        %v4845 = vpop.f32.mrf.mxu0
        %4846 = vdwg.mxu0
        %4847 = vmatprep.subr.bf16.mxu0 0
        %4848 = vmatpush1.bf16.msra.mxu0 %v4677
        %4849 = vmatprep.subr.bf16.mxu0 0
        %4850 = vmatpush1.bf16.msra.mxu0 %v4676
        %4851 = vmatprep.subr.bf16.mxu0 0
        %4852 = vmatpush1.bf16.msra.mxu0 %v4675
        %4853 = vmatprep.subr.bf16.mxu0 0
        %4854 = vmatpush1.bf16.msra.mxu0 %v4674
        %4855 = vmatprep.subr.bf16.mxu0 0
        %4856 = vmatpush1.bf16.msra.mxu0 %v4673
        %4857 = vmatprep.subr.bf16.mxu0 0
        %4858 = vmatpush1.bf16.msra.mxu0 %v4672
        %4859 = vmatprep.subr.bf16.mxu0 0
        %4860 = vmatpush1.bf16.msra.mxu0 %v4671
        %4861 = vmatprep.subr.bf16.mxu0 0
        %4862 = vmatpush1.bf16.msra.mxu0 %v4670
        %4863 = vmatprep.subr.bf16.mxu0 0
        %4864 = vmatpush2.bf16.msra.mxu0 %v4685
        %4865 = vmatprep.subr.bf16.mxu0 0
        %4866 = vmatpush2.bf16.msra.mxu0 %v4684
        %4867 = vmatprep.subr.bf16.mxu0 0
        %4868 = vmatpush2.bf16.msra.mxu0 %v4683
        %4869 = vmatprep.subr.bf16.mxu0 0
        %4870 = vmatpush2.bf16.msra.mxu0 %v4682
        %4871 = vmatprep.subr.bf16.mxu0 0
        %4872 = vmatpush2.bf16.msra.mxu0 %v4681
        %4873 = vmatprep.subr.bf16.mxu0 0
        %4874 = vmatpush2.bf16.msra.mxu0 %v4680
        %4875 = vmatprep.subr.bf16.mxu0 0
        %4876 = vmatpush2.bf16.msra.mxu0 %v4679
        %4877 = vmatprep.subr.bf16.mxu0 0
        %4878 = vmatpush2.bf16.msra.mxu0 %v4678
        %4879 = vmatprep.mubr.bf16.mxu0 %v3942
        %4880 = vmatmul.mubr.bf16.gmra.mxu0 %v3898
        %v4881 = vpop.f32.mrf.mxu0
        %v4882 = vadd.f32 %v4833, %v4881
        %v4883 = vpop.f32.mrf.mxu0
        %v4884 = vpop.f32.mrf.mxu0
        %v4885 = vadd.f32 %v4836, %v4884
        %v4886 = vpop.f32.mrf.mxu0
        %4887 = vmatprep.mubr.bf16.mxu0 %v3959
        %4888 = vmatmul.mubr.bf16.gmra.mxu0 %v3915
        %v4889 = vpop.f32.mrf.mxu0
        %v4890 = vadd.f32 %v4841, %v4889
        %v4891 = vpop.f32.mrf.mxu0
        %v4892 = vpop.f32.mrf.mxu0
        %v4893 = vadd.f32 %v4844, %v4892
        %v4894 = vpop.f32.mrf.mxu0
        %4895 = vdwg.mxu0
        %4896 = vmatprep.subr.bf16.mxu0 0
        %4897 = vmatpush1.bf16.msra.mxu0 %v4693
        %4898 = vmatprep.subr.bf16.mxu0 0
        %4899 = vmatpush1.bf16.msra.mxu0 %v4692
        %4900 = vmatprep.subr.bf16.mxu0 0
        %4901 = vmatpush1.bf16.msra.mxu0 %v4691
        %4902 = vmatprep.subr.bf16.mxu0 0
        %4903 = vmatpush1.bf16.msra.mxu0 %v4690
        %4904 = vmatprep.subr.bf16.mxu0 0
        %4905 = vmatpush1.bf16.msra.mxu0 %v4689
        %4906 = vmatprep.subr.bf16.mxu0 0
        %4907 = vmatpush1.bf16.msra.mxu0 %v4688
        %4908 = vmatprep.subr.bf16.mxu0 0
        %4909 = vmatpush1.bf16.msra.mxu0 %v4687
        %4910 = vmatprep.subr.bf16.mxu0 0
        %4911 = vmatpush1.bf16.msra.mxu0 %v4686
        %4912 = vmatprep.subr.bf16.mxu0 0
        %4913 = vmatpush2.bf16.msra.mxu0 %v4701
        %4914 = vmatprep.subr.bf16.mxu0 0
        %4915 = vmatpush2.bf16.msra.mxu0 %v4700
        %4916 = vmatprep.subr.bf16.mxu0 0
        %4917 = vmatpush2.bf16.msra.mxu0 %v4699
        %4918 = vmatprep.subr.bf16.mxu0 0
        %4919 = vmatpush2.bf16.msra.mxu0 %v4698
        %4920 = vmatprep.subr.bf16.mxu0 0
        %4921 = vmatpush2.bf16.msra.mxu0 %v4697
        %4922 = vmatprep.subr.bf16.mxu0 0
        %4923 = vmatpush2.bf16.msra.mxu0 %v4696
        %4924 = vmatprep.subr.bf16.mxu0 0
        %4925 = vmatpush2.bf16.msra.mxu0 %v4695
        %4926 = vmatprep.subr.bf16.mxu0 0
        %4927 = vmatpush2.bf16.msra.mxu0 %v4694
        %4928 = vmatprep.mubr.bf16.mxu0 %v4014
        %4929 = vmatmul.mubr.bf16.gmra.mxu0 %v3978
        %v4930 = vpop.f32.mrf.mxu0
        %v4931 = vadd.f32 %v4882, %v4930
        %v4932 = vpop.f32.mrf.mxu0
        %v4933 = vpop.f32.mrf.mxu0
        %v4934 = vadd.f32 %v4885, %v4933
        %v4935 = vpop.f32.mrf.mxu0
        %4936 = vmatprep.mubr.bf16.mxu0 %v4031
        %4937 = vmatmul.mubr.bf16.gmra.mxu0 %v3995
        %v4938 = vpop.f32.mrf.mxu0
        %v4939 = vadd.f32 %v4890, %v4938
        %v4940 = vpop.f32.mrf.mxu0
        %v4941 = vpop.f32.mrf.mxu0
        %v4942 = vadd.f32 %v4893, %v4941
        %v4943 = vpop.f32.mrf.mxu0
        %4944 = vdwg.mxu0
        %4945 = vmatprep.subr.bf16.mxu0 0
        %4946 = vmatpush1.bf16.msra.mxu0 %v4709
        %4947 = vmatprep.subr.bf16.mxu0 0
        %4948 = vmatpush1.bf16.msra.mxu0 %v4708
        %4949 = vmatprep.subr.bf16.mxu0 0
        %4950 = vmatpush1.bf16.msra.mxu0 %v4707
        %4951 = vmatprep.subr.bf16.mxu0 0
        %4952 = vmatpush1.bf16.msra.mxu0 %v4706
        %4953 = vmatprep.subr.bf16.mxu0 0
        %4954 = vmatpush1.bf16.msra.mxu0 %v4705
        %4955 = vmatprep.subr.bf16.mxu0 0
        %4956 = vmatpush1.bf16.msra.mxu0 %v4704
        %4957 = vmatprep.subr.bf16.mxu0 0
        %4958 = vmatpush1.bf16.msra.mxu0 %v4703
        %4959 = vmatprep.subr.bf16.mxu0 0
        %4960 = vmatpush1.bf16.msra.mxu0 %v4702
        %4961 = vmatprep.subr.bf16.mxu0 0
        %4962 = vmatpush2.bf16.msra.mxu0 %v4717
        %4963 = vmatprep.subr.bf16.mxu0 0
        %4964 = vmatpush2.bf16.msra.mxu0 %v4716
        %4965 = vmatprep.subr.bf16.mxu0 0
        %4966 = vmatpush2.bf16.msra.mxu0 %v4715
        %4967 = vmatprep.subr.bf16.mxu0 0
        %4968 = vmatpush2.bf16.msra.mxu0 %v4714
        %4969 = vmatprep.subr.bf16.mxu0 0
        %4970 = vmatpush2.bf16.msra.mxu0 %v4713
        %4971 = vmatprep.subr.bf16.mxu0 0
        %4972 = vmatpush2.bf16.msra.mxu0 %v4712
        %4973 = vmatprep.subr.bf16.mxu0 0
        %4974 = vmatpush2.bf16.msra.mxu0 %v4711
        %4975 = vmatprep.subr.bf16.mxu0 0
        %4976 = vmatpush2.bf16.msra.mxu0 %v4710
        %4977 = vmatprep.mubr.bf16.mxu0 %v4094
        %4978 = vmatmul.mubr.bf16.gmra.mxu0 %v4058
        %v4979 = vpop.f32.mrf.mxu0
        %v4980 = vadd.f32 %v4931, %v4979
        %v4981 = vpop.f32.mrf.mxu0
        %v4982 = vpop.f32.mrf.mxu0
        %v4983 = vadd.f32 %v4934, %v4982
        %v4984 = vpop.f32.mrf.mxu0
        %4985 = vmatprep.mubr.bf16.mxu0 %v4111
        %4986 = vmatmul.mubr.bf16.gmra.mxu0 %v4075
        %v4987 = vpop.f32.mrf.mxu0
        %v4988 = vadd.f32 %v4939, %v4987
        %v4989 = vpop.f32.mrf.mxu0
        %v4990 = vpop.f32.mrf.mxu0
        %v4991 = vadd.f32 %v4942, %v4990
        %v4992 = vpop.f32.mrf.mxu0
        %4993 = vdwg.mxu0
        %4994 = vmatprep.subr.bf16.mxu0 0
        %4995 = vmatpush1.bf16.msra.mxu0 %v4725
        %4996 = vmatprep.subr.bf16.mxu0 0
        %4997 = vmatpush1.bf16.msra.mxu0 %v4724
        %4998 = vmatprep.subr.bf16.mxu0 0
        %4999 = vmatpush1.bf16.msra.mxu0 %v4723
        %5000 = vmatprep.subr.bf16.mxu0 0
        %5001 = vmatpush1.bf16.msra.mxu0 %v4722
        %5002 = vmatprep.subr.bf16.mxu0 0
        %5003 = vmatpush1.bf16.msra.mxu0 %v4721
        %5004 = vmatprep.subr.bf16.mxu0 0
        %5005 = vmatpush1.bf16.msra.mxu0 %v4720
        %5006 = vmatprep.subr.bf16.mxu0 0
        %5007 = vmatpush1.bf16.msra.mxu0 %v4719
        %5008 = vmatprep.subr.bf16.mxu0 0
        %5009 = vmatpush1.bf16.msra.mxu0 %v4718
        %5010 = vmatprep.subr.bf16.mxu0 0
        %5011 = vmatpush2.bf16.msra.mxu0 0
        %5012 = vmatprep.subr.bf16.mxu0 0
        %5013 = vmatpush2.bf16.msra.mxu0 0
        %5014 = vmatprep.subr.bf16.mxu0 0
        %5015 = vmatpush2.bf16.msra.mxu0 0
        %5016 = vmatprep.subr.bf16.mxu0 0
        %5017 = vmatpush2.bf16.msra.mxu0 0
        %5018 = vmatprep.subr.bf16.mxu0 0
        %5019 = vmatpush2.bf16.msra.mxu0 0
        %5020 = vmatprep.subr.bf16.mxu0 0
        %5021 = vmatpush2.bf16.msra.mxu0 0
        %5022 = vmatprep.subr.bf16.mxu0 0
        %5023 = vmatpush2.bf16.msra.mxu0 0
        %5024 = vmatprep.subr.bf16.mxu0 0
        %5025 = vmatpush2.bf16.msra.mxu0 0
        %5026 = vmatprep.mubr.bf16.mxu0 0
        %5027 = vmatmul.mubr.bf16.gmra.mxu0 %v4130
        %v5028 = vpop.f32.mrf.mxu0
        %v5029 = vadd.f32 %v4980, %v5028
        %v5030 = vpop.f32.mrf.mxu0
        %v5031 = vpop.f32.mrf.mxu0
        %v5032 = vadd.f32 %v4983, %v5031
        %v5033 = vpop.f32.mrf.mxu0
        %5034 = vmatprep.mubr.bf16.mxu0 0
        %5035 = vmatmul.mubr.bf16.gmra.mxu0 %v4147
        %v5036 = vpop.f32.mrf.mxu0
        %v5037 = vadd.f32 %v4988, %v5036
        %v5038 = vpop.f32.mrf.mxu0
        %v5039 = vpop.f32.mrf.mxu0
        %v5040 = vadd.f32 %v4991, %v5039
        %v5041 = vpop.f32.mrf.mxu0
        %5042 = vdwg.mxu0
        %v5043 = vcombine.low %v4332, %v4336
        %v5044 = vcombine.low %v4340, %v4344
        %v5045 = vcombine.low %v4348, %v4352
        %v5046 = vcombine.low %v4356, %v4360
        %v5051 = vadd.f32 %v5029, %v5043
        %v5052 = vadd.f32 %v5032, %v5044
        %v5053 = vadd.f32 %v5037, %v5045
        %v5054 = vadd.f32 %v5040, %v5046
        %v5055 = vld [vmem:[%s4 + $0x3] sm:$0x1]
        %v5056 = vld [vmem:[%s4 + $0x4] sm:$0x1]
        %v5057 = vmul.f32 %v5051, %v5051
        %v5058 = vmul.f32 %v5052, %v5052
        %v5059 = vmul.f32 %v5053, %v5053
        %v5060 = vmul.f32 %v5054, %v5054
        %v5061 = vpack.c.bf16 %v5058, %v5057
        %v5062 = vpack.c.bf16 %v5060, %v5059
        %5063 = vmatprep.subr.bf16.mxu0 0
        %5064 = vmatpush1.bf16.msra.mxu0 %v2443
        %5065 = vmatprep.subr.bf16.mxu0 0
        %5066 = vmatpush1.bf16.msra.mxu0 %v2442
        %5067 = vmatprep.subr.bf16.mxu0 0
        %5068 = vmatpush1.bf16.msra.mxu0 %v2441
        %5069 = vmatprep.subr.bf16.mxu0 0
        %5070 = vmatpush1.bf16.msra.mxu0 %v2440
        %5071 = vmatprep.subr.bf16.mxu0 0
        %5072 = vmatpush1.bf16.msra.mxu0 %v2439
        %5073 = vmatprep.subr.bf16.mxu0 0
        %5074 = vmatpush1.bf16.msra.mxu0 %v2438
        %5075 = vmatprep.subr.bf16.mxu0 0
        %5076 = vmatpush1.bf16.msra.mxu0 %v2437
        %5077 = vmatprep.subr.bf16.mxu0 0
        %5078 = vmatpush1.bf16.msra.mxu0 %v2436
        %5079 = vmatprep.subr.bf16.mxu0 0
        %5080 = vmatpush2.bf16.msra.mxu0 0
        %5081 = vmatprep.subr.bf16.mxu0 0
        %5082 = vmatpush2.bf16.msra.mxu0 0
        %5083 = vmatprep.subr.bf16.mxu0 0
        %5084 = vmatpush2.bf16.msra.mxu0 0
        %5085 = vmatprep.subr.bf16.mxu0 0
        %5086 = vmatpush2.bf16.msra.mxu0 0
        %5087 = vmatprep.subr.bf16.mxu0 0
        %5088 = vmatpush2.bf16.msra.mxu0 0
        %5089 = vmatprep.subr.bf16.mxu0 0
        %5090 = vmatpush2.bf16.msra.mxu0 0
        %5091 = vmatprep.subr.bf16.mxu0 0
        %5092 = vmatpush2.bf16.msra.mxu0 0
        %5093 = vmatprep.subr.bf16.mxu0 0
        %5094 = vmatpush2.bf16.msra.mxu0 0
        %5095 = vmatprep.mubr.bf16.mxu0 0
        %5096 = vmatmul.mubr.bf16.gmra.mxu0 %v5061
        %v5097 = vpop.f32.mrf.mxu0
        %v5098 = vadd.f32 1e-06, %v5097
        %v5099 = vpop.f32.mrf.mxu0
        %v5100 = vpop.f32.mrf.mxu0
        %v5101 = vadd.f32 1e-06, %v5100
        %v5102 = vpop.f32.mrf.mxu0
        %5103 = vmatprep.mubr.bf16.mxu0 0
        %5104 = vmatmul.mubr.bf16.gmra.mxu0 %v5062
        %v5105 = vpop.f32.mrf.mxu0
        %v5106 = vadd.f32 1e-06, %v5105
        %v5107 = vpop.f32.mrf.mxu0
        %v5108 = vpop.f32.mrf.mxu0
        %v5109 = vadd.f32 1e-06, %v5108
        %v5110 = vpop.f32.mrf.mxu0
        %5111 = vdwg.mxu0
        %v5112 = vrsqrt.pop %v5098
        %v5113 = vrsqrt.pop %v5101
        %v5114 = vrsqrt.pop %v5106
        %v5115 = vrsqrt.pop %v5109
        %v5116 = vmul.f32 %v5098, %v5112
        %v5117 = vmul.f32 %v5101, %v5113
        %v5118 = vmul.f32 %v5106, %v5114
        %v5119 = vmul.f32 %v5109, %v5115
        %v5120 = vlaneseq
        %v5121 = vshrl.u32 %v5120, 7
        %v5122 = vsub.s32 0, %v5121
        %v5123 = vrot.slane %v5055, %v5122
        %v5124 = vsub.f32 %v5116, %v5123
        %v5125 = vsub.f32 %v5117, %v5123
        %v5126 = vsub.f32 %v5118, %v5123
        %v5127 = vsub.f32 %v5119, %v5123
        %v5128 = vmax.f32 %v5124, 0.0
        %v5129 = vmax.f32 %v5125, 0.0
        %v5130 = vmax.f32 %v5126, 0.0
        %v5131 = vmax.f32 %v5127, 0.0
        %vm5132 = vcmp.ne.f32.partialorder %v5124, %v5124
        %vm5133 = vcmp.ne.f32.partialorder %v5125, %v5125
        %vm5134 = vcmp.ne.f32.partialorder %v5126, %v5126
        %vm5135 = vcmp.ne.f32.partialorder %v5127, %v5127
        %v5136 = vadd.f32 %v5124, 0.0
        %v5137 = vadd.f32 %v5125, 0.0
        %v5138 = vadd.f32 %v5126, 0.0
        %v5139 = vadd.f32 %v5127, 0.0
        %v5140 = vand.u32 2147483647, %v5124
        %v5141 = vand.u32 2147483647, %v5125
        %v5142 = vand.u32 2147483647, %v5126
        %v5143 = vand.u32 2147483647, %v5127
        %v5144 = vsub.f32 0.0, %v5140
        %v5145 = vsub.f32 0.0, %v5141
        %v5146 = vsub.f32 0.0, %v5142
        %v5147 = vsub.f32 0.0, %v5143
        %v5148 = vmul.f32 %v5144, 1.442695
        %v5149 = vpow.pop %v5148
        %v5150 = vmul.f32 %v5145, 1.442695
        %v5151 = vpow.pop %v5150
        %v5152 = vmul.f32 %v5146, 1.442695
        %v5153 = vpow.pop %v5152
        %v5154 = vmul.f32 %v5147, 1.442695
        %v5155 = vpow.pop %v5154
        %v5156 = vadd.f32 %v5149, 1.0
        %v5157 = vlog2.pop %v5156
        %v5158 = vmul.f32 %v5157, 0.6931472
        %v5159 = vmul.f32 -0.5, %v5149
        %v5160 = vadd.f32 %v5159, 1.0
        %v5161 = vmul.f32 %v5160, %v5149
        %v5162 = vand.u32 2147483647, %v5149
        %vm5163 = vcmp.lt.f32.partialorder %v5162, 0.0004427343
        %v5164 = vsel %vm5163, %v5161, %v5158
        %v5165 = vadd.f32 %v5151, 1.0
        %v5166 = vlog2.pop %v5165
        %v5167 = vmul.f32 %v5166, 0.6931472
        %v5168 = vmul.f32 -0.5, %v5151
        %v5169 = vadd.f32 %v5168, 1.0
        %v5170 = vmul.f32 %v5169, %v5151
        %v5171 = vand.u32 2147483647, %v5151
        %vm5172 = vcmp.lt.f32.partialorder %v5171, 0.0004427343
        %v5173 = vsel %vm5172, %v5170, %v5167
        %v5174 = vadd.f32 %v5153, 1.0
        %v5175 = vlog2.pop %v5174
        %v5176 = vmul.f32 %v5175, 0.6931472
        %v5177 = vmul.f32 -0.5, %v5153
        %v5178 = vadd.f32 %v5177, 1.0
        %v5179 = vmul.f32 %v5178, %v5153
        %v5180 = vand.u32 2147483647, %v5153
        %vm5181 = vcmp.lt.f32.partialorder %v5180, 0.0004427343
        %v5182 = vsel %vm5181, %v5179, %v5176
        %v5183 = vadd.f32 %v5155, 1.0
        %v5184 = vlog2.pop %v5183
        %v5185 = vmul.f32 %v5184, 0.6931472
        %v5186 = vmul.f32 -0.5, %v5155
        %v5187 = vadd.f32 %v5186, 1.0
        %v5188 = vmul.f32 %v5187, %v5155
        %v5189 = vand.u32 2147483647, %v5155
        %vm5190 = vcmp.lt.f32.partialorder %v5189, 0.0004427343
        %v5191 = vsel %vm5190, %v5188, %v5185
        %v5192 = vadd.f32 %v5128, %v5164
        %v5193 = vadd.f32 %v5129, %v5173
        %v5194 = vadd.f32 %v5130, %v5182
        %v5195 = vadd.f32 %v5131, %v5191
        %v5196 = vsel %vm5132, %v5136, %v5192
        %v5197 = vsel %vm5133, %v5137, %v5193
        %v5198 = vsel %vm5134, %v5138, %v5194
        %v5199 = vsel %vm5135, %v5139, %v5195
        %v5200 = vmul.f32 %v5196, %v5112
        %v5201 = vmul.f32 %v5197, %v5113
        %v5202 = vmul.f32 %v5198, %v5114
        %v5203 = vmul.f32 %v5199, %v5115
        %vm5204 = vcmp.gt.f32.partialorder %v5056, 0.5
        %v5205 = vmax.f32 %v5051, 0.0
        %v5206 = vmax.f32 %v5052, 0.0
        %v5207 = vmax.f32 %v5053, 0.0
        %v5208 = vmax.f32 %v5054, 0.0
        %v5209 = vmul.f32 %v5051, %v5200
        %v5210 = vmul.f32 %v5052, %v5201
        %v5211 = vmul.f32 %v5053, %v5202
        %v5212 = vmul.f32 %v5054, %v5203
        %v5213 = vsel %vm5204, 1, 0
        %v5214 = vlaneseq
        %v5215 = vshrl.u32 %v5214, 7
        %v5216 = vsub.s32 0, %v5215
        %v5217 = vrot.slane %v5213, %v5216
        %vm5218 = vcmp.eq.s32.totalorder %v5217, 1
        %v5219 = vsel %vm5218, %v5205, %v5209
        %v5220 = vsel %vm5218, %v5206, %v5210
        %v5221 = vsel %vm5218, %v5207, %v5211
        %v5222 = vsel %vm5218, %v5208, %v5212
        %v5227 = vcombine.high %v5219, %v5219
        %v5228 = vcombine.high %v5220, %v5220
        %v5229 = vcombine.high %v5221, %v5221
        %v5230 = vcombine.high %v5222, %v5222
        %5235 = vst [vmem:[%s247] sm:$0xf] %v5219
        %5236 = vst [vmem:[%s247 + $0x4] sm:$0xf] %v5227
        %5237 = vst [vmem:[%s247 + $0x8] sm:$0xf] %v5220
        %5238 = vst [vmem:[%s247 + $0xc] sm:$0xf] %v5228
        %5239 = vst [vmem:[%s247 + $0x10] sm:$0xf] %v5221
        %5240 = vst [vmem:[%s247 + $0x14] sm:$0xf] %v5229
        %5241 = vst [vmem:[%s247 + $0x18] sm:$0xf] %v5222
        %5242 = vst [vmem:[%s247 + $0x1c] sm:$0xf] %v5230
        %s5243 = sand.u32 %s139, 1
        %s5244 = scalar_lea.sflag [#allocation5], %s5243
        %s5245 = sand.u32 %s139, 1
        %s5246 = smul.addr %s5245, 32
        %s5247 = scalar_lea.vmem [#allocation8], %s5246
        // Predicated region
        $region49: #{tpu_custom_call.1} parent=39 // pred_check
          %p5248 = pneg %p149
        $region50: #{tpu_custom_call.1} parent=39 // pred_check_branch
          %5250 = sbr.rel (%p5248) target = $region52
        $region51: #{tpu_custom_call.1} parent=39 // pred_region
          %s5252 = ssub.s32 512, 512
          %5253 = vsyncadd %s5244, %s5252
          %s5254 = smul.addr %s21, 8
          %s5255 = smul.addr %s5254, 64
          %s5256 = scalar_lea.hbm %s5, %s5255
          %s5257 = sshll.u32 %s5247, 4
          %s5258 = int_to_ptr.vmem [resolvable:$true] %s5257
          %5263 = dma.vmem_to_hbm [thread:$0]  %s5258, 512, %s5256, %s5244, 64, 64, 4
        $region52: #{tpu_custom_call.1} parent=39 // pred_fallthru
          _
      $region40: #{tpu_custom_call.1} parent=5 // pred_fallthru
        _
      %p5264 = scmp.le.s32.totalorder 2, %s16
      // Predicated region
      $region53: #{tpu_custom_call.1} parent=5 // pred_check
        %p5265 = pneg %p5264
      $region54: #{tpu_custom_call.1} parent=5 // pred_check_branch
        %5267 = sbr.rel (%p5265) target = $region56
      $region55: #{tpu_custom_call.1} parent=5 // pred_region
        %s5268 = ssub.s32 %s16, 2
        // Predicated region
        $region57: #{tpu_custom_call.1} parent=55 // pred_check
          %p5269 = pneg %p155
        $region58: #{tpu_custom_call.1} parent=55 // pred_check_branch
          %5271 = sbr.rel (%p5269) target = $region60
        $region59: #{tpu_custom_call.1} parent=55 // pred_region
          %s5272 = sand.u32 %s140, 1
          %s5273 = scalar_lea.sflag [#allocation5], %s5272
          %s5274 = sand.u32 %s140, 1
          %s5275 = smul.addr %s5274, 32
          %s5276 = scalar_lea.vmem [#allocation8], %s5275
          %5277 = dma.done %s5273, 512
        $region60: #{tpu_custom_call.1} parent=55 // pred_fallthru
          _
      $region56: #{tpu_custom_call.1} parent=5 // pred_fallthru
        _
    $region6: #{tpu_custom_call.1} parent=1 // loop_footer
      %s20 = sadd.s32 1, %s16
    $region7: #{tpu_custom_call.1} parent=1 // loop_footer_branch
      %15 = sbr.rel target = $region3
    $region8: #{tpu_custom_call.1} parent=1 // loop_exit
      _
    %5278 = vsyncpa [#allocation4], 1
    %s5279 = scalar_lea.sflag [#allocation4], 1
    %5280 = vsyncpa %s5279, 1
    %5281 = vsyncpa [#allocation7], 1
    %5282 = vsyncpa [#allocation5], 1
    %s5283 = scalar_lea.sflag [#allocation5], 1
    %5284 = vsyncpa %s5283, 1

</llo_original>
